<compile_context>
chip_gen: v5e
topology: v5e:2x2
jax: 0.10.0
libtpu: 0.0.40
codegen_flags: <defaults>
</compile_context>

<pallas_src>
import jax
import jax.numpy as jnp
from jax.experimental import pallas as pl
from jax.experimental.pallas import tpu as pltpu

LANE = 128
SUBLANE = 8
_VMEM_LIMIT_BYTES = 48 * 1024 * 1024  # > v5e(16MiB)/v6e(32MiB) defaults, < v7x 64MiB


def _round_up(x, m):
    return (x + m - 1) // m * m


def _cdiv(a, b):
    return (a + b - 1) // b


def _default_act_dtype():
    """bf16 elementwise on chips with a bf16 VPU (v6e/v7x), f32 otherwise."""
    try:
        kind = jax.devices()[0].device_kind.lower()
    except Exception:
        return jnp.float32
    if any(v in kind for v in ("v2", "v3", "v4", "v5")):
        return jnp.float32  # no bf16 VALU on these generations
    return jnp.bfloat16


def dqn_kernel(x_ref,
               w1_ref, b1_ref,
               w2_ref, b2_ref,
               w3_ref, b3_ref,
               w4_ref, b4_ref,
               w5_ref, b5_ref,
               w6_ref, b6_ref,
               out_ref):
    def linear(h, w_ref, b_ref, relu):
        # MXU matmul in the weight dtype (bf16) with f32 accumulation; the
        # bias-add / ReLU run in the *bias* dtype, which the wrapper sets to
        # bf16 on v6e/v7x (bf16 VALU) and f32 on v5e/older.
        y = jnp.dot(h.astype(w_ref.dtype), w_ref[...],
                    preferred_element_type=jnp.float32)
        y = y.astype(b_ref.dtype) + b_ref[...]   # (1, out) broadcast over batch
        if relu:
            y = jnp.maximum(y, 0)
        return y

    h = x_ref[...]                         # x.view(B, -1).float() done in wrapper
    h = linear(h, w1_ref, b1_ref, True)    # fc1: state_size -> 64
    h = linear(h, w2_ref, b2_ref, True)    # fc2: 64 -> 64
    h = linear(h, w3_ref, b3_ref, True)    # fc3: 64 -> 512
    h = linear(h, w4_ref, b4_ref, True)    # fc4: 512 -> 512
    h = linear(h, w5_ref, b5_ref, True)    # fc5: 512 -> 64
    h = linear(h, w6_ref, b6_ref, False)   # fc6: 64 -> action_size (padded to 128)
    out_ref[...] = h.astype(out_ref.dtype)


def dqn_forward(x, params, *, block_b=1024, weights_dtype=jnp.bfloat16,
                act_dtype=None):
    """x: [B, ...] (flattened to [B, state_size] here, like x.view(B, -1).float()).
    params: list of (W, b) with W [in, out], b [1, out]. Returns f32 [B, action_size]."""
    if act_dtype is None:
        act_dtype = _default_act_dtype()

    B = x.shape[0]
    x = x.reshape(B, -1).astype(jnp.float32)       # .view(B, -1).float()
    state_size = x.shape[1]
    action_size = params[-1][0].shape[1]
    n_layers = len(params)

    # --- batch tiling -----------------------------------------------------
    # * tiles up to block_b rows (amortizes per-step overhead + weight pushes),
    # * batch padding limited to < SUBLANE rows per step (no tb-sized waste),
    # * >= 2 grid steps when B allows, so v7x's second TensorCore gets work.
    min_steps = 2 if B > SUBLANE else 1
    n_steps = max(min_steps, _cdiv(B, block_b))
    tb = _round_up(_cdiv(B, n_steps), SUBLANE)
    b_pad = n_steps * tb
    if b_pad != B:
        x = jnp.pad(x, ((0, b_pad - B), (0, 0)))

    out_pad = _round_up(action_size, LANE)         # lane-dense output (unmasked vst)

    # Weights -> bf16 for the MXU; biases -> act_dtype (elementwise dtype).
    # fc6 zero-padded to 128 output lanes (padded Q-values are exactly 0).
    # TODO(synk): optional fp8 weight path for fc4 (512x512) on v7x if the
    # accuracy budget allows (~2x MXU throughput on the layer with ~77% of FLOPs).
    flat = []
    for i, (w, b) in enumerate(params):
        w = w.astype(weights_dtype)
        b = b.astype(act_dtype)
        if i == n_layers - 1 and out_pad != action_size:
            w = jnp.pad(w, ((0, 0), (0, out_pad - action_size)))
            b = jnp.pad(b, ((0, 0), (0, out_pad - action_size)))
        flat.extend([w, b])

    grid = (n_steps,)

    dims = [state_size] + [w.shape[1] for w, _ in params]
    flops = 2 * b_pad * sum(dims[i] * dims[i + 1] for i in range(n_layers))
    bytes_accessed = (x.size * x.dtype.itemsize
                      + sum(a.size * a.dtype.itemsize for a in flat)
                      + b_pad * out_pad * 2)       # bf16 output

    def build_call(single_buffer_weights):
        def resident(a):
            # Constant index_map -> block stays VMEM-resident across the grid;
            # single-buffer it (never revisited, so no second buffer needed).
            idx = lambda i, _n=a.ndim: (0,) * _n
            if single_buffer_weights:
                return pl.BlockSpec(a.shape, idx, pipeline_mode=pl.Buffered(1))
            return pl.BlockSpec(a.shape, idx)

        in_specs = ([pl.BlockSpec((tb, state_size), lambda i: (i, 0))]
                    + [resident(a) for a in flat])
        out_spec = pl.BlockSpec((tb, out_pad), lambda i: (i, 0))

        return pl.pallas_call(
            dqn_kernel,
            out_shape=jax.ShapeDtypeStruct((b_pad, out_pad), jnp.bfloat16),
            grid=grid,
            in_specs=in_specs,
            out_specs=out_spec,
            compiler_params=pltpu.CompilerParams(
                # Batch axis is independent across steps -> megacore-shardable.
                dimension_semantics=("parallel",),
                vmem_limit_bytes=_VMEM_LIMIT_BYTES),
            cost_estimate=pl.CostEstimate(flops=flops, transcendentals=0,
                                          bytes_accessed=bytes_accessed),
        )

    # TODO(synk): for tiny inference batches (B <~ 64) the one-off ~0.7 MiB
    # weight HBM->VMEM DMA dominates wall time; a cross-pallas_call weight
    # prefetch (P10) or batching several env states per call would hide it.
    try:
        out = build_call(True)(x, *flat)
    except Exception:
        # Fallback for JAX versions without BlockSpec(pipeline_mode=pl.Buffered).
        out = build_call(False)(x, *flat)

    return out[:B, :action_size].astype(jnp.float32)


def init_dqn_params(key, state_size, action_size):
    """Synthetic nn.Linear-style init; weights stored transposed as [in, out]."""
    dims = [state_size, 64, 64, 512, 512, 64, action_size]
    params = []
    for i in range(6):
        fan_in, fan_out = dims[i], dims[i + 1]
        key, kw, kb = jax.random.split(key, 3)
        bound = 1.0 / jnp.sqrt(jnp.float32(fan_in))
        w = jax.random.uniform(kw, (fan_in, fan_out), jnp.float32, -bound, bound)
        b = jax.random.uniform(kb, (1, fan_out), jnp.float32, -bound, bound)
        params.append((w, b))
    return params


if __name__ == "__main__":
    state_size = 8
    action_size = 4
    batch = 2

    key = jax.random.PRNGKey(0)
    key, kx = jax.random.split(key)

    x_raw = jax.random.normal(kx, (batch, state_size), jnp.float32)
    params = init_dqn_params(key, state_size, action_size)

    out = dqn_forward(x_raw, params)
    jax.block_until_ready(out)
    assert out.shape == (batch, action_size)

    # Pure-JAX reference of the same math (same bf16 weights, same elementwise
    # dtype as the kernel path, f32 MXU accumulation, bf16 output round-trip).
    act_dtype = _default_act_dtype()
    h = x_raw.reshape(batch, -1).astype(jnp.float32)
    for i, (w, b) in enumerate(params):
        y = jnp.dot(h.astype(jnp.bfloat16), w.astype(jnp.bfloat16),
                    preferred_element_type=jnp.float32)
        y = y.astype(act_dtype) + b.astype(act_dtype)
        if i < len(params) - 1:
            y = jnp.maximum(y, 0)
        h = y
    ref = h.astype(jnp.bfloat16).astype(jnp.float32)
    assert jnp.allclose(out, ref, atol=2e-2, rtol=2e-2), (out, ref)

    print("KERNEL_OK")
</pallas_src>

<mosaic_0001>
module attributes {stable_mosaic.version = 11 : i64} {
  func.func @dqn_kernel(%arg0: i32, %arg1: memref<8x8xf32, #tpu.memory_space<vmem>>, %arg2: memref<8x64xbf16, #tpu.memory_space<vmem>>, %arg3: memref<1x64xbf16, #tpu.memory_space<vmem>>, %arg4: memref<64x64xbf16, #tpu.memory_space<vmem>>, %arg5: memref<1x64xbf16, #tpu.memory_space<vmem>>, %arg6: memref<64x512xbf16, #tpu.memory_space<vmem>>, %arg7: memref<1x512xbf16, #tpu.memory_space<vmem>>, %arg8: memref<512x512xbf16, #tpu.memory_space<vmem>>, %arg9: memref<1x512xbf16, #tpu.memory_space<vmem>>, %arg10: memref<512x64xbf16, #tpu.memory_space<vmem>>, %arg11: memref<1x64xbf16, #tpu.memory_space<vmem>>, %arg12: memref<64x128xbf16, #tpu.memory_space<vmem>>, %arg13: memref<1x128xbf16, #tpu.memory_space<vmem>>, %arg14: memref<8x128xbf16, #tpu.memory_space<vmem>>) attributes {dimension_semantics = [#tpu.dimension_semantics<parallel>], iteration_bounds = array<i64: 1>, scalar_prefetch = 0 : i64, scratch_operands = 0 : i64, tpu.core_type = #tpu.core_type<tc>, window_params = [{transform_indices = @transform_0, window_bounds = array<i64: 8, 8>}, {pipeline_mode = #tpu.pipeline_mode<synchronous>, transform_indices = @transform_1, window_bounds = array<i64: 8, 64>}, {pipeline_mode = #tpu.pipeline_mode<synchronous>, transform_indices = @transform_2, window_bounds = array<i64: 1, 64>}, {pipeline_mode = #tpu.pipeline_mode<synchronous>, transform_indices = @transform_3, window_bounds = array<i64: 64, 64>}, {pipeline_mode = #tpu.pipeline_mode<synchronous>, transform_indices = @transform_4, window_bounds = array<i64: 1, 64>}, {pipeline_mode = #tpu.pipeline_mode<synchronous>, transform_indices = @transform_5, window_bounds = array<i64: 64, 512>}, {pipeline_mode = #tpu.pipeline_mode<synchronous>, transform_indices = @transform_6, window_bounds = array<i64: 1, 512>}, {pipeline_mode = #tpu.pipeline_mode<synchronous>, transform_indices = @transform_7, window_bounds = array<i64: 512, 512>}, {pipeline_mode = #tpu.pipeline_mode<synchronous>, transform_indices = @transform_8, window_bounds = array<i64: 1, 512>}, {pipeline_mode = #tpu.pipeline_mode<synchronous>, transform_indices = @transform_9, window_bounds = array<i64: 512, 64>}, {pipeline_mode = #tpu.pipeline_mode<synchronous>, transform_indices = @transform_10, window_bounds = array<i64: 1, 64>}, {pipeline_mode = #tpu.pipeline_mode<synchronous>, transform_indices = @transform_11, window_bounds = array<i64: 64, 128>}, {pipeline_mode = #tpu.pipeline_mode<synchronous>, transform_indices = @transform_12, window_bounds = array<i64: 1, 128>}, {transform_indices = @transform_13, window_bounds = array<i64: 8, 128>}]} {
    %c0 = arith.constant 0 : index
    %c0_0 = arith.constant 0 : index
    %0 = vector.load %arg1[%c0, %c0_0] : memref<8x8xf32, #tpu.memory_space<vmem>>, vector<8x8xf32>
    %1 = arith.truncf %0 : vector<8x8xf32> to vector<8x8xbf16>
    %c0_1 = arith.constant 0 : index
    %c0_2 = arith.constant 0 : index
    %2 = vector.load %arg2[%c0_1, %c0_2] : memref<8x64xbf16, #tpu.memory_space<vmem>>, vector<8x64xbf16>
    %cst = arith.constant dense<0.000000e+00> : vector<8x64xf32>
    %3 = tpu.matmul %1, %2, %cst {dimension_numbers = #tpu.dot_dimension_numbers<[1], [0], [0], [1], [0, 0, 1, 1], [], []>} : vector<8x8xbf16>, vector<8x64xbf16>, vector<8x64xf32> -> vector<8x64xf32>
    %4 = arith.truncf %3 : vector<8x64xf32> to vector<8x64xbf16>
    %c0_3 = arith.constant 0 : index
    %c0_4 = arith.constant 0 : index
    %5 = vector.load %arg3[%c0_3, %c0_4] : memref<1x64xbf16, #tpu.memory_space<vmem>>, vector<1x64xbf16>
    %6 = vector.broadcast %5 : vector<1x64xbf16> to vector<8x64xbf16>
    %7 = arith.addf %4, %6 : vector<8x64xbf16>
    %cst_5 = arith.constant 0.000000e+00 : bf16
    %8 = vector.broadcast %cst_5 : bf16 to vector<8x64xbf16>
    %9 = arith.maximumf %7, %8 : vector<8x64xbf16>
    %c0_6 = arith.constant 0 : index
    %c0_7 = arith.constant 0 : index
    %10 = vector.load %arg4[%c0_6, %c0_7] : memref<64x64xbf16, #tpu.memory_space<vmem>>, vector<64x64xbf16>
    %cst_8 = arith.constant dense<0.000000e+00> : vector<8x64xf32>
    %11 = tpu.matmul %9, %10, %cst_8 {dimension_numbers = #tpu.dot_dimension_numbers<[1], [0], [0], [1], [0, 0, 1, 1], [], []>} : vector<8x64xbf16>, vector<64x64xbf16>, vector<8x64xf32> -> vector<8x64xf32>
    %12 = arith.truncf %11 : vector<8x64xf32> to vector<8x64xbf16>
    %c0_9 = arith.constant 0 : index
    %c0_10 = arith.constant 0 : index
    %13 = vector.load %arg5[%c0_9, %c0_10] : memref<1x64xbf16, #tpu.memory_space<vmem>>, vector<1x64xbf16>
    %14 = vector.broadcast %13 : vector<1x64xbf16> to vector<8x64xbf16>
    %15 = arith.addf %12, %14 : vector<8x64xbf16>
    %cst_11 = arith.constant 0.000000e+00 : bf16
    %16 = vector.broadcast %cst_11 : bf16 to vector<8x64xbf16>
    %17 = arith.maximumf %15, %16 : vector<8x64xbf16>
    %c0_12 = arith.constant 0 : index
    %c0_13 = arith.constant 0 : index
    %18 = vector.load %arg6[%c0_12, %c0_13] : memref<64x512xbf16, #tpu.memory_space<vmem>>, vector<64x512xbf16>
    %cst_14 = arith.constant dense<0.000000e+00> : vector<8x512xf32>
    %19 = tpu.matmul %17, %18, %cst_14 {dimension_numbers = #tpu.dot_dimension_numbers<[1], [0], [0], [1], [0, 0, 1, 1], [], []>} : vector<8x64xbf16>, vector<64x512xbf16>, vector<8x512xf32> -> vector<8x512xf32>
    %20 = arith.truncf %19 : vector<8x512xf32> to vector<8x512xbf16>
    %c0_15 = arith.constant 0 : index
    %c0_16 = arith.constant 0 : index
    %21 = vector.load %arg7[%c0_15, %c0_16] : memref<1x512xbf16, #tpu.memory_space<vmem>>, vector<1x512xbf16>
    %22 = vector.broadcast %21 : vector<1x512xbf16> to vector<8x512xbf16>
    %23 = arith.addf %20, %22 : vector<8x512xbf16>
    %cst_17 = arith.constant 0.000000e+00 : bf16
    %24 = vector.broadcast %cst_17 : bf16 to vector<8x512xbf16>
    %25 = arith.maximumf %23, %24 : vector<8x512xbf16>
    %c0_18 = arith.constant 0 : index
    %c0_19 = arith.constant 0 : index
    %26 = vector.load %arg8[%c0_18, %c0_19] : memref<512x512xbf16, #tpu.memory_space<vmem>>, vector<512x512xbf16>
    %cst_20 = arith.constant dense<0.000000e+00> : vector<8x512xf32>
    %27 = tpu.matmul %25, %26, %cst_20 {dimension_numbers = #tpu.dot_dimension_numbers<[1], [0], [0], [1], [0, 0, 1, 1], [], []>} : vector<8x512xbf16>, vector<512x512xbf16>, vector<8x512xf32> -> vector<8x512xf32>
    %28 = arith.truncf %27 : vector<8x512xf32> to vector<8x512xbf16>
    %c0_21 = arith.constant 0 : index
    %c0_22 = arith.constant 0 : index
    %29 = vector.load %arg9[%c0_21, %c0_22] : memref<1x512xbf16, #tpu.memory_space<vmem>>, vector<1x512xbf16>
    %30 = vector.broadcast %29 : vector<1x512xbf16> to vector<8x512xbf16>
    %31 = arith.addf %28, %30 : vector<8x512xbf16>
    %cst_23 = arith.constant 0.000000e+00 : bf16
    %32 = vector.broadcast %cst_23 : bf16 to vector<8x512xbf16>
    %33 = arith.maximumf %31, %32 : vector<8x512xbf16>
    %c0_24 = arith.constant 0 : index
    %c0_25 = arith.constant 0 : index
    %34 = vector.load %arg10[%c0_24, %c0_25] : memref<512x64xbf16, #tpu.memory_space<vmem>>, vector<512x64xbf16>
    %cst_26 = arith.constant dense<0.000000e+00> : vector<8x64xf32>
    %35 = tpu.matmul %33, %34, %cst_26 {dimension_numbers = #tpu.dot_dimension_numbers<[1], [0], [0], [1], [0, 0, 1, 1], [], []>} : vector<8x512xbf16>, vector<512x64xbf16>, vector<8x64xf32> -> vector<8x64xf32>
    %36 = arith.truncf %35 : vector<8x64xf32> to vector<8x64xbf16>
    %c0_27 = arith.constant 0 : index
    %c0_28 = arith.constant 0 : index
    %37 = vector.load %arg11[%c0_27, %c0_28] : memref<1x64xbf16, #tpu.memory_space<vmem>>, vector<1x64xbf16>
    %38 = vector.broadcast %37 : vector<1x64xbf16> to vector<8x64xbf16>
    %39 = arith.addf %36, %38 : vector<8x64xbf16>
    %cst_29 = arith.constant 0.000000e+00 : bf16
    %40 = vector.broadcast %cst_29 : bf16 to vector<8x64xbf16>
    %41 = arith.maximumf %39, %40 : vector<8x64xbf16>
    %c0_30 = arith.constant 0 : index
    %c0_31 = arith.constant 0 : index
    %42 = vector.load %arg12[%c0_30, %c0_31] : memref<64x128xbf16, #tpu.memory_space<vmem>>, vector<64x128xbf16>
    %cst_32 = arith.constant dense<0.000000e+00> : vector<8x128xf32>
    %43 = tpu.matmul %41, %42, %cst_32 {dimension_numbers = #tpu.dot_dimension_numbers<[1], [0], [0], [1], [0, 0, 1, 1], [], []>} : vector<8x64xbf16>, vector<64x128xbf16>, vector<8x128xf32> -> vector<8x128xf32>
    %44 = arith.truncf %43 : vector<8x128xf32> to vector<8x128xbf16>
    %c0_33 = arith.constant 0 : index
    %c0_34 = arith.constant 0 : index
    %45 = vector.load %arg13[%c0_33, %c0_34] : memref<1x128xbf16, #tpu.memory_space<vmem>>, vector<1x128xbf16>
    %46 = vector.broadcast %45 : vector<1x128xbf16> to vector<8x128xbf16>
    %47 = arith.addf %44, %46 : vector<8x128xbf16>
    %c0_35 = arith.constant 0 : index
    %c0_36 = arith.constant 0 : index
    %48 = vector.load %arg14[%c0_35, %c0_36] : memref<8x128xbf16, #tpu.memory_space<vmem>>, vector<8x128xbf16>
    tpu.vector_store %arg14[%c0_35, %c0_36], %47 {strides = array<i32>} : memref<8x128xbf16, #tpu.memory_space<vmem>>, vector<8x128xbf16>,
    return
  }
  func.func @transform_0(%arg0: i32) -> (i32, i32) {
    %c0_i32 = arith.constant 0 : i32
    %c0_i32_0 = arith.constant 0 : i32
    return %arg0, %c0_i32 : i32, i32
  }
  func.func @transform_1(%arg0: i32) -> (i32, i32) {
    %c0_i32 = arith.constant 0 : i32
    %c0_i32_0 = arith.constant 0 : i32
    %c0_i32_1 = arith.constant 0 : i32
    return %c0_i32, %c0_i32_0 : i32, i32
  }
  func.func @transform_2(%arg0: i32) -> (i32, i32) {
    %c0_i32 = arith.constant 0 : i32
    %c0_i32_0 = arith.constant 0 : i32
    %c0_i32_1 = arith.constant 0 : i32
    return %c0_i32, %c0_i32_0 : i32, i32
  }
  func.func @transform_3(%arg0: i32) -> (i32, i32) {
    %c0_i32 = arith.constant 0 : i32
    %c0_i32_0 = arith.constant 0 : i32
    %c0_i32_1 = arith.constant 0 : i32
    return %c0_i32, %c0_i32_0 : i32, i32
  }
  func.func @transform_4(%arg0: i32) -> (i32, i32) {
    %c0_i32 = arith.constant 0 : i32
    %c0_i32_0 = arith.constant 0 : i32
    %c0_i32_1 = arith.constant 0 : i32
    return %c0_i32, %c0_i32_0 : i32, i32
  }
  func.func @transform_5(%arg0: i32) -> (i32, i32) {
    %c0_i32 = arith.constant 0 : i32
    %c0_i32_0 = arith.constant 0 : i32
    %c0_i32_1 = arith.constant 0 : i32
    return %c0_i32, %c0_i32_0 : i32, i32
  }
  func.func @transform_6(%arg0: i32) -> (i32, i32) {
    %c0_i32 = arith.constant 0 : i32
    %c0_i32_0 = arith.constant 0 : i32
    %c0_i32_1 = arith.constant 0 : i32
    return %c0_i32, %c0_i32_0 : i32, i32
  }
  func.func @transform_7(%arg0: i32) -> (i32, i32) {
    %c0_i32 = arith.constant 0 : i32
    %c0_i32_0 = arith.constant 0 : i32
    %c0_i32_1 = arith.constant 0 : i32
    return %c0_i32, %c0_i32_0 : i32, i32
  }
  func.func @transform_8(%arg0: i32) -> (i32, i32) {
    %c0_i32 = arith.constant 0 : i32
    %c0_i32_0 = arith.constant 0 : i32
    %c0_i32_1 = arith.constant 0 : i32
    return %c0_i32, %c0_i32_0 : i32, i32
  }
  func.func @transform_9(%arg0: i32) -> (i32, i32) {
    %c0_i32 = arith.constant 0 : i32
    %c0_i32_0 = arith.constant 0 : i32
    %c0_i32_1 = arith.constant 0 : i32
    return %c0_i32, %c0_i32_0 : i32, i32
  }
  func.func @transform_10(%arg0: i32) -> (i32, i32) {
    %c0_i32 = arith.constant 0 : i32
    %c0_i32_0 = arith.constant 0 : i32
    %c0_i32_1 = arith.constant 0 : i32
    return %c0_i32, %c0_i32_0 : i32, i32
  }
  func.func @transform_11(%arg0: i32) -> (i32, i32) {
    %c0_i32 = arith.constant 0 : i32
    %c0_i32_0 = arith.constant 0 : i32
    %c0_i32_1 = arith.constant 0 : i32
    return %c0_i32, %c0_i32_0 : i32, i32
  }
  func.func @transform_12(%arg0: i32) -> (i32, i32) {
    %c0_i32 = arith.constant 0 : i32
    %c0_i32_0 = arith.constant 0 : i32
    %c0_i32_1 = arith.constant 0 : i32
    return %c0_i32, %c0_i32_0 : i32, i32
  }
  func.func @transform_13(%arg0: i32) -> (i32, i32) {
    %c0_i32 = arith.constant 0 : i32
    %c0_i32_0 = arith.constant 0 : i32
    return %arg0, %c0_i32 : i32, i32
  }
}

module attributes {stable_mosaic.version = 11 : i64} {
  func.func @dqn_kernel(%arg0: i32, %arg1: memref<8x8xf32, #tpu.memory_space<vmem>>, %arg2: memref<8x64xbf16, #tpu.memory_space<vmem>>, %arg3: memref<1x64xbf16, #tpu.memory_space<vmem>>, %arg4: memref<64x64xbf16, #tpu.memory_space<vmem>>, %arg5: memref<1x64xbf16, #tpu.memory_space<vmem>>, %arg6: memref<64x512xbf16, #tpu.memory_space<vmem>>, %arg7: memref<1x512xbf16, #tpu.memory_space<vmem>>, %arg8: memref<512x512xbf16, #tpu.memory_space<vmem>>, %arg9: memref<1x512xbf16, #tpu.memory_space<vmem>>, %arg10: memref<512x64xbf16, #tpu.memory_space<vmem>>, %arg11: memref<1x64xbf16, #tpu.memory_space<vmem>>, %arg12: memref<64x128xbf16, #tpu.memory_space<vmem>>, %arg13: memref<1x128xbf16, #tpu.memory_space<vmem>>, %arg14: memref<8x128xbf16, #tpu.memory_space<vmem>>) attributes {dimension_semantics = [#tpu.dimension_semantics<parallel>], iteration_bounds = array<i64: 1>, scalar_prefetch = 0 : i64, scratch_operands = 0 : i64, tpu.core_type = #tpu.core_type<tc>, window_params = [{transform_indices = @transform_0, window_bounds = array<i64: 8, 8>}, {pipeline_mode = #tpu.pipeline_mode<synchronous>, transform_indices = @transform_1, window_bounds = array<i64: 8, 64>}, {pipeline_mode = #tpu.pipeline_mode<synchronous>, transform_indices = @transform_2, window_bounds = array<i64: 1, 64>}, {pipeline_mode = #tpu.pipeline_mode<synchronous>, transform_indices = @transform_3, window_bounds = array<i64: 64, 64>}, {pipeline_mode = #tpu.pipeline_mode<synchronous>, transform_indices = @transform_4, window_bounds = array<i64: 1, 64>}, {pipeline_mode = #tpu.pipeline_mode<synchronous>, transform_indices = @transform_5, window_bounds = array<i64: 64, 512>}, {pipeline_mode = #tpu.pipeline_mode<synchronous>, transform_indices = @transform_6, window_bounds = array<i64: 1, 512>}, {pipeline_mode = #tpu.pipeline_mode<synchronous>, transform_indices = @transform_7, window_bounds = array<i64: 512, 512>}, {pipeline_mode = #tpu.pipeline_mode<synchronous>, transform_indices = @transform_8, window_bounds = array<i64: 1, 512>}, {pipeline_mode = #tpu.pipeline_mode<synchronous>, transform_indices = @transform_9, window_bounds = array<i64: 512, 64>}, {pipeline_mode = #tpu.pipeline_mode<synchronous>, transform_indices = @transform_10, window_bounds = array<i64: 1, 64>}, {pipeline_mode = #tpu.pipeline_mode<synchronous>, transform_indices = @transform_11, window_bounds = array<i64: 64, 128>}, {pipeline_mode = #tpu.pipeline_mode<synchronous>, transform_indices = @transform_12, window_bounds = array<i64: 1, 128>}, {transform_indices = @transform_13, window_bounds = array<i64: 8, 128>}]} {
    %c0 = arith.constant 0 : index
    %c0_0 = arith.constant 0 : index
    %0 = vector.load %arg1[%c0, %c0_0] : memref<8x8xf32, #tpu.memory_space<vmem>>, vector<8x8xf32>
    %1 = arith.truncf %0 : vector<8x8xf32> to vector<8x8xbf16>
    %c0_1 = arith.constant 0 : index
    %c0_2 = arith.constant 0 : index
    %2 = vector.load %arg2[%c0_1, %c0_2] : memref<8x64xbf16, #tpu.memory_space<vmem>>, vector<8x64xbf16>
    %cst = arith.constant dense<0.000000e+00> : vector<8x64xf32>
    %3 = tpu.matmul %1, %2, %cst {dimension_numbers = #tpu.dot_dimension_numbers<[1], [0], [0], [1], [0, 0, 1, 1], [], []>} : vector<8x8xbf16>, vector<8x64xbf16>, vector<8x64xf32> -> vector<8x64xf32>
    %4 = arith.truncf %3 : vector<8x64xf32> to vector<8x64xbf16>
    %c0_3 = arith.constant 0 : index
    %c0_4 = arith.constant 0 : index
    %5 = vector.load %arg3[%c0_3, %c0_4] : memref<1x64xbf16, #tpu.memory_space<vmem>>, vector<1x64xbf16>
    %6 = vector.broadcast %5 : vector<1x64xbf16> to vector<8x64xbf16>
    %7 = arith.addf %4, %6 : vector<8x64xbf16>
    %cst_5 = arith.constant 0.000000e+00 : bf16
    %8 = vector.broadcast %cst_5 : bf16 to vector<8x64xbf16>
    %9 = arith.maximumf %7, %8 : vector<8x64xbf16>
    %c0_6 = arith.constant 0 : index
    %c0_7 = arith.constant 0 : index
    %10 = vector.load %arg4[%c0_6, %c0_7] : memref<64x64xbf16, #tpu.memory_space<vmem>>, vector<64x64xbf16>
    %cst_8 = arith.constant dense<0.000000e+00> : vector<8x64xf32>
    %11 = tpu.matmul %9, %10, %cst_8 {dimension_numbers = #tpu.dot_dimension_numbers<[1], [0], [0], [1], [0, 0, 1, 1], [], []>} : vector<8x64xbf16>, vector<64x64xbf16>, vector<8x64xf32> -> vector<8x64xf32>
    %12 = arith.truncf %11 : vector<8x64xf32> to vector<8x64xbf16>
    %c0_9 = arith.constant 0 : index
    %c0_10 = arith.constant 0 : index
    %13 = vector.load %arg5[%c0_9, %c0_10] : memref<1x64xbf16, #tpu.memory_space<vmem>>, vector<1x64xbf16>
    %14 = vector.broadcast %13 : vector<1x64xbf16> to vector<8x64xbf16>
    %15 = arith.addf %12, %14 : vector<8x64xbf16>
    %cst_11 = arith.constant 0.000000e+00 : bf16
    %16 = vector.broadcast %cst_11 : bf16 to vector<8x64xbf16>
    %17 = arith.maximumf %15, %16 : vector<8x64xbf16>
    %c0_12 = arith.constant 0 : index
    %c0_13 = arith.constant 0 : index
    %18 = vector.load %arg6[%c0_12, %c0_13] : memref<64x512xbf16, #tpu.memory_space<vmem>>, vector<64x512xbf16>
    %cst_14 = arith.constant dense<0.000000e+00> : vector<8x512xf32>
    %19 = tpu.matmul %17, %18, %cst_14 {dimension_numbers = #tpu.dot_dimension_numbers<[1], [0], [0], [1], [0, 0, 1, 1], [], []>} : vector<8x64xbf16>, vector<64x512xbf16>, vector<8x512xf32> -> vector<8x512xf32>
    %20 = arith.truncf %19 : vector<8x512xf32> to vector<8x512xbf16>
    %c0_15 = arith.constant 0 : index
    %c0_16 = arith.constant 0 : index
    %21 = vector.load %arg7[%c0_15, %c0_16] : memref<1x512xbf16, #tpu.memory_space<vmem>>, vector<1x512xbf16>
    %22 = vector.broadcast %21 : vector<1x512xbf16> to vector<8x512xbf16>
    %23 = arith.addf %20, %22 : vector<8x512xbf16>
    %cst_17 = arith.constant 0.000000e+00 : bf16
    %24 = vector.broadcast %cst_17 : bf16 to vector<8x512xbf16>
    %25 = arith.maximumf %23, %24 : vector<8x512xbf16>
    %c0_18 = arith.constant 0 : index
    %c0_19 = arith.constant 0 : index
    %26 = vector.load %arg8[%c0_18, %c0_19] : memref<512x512xbf16, #tpu.memory_space<vmem>>, vector<512x512xbf16>
    %cst_20 = arith.constant dense<0.000000e+00> : vector<8x512xf32>
    %27 = tpu.matmul %25, %26, %cst_20 {dimension_numbers = #tpu.dot_dimension_numbers<[1], [0], [0], [1], [0, 0, 1, 1], [], []>} : vector<8x512xbf16>, vector<512x512xbf16>, vector<8x512xf32> -> vector<8x512xf32>
    %28 = arith.truncf %27 : vector<8x512xf32> to vector<8x512xbf16>
    %c0_21 = arith.constant 0 : index
    %c0_22 = arith.constant 0 : index
    %29 = vector.load %arg9[%c0_21, %c0_22] : memref<1x512xbf16, #tpu.memory_space<vmem>>, vector<1x512xbf16>
    %30 = vector.broadcast %29 : vector<1x512xbf16> to vector<8x512xbf16>
    %31 = arith.addf %28, %30 : vector<8x512xbf16>
    %cst_23 = arith.constant 0.000000e+00 : bf16
    %32 = vector.broadcast %cst_23 : bf16 to vector<8x512xbf16>
    %33 = arith.maximumf %31, %32 : vector<8x512xbf16>
    %c0_24 = arith.constant 0 : index
    %c0_25 = arith.constant 0 : index
    %34 = vector.load %arg10[%c0_24, %c0_25] : memref<512x64xbf16, #tpu.memory_space<vmem>>, vector<512x64xbf16>
    %cst_26 = arith.constant dense<0.000000e+00> : vector<8x64xf32>
    %35 = tpu.matmul %33, %34, %cst_26 {dimension_numbers = #tpu.dot_dimension_numbers<[1], [0], [0], [1], [0, 0, 1, 1], [], []>} : vector<8x512xbf16>, vector<512x64xbf16>, vector<8x64xf32> -> vector<8x64xf32>
    %36 = arith.truncf %35 : vector<8x64xf32> to vector<8x64xbf16>
    %c0_27 = arith.constant 0 : index
    %c0_28 = arith.constant 0 : index
    %37 = vector.load %arg11[%c0_27, %c0_28] : memref<1x64xbf16, #tpu.memory_space<vmem>>, vector<1x64xbf16>
    %38 = vector.broadcast %37 : vector<1x64xbf16> to vector<8x64xbf16>
    %39 = arith.addf %36, %38 : vector<8x64xbf16>
    %cst_29 = arith.constant 0.000000e+00 : bf16
    %40 = vector.broadcast %cst_29 : bf16 to vector<8x64xbf16>
    %41 = arith.maximumf %39, %40 : vector<8x64xbf16>
    %c0_30 = arith.constant 0 : index
    %c0_31 = arith.constant 0 : index
    %42 = vector.load %arg12[%c0_30, %c0_31] : memref<64x128xbf16, #tpu.memory_space<vmem>>, vector<64x128xbf16>
    %cst_32 = arith.constant dense<0.000000e+00> : vector<8x128xf32>
    %43 = tpu.matmul %41, %42, %cst_32 {dimension_numbers = #tpu.dot_dimension_numbers<[1], [0], [0], [1], [0, 0, 1, 1], [], []>} : vector<8x64xbf16>, vector<64x128xbf16>, vector<8x128xf32> -> vector<8x128xf32>
    %44 = arith.truncf %43 : vector<8x128xf32> to vector<8x128xbf16>
    %c0_33 = arith.constant 0 : index
    %c0_34 = arith.constant 0 : index
    %45 = vector.load %arg13[%c0_33, %c0_34] : memref<1x128xbf16, #tpu.memory_space<vmem>>, vector<1x128xbf16>
    %46 = vector.broadcast %45 : vector<1x128xbf16> to vector<8x128xbf16>
    %47 = arith.addf %44, %46 : vector<8x128xbf16>
    %c0_35 = arith.constant 0 : index
    %c0_36 = arith.constant 0 : index
    %48 = vector.load %arg14[%c0_35, %c0_36] : memref<8x128xbf16, #tpu.memory_space<vmem>>, vector<8x128xbf16>
    tpu.vector_store %arg14[%c0_35, %c0_36], %47 {strides = array<i32>} : memref<8x128xbf16, #tpu.memory_space<vmem>>, vector<8x128xbf16>,
    return
  }
  func.func @transform_0(%arg0: i32) -> (i32, i32) {
    %c0_i32 = arith.constant 0 : i32
    %c0_i32_0 = arith.constant 0 : i32
    return %arg0, %c0_i32 : i32, i32
  }
  func.func @transform_1(%arg0: i32) -> (i32, i32) {
    %c0_i32 = arith.constant 0 : i32
    %c0_i32_0 = arith.constant 0 : i32
    %c0_i32_1 = arith.constant 0 : i32
    return %c0_i32, %c0_i32_0 : i32, i32
  }
  func.func @transform_2(%arg0: i32) -> (i32, i32) {
    %c0_i32 = arith.constant 0 : i32
    %c0_i32_0 = arith.constant 0 : i32
    %c0_i32_1 = arith.constant 0 : i32
    return %c0_i32, %c0_i32_0 : i32, i32
  }
  func.func @transform_3(%arg0: i32) -> (i32, i32) {
    %c0_i32 = arith.constant 0 : i32
    %c0_i32_0 = arith.constant 0 : i32
    %c0_i32_1 = arith.constant 0 : i32
    return %c0_i32, %c0_i32_0 : i32, i32
  }
  func.func @transform_4(%arg0: i32) -> (i32, i32) {
    %c0_i32 = arith.constant 0 : i32
    %c0_i32_0 = arith.constant 0 : i32
    %c0_i32_1 = arith.constant 0 : i32
    return %c0_i32, %c0_i32_0 : i32, i32
  }
  func.func @transform_5(%arg0: i32) -> (i32, i32) {
    %c0_i32 = arith.constant 0 : i32
    %c0_i32_0 = arith.constant 0 : i32
    %c0_i32_1 = arith.constant 0 : i32
    return %c0_i32, %c0_i32_0 : i32, i32
  }
  func.func @transform_6(%arg0: i32) -> (i32, i32) {
    %c0_i32 = arith.constant 0 : i32
    %c0_i32_0 = arith.constant 0 : i32
    %c0_i32_1 = arith.constant 0 : i32
    return %c0_i32, %c0_i32_0 : i32, i32
  }
  func.func @transform_7(%arg0: i32) -> (i32, i32) {
    %c0_i32 = arith.constant 0 : i32
    %c0_i32_0 = arith.constant 0 : i32
    %c0_i32_1 = arith.constant 0 : i32
    return %c0_i32, %c0_i32_0 : i32, i32
  }
  func.func @transform_8(%arg0: i32) -> (i32, i32) {
    %c0_i32 = arith.constant 0 : i32
    %c0_i32_0 = arith.constant 0 : i32
    %c0_i32_1 = arith.constant 0 : i32
    return %c0_i32, %c0_i32_0 : i32, i32
  }
  func.func @transform_9(%arg0: i32) -> (i32, i32) {
    %c0_i32 = arith.constant 0 : i32
    %c0_i32_0 = arith.constant 0 : i32
    %c0_i32_1 = arith.constant 0 : i32
    return %c0_i32, %c0_i32_0 : i32, i32
  }
  func.func @transform_10(%arg0: i32) -> (i32, i32) {
    %c0_i32 = arith.constant 0 : i32
    %c0_i32_0 = arith.constant 0 : i32
    %c0_i32_1 = arith.constant 0 : i32
    return %c0_i32, %c0_i32_0 : i32, i32
  }
  func.func @transform_11(%arg0: i32) -> (i32, i32) {
    %c0_i32 = arith.constant 0 : i32
    %c0_i32_0 = arith.constant 0 : i32
    %c0_i32_1 = arith.constant 0 : i32
    return %c0_i32, %c0_i32_0 : i32, i32
  }
  func.func @transform_12(%arg0: i32) -> (i32, i32) {
    %c0_i32 = arith.constant 0 : i32
    %c0_i32_0 = arith.constant 0 : i32
    %c0_i32_1 = arith.constant 0 : i32
    return %c0_i32, %c0_i32_0 : i32, i32
  }
  func.func @transform_13(%arg0: i32) -> (i32, i32) {
    %c0_i32 = arith.constant 0 : i32
    %c0_i32_0 = arith.constant 0 : i32
    return %arg0, %c0_i32 : i32, i32
  }
}

</mosaic_0001>

<llo_original>
// kernel: tpu_custom_call.1
$region0: #{tpu_custom_call.1}
  #allocation0 [shape = 'u32[]', space=smem, size = 0x4, offset = 0x4, fixed_abs, tag = 'smem constant byte address 0x4 - core index']
  #allocation1 [shape = 'u32[72,128]{1,0:T(1,128)}', space=vmem, size = 0x9000, scoped, tag = 'internal scratch']
  %s0 = inlined_call_operand.vmem [shape: f32[8,8], index: 0, kind: input, shape index: {}]
  %s1 = inlined_call_operand.vmem [shape: bf16[8,64], index: 1, kind: input, shape index: {}]
  %s2 = inlined_call_operand.vmem [shape: bf16[1,64], index: 2, kind: input, shape index: {}]
  %s3 = inlined_call_operand.vmem [shape: bf16[64,64], index: 3, kind: input, shape index: {}]
  %s4 = inlined_call_operand.vmem [shape: bf16[1,64], index: 4, kind: input, shape index: {}]
  %s5 = inlined_call_operand.vmem [shape: bf16[64,512], index: 5, kind: input, shape index: {}]
  %s6 = inlined_call_operand.vmem [shape: bf16[1,512], index: 6, kind: input, shape index: {}]
  %s7 = inlined_call_operand.hbm [shape: bf16[512,512], index: 7, kind: input, shape index: {}]
  %s8 = inlined_call_operand.vmem [shape: bf16[1,512], index: 8, kind: input, shape index: {}]
  %s9 = inlined_call_operand.vmem [shape: bf16[512,64], index: 9, kind: input, shape index: {}]
  %s10 = inlined_call_operand.vmem [shape: bf16[1,64], index: 10, kind: input, shape index: {}]
  %s11 = inlined_call_operand.vmem [shape: bf16[64,128], index: 11, kind: input, shape index: {}]
  %s12 = inlined_call_operand.vmem [shape: bf16[1,128], index: 12, kind: input, shape index: {}]
  %s13 = inlined_call_operand.hbm [shape: bf16[8,128], index: 13, kind: output, shape index: {}]
  %s14 = sld [smem:[#allocation0]]
  $region66: #{tpu_custom_call.1} parent=0
    _
  %s16 = ssub.s32 1, %s14
  %s17 = scalar_select 0, %s16, %s14
  $region1: #{tpu_custom_call.1} parent=0
    #allocation2 [shape = 'u8[524288]{0}', space=vmem, size = 0x80000, scoped, tag = 'input window, operand 7, single buffered']
    #allocation3 [shape = 's32[1]{0}', space=sflag, size = 0x4, scoped, tag = 'scoped memory for tpu_custom_call.1']
    #allocation4 [shape = 's32[1]{0}', space=sflag, size = 0x4, scoped, tag = 'scoped memory for tpu_custom_call.1']
    #allocation5 [shape = 'u8[2048]{0}', space=vmem, size = 0x800, scoped, tag = 'output window, operand 0, single buffered']
    %18 = vsyncpa [#allocation3], 0
    %19 = vsyncpa [#allocation4], 0
    // Predicated region
    $region2: #{tpu_custom_call.1} parent=1 // pred_check
      _
    $region3: #{tpu_custom_call.1} parent=1 // pred_check_branch
      %21 = sbr.rel (0) target = $region5
    $region4: #{tpu_custom_call.1} parent=1 // pred_region
      _
    $region5: #{tpu_custom_call.1} parent=1 // pred_fallthru
      _
    // Predicated region
    $region6: #{tpu_custom_call.1} parent=1 // pred_check
      _
    $region7: #{tpu_custom_call.1} parent=1 // pred_check_branch
      %23 = sbr.rel (0) target = $region9
    $region8: #{tpu_custom_call.1} parent=1 // pred_region
      _
    $region9: #{tpu_custom_call.1} parent=1 // pred_fallthru
      _
    // Predicated region
    $region10: #{tpu_custom_call.1} parent=1 // pred_check
      _
    $region11: #{tpu_custom_call.1} parent=1 // pred_check_branch
      %25 = sbr.rel (0) target = $region13
    $region12: #{tpu_custom_call.1} parent=1 // pred_region
      _
    $region13: #{tpu_custom_call.1} parent=1 // pred_fallthru
      _
    // Predicated region
    $region14: #{tpu_custom_call.1} parent=1 // pred_check
      _
    $region15: #{tpu_custom_call.1} parent=1 // pred_check_branch
      %27 = sbr.rel (0) target = $region17
    $region16: #{tpu_custom_call.1} parent=1 // pred_region
      _
    $region17: #{tpu_custom_call.1} parent=1 // pred_fallthru
      _
    // Predicated region
    $region18: #{tpu_custom_call.1} parent=1 // pred_check
      _
    $region19: #{tpu_custom_call.1} parent=1 // pred_check_branch
      %29 = sbr.rel (0) target = $region21
    $region20: #{tpu_custom_call.1} parent=1 // pred_region
      _
    $region21: #{tpu_custom_call.1} parent=1 // pred_fallthru
      _
    // Predicated region
    $region22: #{tpu_custom_call.1} parent=1 // pred_check
      _
    $region23: #{tpu_custom_call.1} parent=1 // pred_check_branch
      %31 = sbr.rel (0) target = $region25
    $region24: #{tpu_custom_call.1} parent=1 // pred_region
      _
    $region25: #{tpu_custom_call.1} parent=1 // pred_fallthru
      _
    // Predicated region
    $region26: #{tpu_custom_call.1} parent=1 // pred_check
      _
    $region27: #{tpu_custom_call.1} parent=1 // pred_check_branch
      %33 = sbr.rel (0) target = $region29
    $region28: #{tpu_custom_call.1} parent=1 // pred_region
      _
    $region29: #{tpu_custom_call.1} parent=1 // pred_fallthru
      _
    // Predicated region
    $region30: #{tpu_custom_call.1} parent=1 // pred_check
      _
    $region31: #{tpu_custom_call.1} parent=1 // pred_check_branch
      %35 = sbr.rel (0) target = $region33
    $region32: #{tpu_custom_call.1} parent=1 // pred_region
      %37 = vsyncadd [#allocation3], 0
      %s38 = sshll.u32 %s7, 4
      %s39 = int_to_ptr.hbm [resolvable:$true] %s38
      %s40 = sshll.u32 [#allocation2], 4
      %s41 = int_to_ptr.vmem [resolvable:$true] %s40
      %46 = dma.hbm_to_vmem [thread:$0]  %s39, 16384, %s41, [#allocation3], 256, 256, 16
    $region33: #{tpu_custom_call.1} parent=1 // pred_fallthru
      _
    // Predicated region
    $region34: #{tpu_custom_call.1} parent=1 // pred_check
      _
    $region35: #{tpu_custom_call.1} parent=1 // pred_check_branch
      %48 = sbr.rel (0) target = $region37
    $region36: #{tpu_custom_call.1} parent=1 // pred_region
      _
    $region37: #{tpu_custom_call.1} parent=1 // pred_fallthru
      _
    // Predicated region
    $region38: #{tpu_custom_call.1} parent=1 // pred_check
      _
    $region39: #{tpu_custom_call.1} parent=1 // pred_check_branch
      %50 = sbr.rel (0) target = $region41
    $region40: #{tpu_custom_call.1} parent=1 // pred_region
      _
    $region41: #{tpu_custom_call.1} parent=1 // pred_fallthru
      _
    // Predicated region
    $region42: #{tpu_custom_call.1} parent=1 // pred_check
      _
    $region43: #{tpu_custom_call.1} parent=1 // pred_check_branch
      %52 = sbr.rel (0) target = $region45
    $region44: #{tpu_custom_call.1} parent=1 // pred_region
      _
    $region45: #{tpu_custom_call.1} parent=1 // pred_fallthru
      _
    // Predicated region
    $region46: #{tpu_custom_call.1} parent=1 // pred_check
      _
    $region47: #{tpu_custom_call.1} parent=1 // pred_check_branch
      %54 = sbr.rel (0) target = $region49
    $region48: #{tpu_custom_call.1} parent=1 // pred_region
      _
    $region49: #{tpu_custom_call.1} parent=1 // pred_fallthru
      _
    // Predicated region
    $region50: #{tpu_custom_call.1} parent=1 // pred_check
      _
    $region51: #{tpu_custom_call.1} parent=1 // pred_check_branch
      %56 = sbr.rel (0) target = $region53
    $region52: #{tpu_custom_call.1} parent=1 // pred_region
      _
    $region53: #{tpu_custom_call.1} parent=1 // pred_fallthru
      _
    // Predicated region
    $region54: #{tpu_custom_call.1} parent=1 // pred_check
      _
    $region55: #{tpu_custom_call.1} parent=1 // pred_check_branch
      %58 = sbr.rel (0) target = $region57
    $region56: #{tpu_custom_call.1} parent=1 // pred_region
      %60 = dma.done [#allocation3], 16384
    $region57: #{tpu_custom_call.1} parent=1 // pred_fallthru
      _
    %v62 = vld [vmem:[%s0] sm:$0xff]
    %v63 = vpack.c.bf16 %v62, %v62
    %v64 = vld [vmem:[%s1] sm:$0xf]
    %vm65 = vcmask 64512
    %v67 = vsel %vm65, %v63, 0
    %vm69 = vcmask 1043456
    %v71 = vsel %vm69, %v64, 0
    %73 = vmatpush.bf16.msra.mxu0 0
    %74 = vmatpush.bf16.msra.mxu0 0
    %75 = vmatpush.bf16.msra.mxu0 0
    %76 = vmatpush.bf16.msra.mxu0 0
    %77 = vmatpush.bf16.msra.mxu0 0
    %78 = vmatpush.bf16.msra.mxu0 0
    %79 = vmatpush.bf16.msra.mxu0 0
    %80 = vmatpush.bf16.msra.mxu0 %v71
    %81 = vmatmul.bf16.gmra.mxu0 %v67
    %v82 = vpop.f32.mrf.mxu0
    %v83 = vadd.f32 0.0, %v82
    %v84 = vpop.f32.mrf.mxu0
    %85 = vdwg.mxu0
    %v86 = vpack.c.bf16 %v83, %v83
    %v87 = vld [vmem:[%s2] sm:$0x1]
    %v89 = vpack.i.b16 %v87, %v87
    %v91 = vperm.slane %v89, 0
    %v92 = vunpack.c.l.bf16 %v86
    %v93 = vunpack.c.l.bf16 %v91
    %v94 = vadd.f32 %v92, %v93
    %v95 = vpack.c.bf16 %v94, %v94
    %v96 = vunpack.c.l.bf16 %v95
    %v97 = vmax.f32 %v96, 0.0
    %v98 = vpack.c.bf16 %v97, %v97
    %v99 = vld [vmem:[%s3] sm:$0xf]
    %v100 = vld [vmem:[%s3 + $0x4] sm:$0xf]
    %v101 = vld [vmem:[%s3 + $0x8] sm:$0xf]
    %v102 = vld [vmem:[%s3 + $0xc] sm:$0xf]
    %v103 = vld [vmem:[%s3 + $0x10] sm:$0xf]
    %v104 = vld [vmem:[%s3 + $0x14] sm:$0xf]
    %v105 = vld [vmem:[%s3 + $0x18] sm:$0xf]
    %v106 = vld [vmem:[%s3 + $0x1c] sm:$0xf]
    %v115 = vunpack.c.l.b16 %v99
    %v116 = vunpack.c.l.b16 %v100
    %v117 = vunpack.c.l.b16 %v101
    %v118 = vunpack.c.l.b16 %v102
    %v119 = vunpack.c.l.b16 %v103
    %v120 = vunpack.c.l.b16 %v104
    %v121 = vunpack.c.l.b16 %v105
    %v122 = vunpack.c.l.b16 %v106
    %v123 = vpack.c.b16 %v116, %v115
    %v124 = vpack.c.b16 %v118, %v117
    %v125 = vpack.c.b16 %v120, %v119
    %v126 = vpack.c.b16 %v122, %v121
    %vm131 = vcmask 523264
    %v133 = vsel %vm131, %v98, 0
    %135 = vmatpush.bf16.msra.mxu0 0
    %136 = vmatpush.bf16.msra.mxu0 0
    %137 = vmatpush.bf16.msra.mxu0 0
    %138 = vmatpush.bf16.msra.mxu0 0
    %139 = vmatpush.bf16.msra.mxu0 %v126
    %140 = vmatpush.bf16.msra.mxu0 %v125
    %141 = vmatpush.bf16.msra.mxu0 %v124
    %142 = vmatpush.bf16.msra.mxu0 %v123
    %143 = vmatmul.bf16.gmra.mxu0 %v133
    %v144 = vpop.f32.mrf.mxu0
    %v145 = vadd.f32 0.0, %v144
    %v146 = vpop.f32.mrf.mxu0
    %147 = vdwg.mxu0
    %v148 = vpack.c.bf16 %v145, %v145
    %v149 = vld [vmem:[%s4] sm:$0x1]
    %v151 = vpack.i.b16 %v149, %v149
    %v153 = vperm.slane %v151, 0
    %v154 = vunpack.c.l.bf16 %v148
    %v155 = vunpack.c.l.bf16 %v153
    %v156 = vadd.f32 %v154, %v155
    %v157 = vpack.c.bf16 %v156, %v156
    %v158 = vunpack.c.l.bf16 %v157
    %v159 = vmax.f32 %v158, 0.0
    %v160 = vpack.c.bf16 %v159, %v159
    %v161 = vld [vmem:[%s5] sm:$0xff]
    %v162 = vld [vmem:[%s5 + $0x8] sm:$0xff]
    %v163 = vld [vmem:[%s5 + $0x10] sm:$0xff]
    %v164 = vld [vmem:[%s5 + $0x18] sm:$0xff]
    %v165 = vld [vmem:[%s5 + $0x20] sm:$0xff]
    %v166 = vld [vmem:[%s5 + $0x28] sm:$0xff]
    %v167 = vld [vmem:[%s5 + $0x30] sm:$0xff]
    %v168 = vld [vmem:[%s5 + $0x38] sm:$0xff]
    %v169 = vld [vmem:[%s5 + $0x40] sm:$0xff]
    %v170 = vld [vmem:[%s5 + $0x48] sm:$0xff]
    %v171 = vld [vmem:[%s5 + $0x50] sm:$0xff]
    %v172 = vld [vmem:[%s5 + $0x58] sm:$0xff]
    %v173 = vld [vmem:[%s5 + $0x60] sm:$0xff]
    %v174 = vld [vmem:[%s5 + $0x68] sm:$0xff]
    %v175 = vld [vmem:[%s5 + $0x70] sm:$0xff]
    %v176 = vld [vmem:[%s5 + $0x78] sm:$0xff]
    %v193 = vunpack.c.l.b16 %v161
    %v194 = vunpack.c.h.b16 %v161
    %v195 = vunpack.c.l.b16 %v162
    %v196 = vunpack.c.h.b16 %v162
    %v197 = vunpack.c.l.b16 %v163
    %v198 = vunpack.c.h.b16 %v163
    %v199 = vunpack.c.l.b16 %v164
    %v200 = vunpack.c.h.b16 %v164
    %v201 = vunpack.c.l.b16 %v165
    %v202 = vunpack.c.h.b16 %v165
    %v203 = vunpack.c.l.b16 %v166
    %v204 = vunpack.c.h.b16 %v166
    %v205 = vunpack.c.l.b16 %v167
    %v206 = vunpack.c.h.b16 %v167
    %v207 = vunpack.c.l.b16 %v168
    %v208 = vunpack.c.h.b16 %v168
    %v209 = vunpack.c.l.b16 %v169
    %v210 = vunpack.c.h.b16 %v169
    %v211 = vunpack.c.l.b16 %v170
    %v212 = vunpack.c.h.b16 %v170
    %v213 = vunpack.c.l.b16 %v171
    %v214 = vunpack.c.h.b16 %v171
    %v215 = vunpack.c.l.b16 %v172
    %v216 = vunpack.c.h.b16 %v172
    %v217 = vunpack.c.l.b16 %v173
    %v218 = vunpack.c.h.b16 %v173
    %v219 = vunpack.c.l.b16 %v174
    %v220 = vunpack.c.h.b16 %v174
    %v221 = vunpack.c.l.b16 %v175
    %v222 = vunpack.c.h.b16 %v175
    %v223 = vunpack.c.l.b16 %v176
    %v224 = vunpack.c.h.b16 %v176
    %v225 = vpack.c.b16 %v197, %v193
    %v226 = vpack.c.b16 %v198, %v194
    %v227 = vpack.c.b16 %v199, %v195
    %v228 = vpack.c.b16 %v200, %v196
    %v229 = vpack.c.b16 %v205, %v201
    %v230 = vpack.c.b16 %v206, %v202
    %v231 = vpack.c.b16 %v207, %v203
    %v232 = vpack.c.b16 %v208, %v204
    %v233 = vpack.c.b16 %v213, %v209
    %v234 = vpack.c.b16 %v214, %v210
    %v235 = vpack.c.b16 %v215, %v211
    %v236 = vpack.c.b16 %v216, %v212
    %v237 = vpack.c.b16 %v221, %v217
    %v238 = vpack.c.b16 %v222, %v218
    %v239 = vpack.c.b16 %v223, %v219
    %v240 = vpack.c.b16 %v224, %v220
    %v258 = vsel %vm131, %v160, 0
    %260 = vmatpush.bf16.msra.mxu0 0
    %261 = vmatpush.bf16.msra.mxu0 0
    %262 = vmatpush.bf16.msra.mxu0 0
    %263 = vmatpush.bf16.msra.mxu0 0
    %264 = vmatpush.bf16.msra.mxu0 %v237
    %265 = vmatpush.bf16.msra.mxu0 %v233
    %266 = vmatpush.bf16.msra.mxu0 %v229
    %267 = vmatpush.bf16.msra.mxu0 %v225
    %268 = vmatmul.bf16.gmra.mxu0 %v258
    %v269 = vpop.f32.mrf.mxu0
    %v270 = vadd.f32 0.0, %v269
    %v271 = vpop.f32.mrf.mxu0
    %272 = vdwg.mxu0
    %273 = vmatpush.bf16.msra.mxu0 0
    %274 = vmatpush.bf16.msra.mxu0 0
    %275 = vmatpush.bf16.msra.mxu0 0
    %276 = vmatpush.bf16.msra.mxu0 0
    %277 = vmatpush.bf16.msra.mxu0 %v238
    %278 = vmatpush.bf16.msra.mxu0 %v234
    %279 = vmatpush.bf16.msra.mxu0 %v230
    %280 = vmatpush.bf16.msra.mxu0 %v226
    %281 = vmatmul.bf16.gmra.mxu0 %v258
    %v282 = vpop.f32.mrf.mxu0
    %v283 = vadd.f32 0.0, %v282
    %v284 = vpop.f32.mrf.mxu0
    %285 = vdwg.mxu0
    %286 = vmatpush.bf16.msra.mxu0 0
    %287 = vmatpush.bf16.msra.mxu0 0
    %288 = vmatpush.bf16.msra.mxu0 0
    %289 = vmatpush.bf16.msra.mxu0 0
    %290 = vmatpush.bf16.msra.mxu0 %v239
    %291 = vmatpush.bf16.msra.mxu0 %v235
    %292 = vmatpush.bf16.msra.mxu0 %v231
    %293 = vmatpush.bf16.msra.mxu0 %v227
    %294 = vmatmul.bf16.gmra.mxu0 %v258
    %v295 = vpop.f32.mrf.mxu0
    %v296 = vadd.f32 0.0, %v295
    %v297 = vpop.f32.mrf.mxu0
    %298 = vdwg.mxu0
    %299 = vmatpush.bf16.msra.mxu0 0
    %300 = vmatpush.bf16.msra.mxu0 0
    %301 = vmatpush.bf16.msra.mxu0 0
    %302 = vmatpush.bf16.msra.mxu0 0
    %303 = vmatpush.bf16.msra.mxu0 %v240
    %304 = vmatpush.bf16.msra.mxu0 %v236
    %305 = vmatpush.bf16.msra.mxu0 %v232
    %306 = vmatpush.bf16.msra.mxu0 %v228
    %307 = vmatmul.bf16.gmra.mxu0 %v258
    %v308 = vpop.f32.mrf.mxu0
    %v309 = vadd.f32 0.0, %v308
    %v310 = vpop.f32.mrf.mxu0
    %311 = vdwg.mxu0
    %v312 = vpack.c.bf16 %v283, %v270
    %v313 = vpack.c.bf16 %v309, %v296
    %v314 = vld [vmem:[%s6] sm:$0xf]
    %316 = vst [vmem:[#allocation1] ss:$9 sm:$0xff] %v314
    %v317 = vld [vmem:[#allocation1] sm:$0xff]
    %v318 = vld [vmem:[#allocation1 + $0x9] sm:$0xff]
    %v319 = vld [vmem:[#allocation1 + $0x12] sm:$0xff]
    %v320 = vld [vmem:[#allocation1 + $0x1b] sm:$0xff]
    %v321 = vpack.i.b16 %v317, %v317
    %v323 = vperm.slane %v321, 0
    %v324 = vpack.i.b16 %v318, %v318
    %v326 = vperm.slane %v324, 0
    %v327 = vpack.i.b16 %v319, %v319
    %v329 = vperm.slane %v327, 0
    %v330 = vpack.i.b16 %v320, %v320
    %v332 = vperm.slane %v330, 0
    %v333 = vunpack.c.l.bf16 %v312
    %v334 = vunpack.c.h.bf16 %v312
    %v335 = vunpack.c.l.bf16 %v313
    %v336 = vunpack.c.h.bf16 %v313
    %v337 = vunpack.c.l.bf16 %v323
    %v338 = vunpack.c.l.bf16 %v326
    %v339 = vunpack.c.l.bf16 %v329
    %v340 = vunpack.c.l.bf16 %v332
    %v341 = vadd.f32 %v333, %v337
    %v342 = vadd.f32 %v334, %v338
    %v343 = vadd.f32 %v335, %v339
    %v344 = vadd.f32 %v336, %v340
    %v345 = vpack.c.bf16 %v342, %v341
    %v346 = vpack.c.bf16 %v344, %v343
    %v347 = vunpack.c.l.bf16 %v345
    %v348 = vunpack.c.h.bf16 %v345
    %v349 = vunpack.c.l.bf16 %v346
    %v350 = vunpack.c.h.bf16 %v346
    %v351 = vmax.f32 %v347, 0.0
    %v352 = vmax.f32 %v348, 0.0
    %v353 = vmax.f32 %v349, 0.0
    %v354 = vmax.f32 %v350, 0.0
    %v355 = vpack.c.bf16 %v351, %v351
    %v356 = vpack.c.bf16 %v352, %v352
    %v357 = vpack.c.bf16 %v353, %v353
    %v358 = vpack.c.bf16 %v354, %v354
    %v359 = vld [vmem:[#allocation2] sm:$0xff]
    %v360 = vld [vmem:[#allocation2 + $0x8] sm:$0xff]
    %v361 = vld [vmem:[#allocation2 + $0x10] sm:$0xff]
    %v362 = vld [vmem:[#allocation2 + $0x18] sm:$0xff]
    %v363 = vld [vmem:[#allocation2 + $0x20] sm:$0xff]
    %v364 = vld [vmem:[#allocation2 + $0x28] sm:$0xff]
    %v365 = vld [vmem:[#allocation2 + $0x30] sm:$0xff]
    %v366 = vld [vmem:[#allocation2 + $0x38] sm:$0xff]
    %v367 = vld [vmem:[#allocation2 + $0x40] sm:$0xff]
    %v368 = vld [vmem:[#allocation2 + $0x48] sm:$0xff]
    %v369 = vld [vmem:[#allocation2 + $0x50] sm:$0xff]
    %v370 = vld [vmem:[#allocation2 + $0x58] sm:$0xff]
    %v371 = vld [vmem:[#allocation2 + $0x60] sm:$0xff]
    %v372 = vld [vmem:[#allocation2 + $0x68] sm:$0xff]
    %v373 = vld [vmem:[#allocation2 + $0x70] sm:$0xff]
    %v374 = vld [vmem:[#allocation2 + $0x78] sm:$0xff]
    %v375 = vld [vmem:[#allocation2 + $0x80] sm:$0xff]
    %v376 = vld [vmem:[#allocation2 + $0x88] sm:$0xff]
    %v377 = vld [vmem:[#allocation2 + $0x90] sm:$0xff]
    %v378 = vld [vmem:[#allocation2 + $0x98] sm:$0xff]
    %v379 = vld [vmem:[#allocation2 + $0xa0] sm:$0xff]
    %v380 = vld [vmem:[#allocation2 + $0xa8] sm:$0xff]
    %v381 = vld [vmem:[#allocation2 + $0xb0] sm:$0xff]
    %v382 = vld [vmem:[#allocation2 + $0xb8] sm:$0xff]
    %v383 = vld [vmem:[#allocation2 + $0xc0] sm:$0xff]
    %v384 = vld [vmem:[#allocation2 + $0xc8] sm:$0xff]
    %v385 = vld [vmem:[#allocation2 + $0xd0] sm:$0xff]
    %v386 = vld [vmem:[#allocation2 + $0xd8] sm:$0xff]
    %v387 = vld [vmem:[#allocation2 + $0xe0] sm:$0xff]
    %v388 = vld [vmem:[#allocation2 + $0xe8] sm:$0xff]
    %v389 = vld [vmem:[#allocation2 + $0xf0] sm:$0xff]
    %v390 = vld [vmem:[#allocation2 + $0xf8] sm:$0xff]
    %v391 = vld [vmem:[#allocation2 + $0x100] sm:$0xff]
    %v392 = vld [vmem:[#allocation2 + $0x108] sm:$0xff]
    %v393 = vld [vmem:[#allocation2 + $0x110] sm:$0xff]
    %v394 = vld [vmem:[#allocation2 + $0x118] sm:$0xff]
    %v395 = vld [vmem:[#allocation2 + $0x120] sm:$0xff]
    %v396 = vld [vmem:[#allocation2 + $0x128] sm:$0xff]
    %v397 = vld [vmem:[#allocation2 + $0x130] sm:$0xff]
    %v398 = vld [vmem:[#allocation2 + $0x138] sm:$0xff]
    %v399 = vld [vmem:[#allocation2 + $0x140] sm:$0xff]
    %v400 = vld [vmem:[#allocation2 + $0x148] sm:$0xff]
    %v401 = vld [vmem:[#allocation2 + $0x150] sm:$0xff]
    %v402 = vld [vmem:[#allocation2 + $0x158] sm:$0xff]
    %v403 = vld [vmem:[#allocation2 + $0x160] sm:$0xff]
    %v404 = vld [vmem:[#allocation2 + $0x168] sm:$0xff]
    %v405 = vld [vmem:[#allocation2 + $0x170] sm:$0xff]
    %v406 = vld [vmem:[#allocation2 + $0x178] sm:$0xff]
    %v407 = vld [vmem:[#allocation2 + $0x180] sm:$0xff]
    %v408 = vld [vmem:[#allocation2 + $0x188] sm:$0xff]
    %v409 = vld [vmem:[#allocation2 + $0x190] sm:$0xff]
    %v410 = vld [vmem:[#allocation2 + $0x198] sm:$0xff]
    %v411 = vld [vmem:[#allocation2 + $0x1a0] sm:$0xff]
    %v412 = vld [vmem:[#allocation2 + $0x1a8] sm:$0xff]
    %v413 = vld [vmem:[#allocation2 + $0x1b0] sm:$0xff]
    %v414 = vld [vmem:[#allocation2 + $0x1b8] sm:$0xff]
    %v415 = vld [vmem:[#allocation2 + $0x1c0] sm:$0xff]
    %v416 = vld [vmem:[#allocation2 + $0x1c8] sm:$0xff]
    %v417 = vld [vmem:[#allocation2 + $0x1d0] sm:$0xff]
    %v418 = vld [vmem:[#allocation2 + $0x1d8] sm:$0xff]
    %v419 = vld [vmem:[#allocation2 + $0x1e0] sm:$0xff]
    %v420 = vld [vmem:[#allocation2 + $0x1e8] sm:$0xff]
    %v421 = vld [vmem:[#allocation2 + $0x1f0] sm:$0xff]
    %v422 = vld [vmem:[#allocation2 + $0x1f8] sm:$0xff]
    %v423 = vld [vmem:[#allocation2 + $0x200] sm:$0xff]
    %v424 = vld [vmem:[#allocation2 + $0x208] sm:$0xff]
    %v425 = vld [vmem:[#allocation2 + $0x210] sm:$0xff]
    %v426 = vld [vmem:[#allocation2 + $0x218] sm:$0xff]
    %v427 = vld [vmem:[#allocation2 + $0x220] sm:$0xff]
    %v428 = vld [vmem:[#allocation2 + $0x228] sm:$0xff]
    %v429 = vld [vmem:[#allocation2 + $0x230] sm:$0xff]
    %v430 = vld [vmem:[#allocation2 + $0x238] sm:$0xff]
    %v431 = vld [vmem:[#allocation2 + $0x240] sm:$0xff]
    %v432 = vld [vmem:[#allocation2 + $0x248] sm:$0xff]
    %v433 = vld [vmem:[#allocation2 + $0x250] sm:$0xff]
    %v434 = vld [vmem:[#allocation2 + $0x258] sm:$0xff]
    %v435 = vld [vmem:[#allocation2 + $0x260] sm:$0xff]
    %v436 = vld [vmem:[#allocation2 + $0x268] sm:$0xff]
    %v437 = vld [vmem:[#allocation2 + $0x270] sm:$0xff]
    %v438 = vld [vmem:[#allocation2 + $0x278] sm:$0xff]
    %v439 = vld [vmem:[#allocation2 + $0x280] sm:$0xff]
    %v440 = vld [vmem:[#allocation2 + $0x288] sm:$0xff]
    %v441 = vld [vmem:[#allocation2 + $0x290] sm:$0xff]
    %v442 = vld [vmem:[#allocation2 + $0x298] sm:$0xff]
    %v443 = vld [vmem:[#allocation2 + $0x2a0] sm:$0xff]
    %v444 = vld [vmem:[#allocation2 + $0x2a8] sm:$0xff]
    %v445 = vld [vmem:[#allocation2 + $0x2b0] sm:$0xff]
    %v446 = vld [vmem:[#allocation2 + $0x2b8] sm:$0xff]
    %v447 = vld [vmem:[#allocation2 + $0x2c0] sm:$0xff]
    %v448 = vld [vmem:[#allocation2 + $0x2c8] sm:$0xff]
    %v449 = vld [vmem:[#allocation2 + $0x2d0] sm:$0xff]
    %v450 = vld [vmem:[#allocation2 + $0x2d8] sm:$0xff]
    %v451 = vld [vmem:[#allocation2 + $0x2e0] sm:$0xff]
    %v452 = vld [vmem:[#allocation2 + $0x2e8] sm:$0xff]
    %v453 = vld [vmem:[#allocation2 + $0x2f0] sm:$0xff]
    %v454 = vld [vmem:[#allocation2 + $0x2f8] sm:$0xff]
    %v455 = vld [vmem:[#allocation2 + $0x300] sm:$0xff]
    %v456 = vld [vmem:[#allocation2 + $0x308] sm:$0xff]
    %v457 = vld [vmem:[#allocation2 + $0x310] sm:$0xff]
    %v458 = vld [vmem:[#allocation2 + $0x318] sm:$0xff]
    %v459 = vld [vmem:[#allocation2 + $0x320] sm:$0xff]
    %v460 = vld [vmem:[#allocation2 + $0x328] sm:$0xff]
    %v461 = vld [vmem:[#allocation2 + $0x330] sm:$0xff]
    %v462 = vld [vmem:[#allocation2 + $0x338] sm:$0xff]
    %v463 = vld [vmem:[#allocation2 + $0x340] sm:$0xff]
    %v464 = vld [vmem:[#allocation2 + $0x348] sm:$0xff]
    %v465 = vld [vmem:[#allocation2 + $0x350] sm:$0xff]
    %v466 = vld [vmem:[#allocation2 + $0x358] sm:$0xff]
    %v467 = vld [vmem:[#allocation2 + $0x360] sm:$0xff]
    %v468 = vld [vmem:[#allocation2 + $0x368] sm:$0xff]
    %v469 = vld [vmem:[#allocation2 + $0x370] sm:$0xff]
    %v470 = vld [vmem:[#allocation2 + $0x378] sm:$0xff]
    %v471 = vld [vmem:[#allocation2 + $0x380] sm:$0xff]
    %v472 = vld [vmem:[#allocation2 + $0x388] sm:$0xff]
    %v473 = vld [vmem:[#allocation2 + $0x390] sm:$0xff]
    %v474 = vld [vmem:[#allocation2 + $0x398] sm:$0xff]
    %v475 = vld [vmem:[#allocation2 + $0x3a0] sm:$0xff]
    %v476 = vld [vmem:[#allocation2 + $0x3a8] sm:$0xff]
    %v477 = vld [vmem:[#allocation2 + $0x3b0] sm:$0xff]
    %v478 = vld [vmem:[#allocation2 + $0x3b8] sm:$0xff]
    %v479 = vld [vmem:[#allocation2 + $0x3c0] sm:$0xff]
    %v480 = vld [vmem:[#allocation2 + $0x3c8] sm:$0xff]
    %v481 = vld [vmem:[#allocation2 + $0x3d0] sm:$0xff]
    %v482 = vld [vmem:[#allocation2 + $0x3d8] sm:$0xff]
    %v483 = vld [vmem:[#allocation2 + $0x3e0] sm:$0xff]
    %v484 = vld [vmem:[#allocation2 + $0x3e8] sm:$0xff]
    %v485 = vld [vmem:[#allocation2 + $0x3f0] sm:$0xff]
    %v486 = vld [vmem:[#allocation2 + $0x3f8] sm:$0xff]
    %v615 = vunpack.c.l.b16 %v359
    %v616 = vunpack.c.h.b16 %v359
    %v617 = vunpack.c.l.b16 %v360
    %v618 = vunpack.c.h.b16 %v360
    %v619 = vunpack.c.l.b16 %v361
    %v620 = vunpack.c.h.b16 %v361
    %v621 = vunpack.c.l.b16 %v362
    %v622 = vunpack.c.h.b16 %v362
    %v623 = vunpack.c.l.b16 %v363
    %v624 = vunpack.c.h.b16 %v363
    %v625 = vunpack.c.l.b16 %v364
    %v626 = vunpack.c.h.b16 %v364
    %v627 = vunpack.c.l.b16 %v365
    %v628 = vunpack.c.h.b16 %v365
    %v629 = vunpack.c.l.b16 %v366
    %v630 = vunpack.c.h.b16 %v366
    %v631 = vunpack.c.l.b16 %v367
    %v632 = vunpack.c.h.b16 %v367
    %v633 = vunpack.c.l.b16 %v368
    %v634 = vunpack.c.h.b16 %v368
    %v635 = vunpack.c.l.b16 %v369
    %v636 = vunpack.c.h.b16 %v369
    %v637 = vunpack.c.l.b16 %v370
    %v638 = vunpack.c.h.b16 %v370
    %v639 = vunpack.c.l.b16 %v371
    %v640 = vunpack.c.h.b16 %v371
    %v641 = vunpack.c.l.b16 %v372
    %v642 = vunpack.c.h.b16 %v372
    %v643 = vunpack.c.l.b16 %v373
    %v644 = vunpack.c.h.b16 %v373
    %v645 = vunpack.c.l.b16 %v374
    %v646 = vunpack.c.h.b16 %v374
    %v647 = vunpack.c.l.b16 %v375
    %v648 = vunpack.c.h.b16 %v375
    %v649 = vunpack.c.l.b16 %v376
    %v650 = vunpack.c.h.b16 %v376
    %v651 = vunpack.c.l.b16 %v377
    %v652 = vunpack.c.h.b16 %v377
    %v653 = vunpack.c.l.b16 %v378
    %v654 = vunpack.c.h.b16 %v378
    %v655 = vunpack.c.l.b16 %v379
    %v656 = vunpack.c.h.b16 %v379
    %v657 = vunpack.c.l.b16 %v380
    %v658 = vunpack.c.h.b16 %v380
    %v659 = vunpack.c.l.b16 %v381
    %v660 = vunpack.c.h.b16 %v381
    %v661 = vunpack.c.l.b16 %v382
    %v662 = vunpack.c.h.b16 %v382
    %v663 = vunpack.c.l.b16 %v383
    %v664 = vunpack.c.h.b16 %v383
    %v665 = vunpack.c.l.b16 %v384
    %v666 = vunpack.c.h.b16 %v384
    %v667 = vunpack.c.l.b16 %v385
    %v668 = vunpack.c.h.b16 %v385
    %v669 = vunpack.c.l.b16 %v386
    %v670 = vunpack.c.h.b16 %v386
    %v671 = vunpack.c.l.b16 %v387
    %v672 = vunpack.c.h.b16 %v387
    %v673 = vunpack.c.l.b16 %v388
    %v674 = vunpack.c.h.b16 %v388
    %v675 = vunpack.c.l.b16 %v389
    %v676 = vunpack.c.h.b16 %v389
    %v677 = vunpack.c.l.b16 %v390
    %v678 = vunpack.c.h.b16 %v390
    %v679 = vunpack.c.l.b16 %v391
    %v680 = vunpack.c.h.b16 %v391
    %v681 = vunpack.c.l.b16 %v392
    %v682 = vunpack.c.h.b16 %v392
    %v683 = vunpack.c.l.b16 %v393
    %v684 = vunpack.c.h.b16 %v393
    %v685 = vunpack.c.l.b16 %v394
    %v686 = vunpack.c.h.b16 %v394
    %v687 = vunpack.c.l.b16 %v395
    %v688 = vunpack.c.h.b16 %v395
    %v689 = vunpack.c.l.b16 %v396
    %v690 = vunpack.c.h.b16 %v396
    %v691 = vunpack.c.l.b16 %v397
    %v692 = vunpack.c.h.b16 %v397
    %v693 = vunpack.c.l.b16 %v398
    %v694 = vunpack.c.h.b16 %v398
    %v695 = vunpack.c.l.b16 %v399
    %v696 = vunpack.c.h.b16 %v399
    %v697 = vunpack.c.l.b16 %v400
    %v698 = vunpack.c.h.b16 %v400
    %v699 = vunpack.c.l.b16 %v401
    %v700 = vunpack.c.h.b16 %v401
    %v701 = vunpack.c.l.b16 %v402
    %v702 = vunpack.c.h.b16 %v402
    %v703 = vunpack.c.l.b16 %v403
    %v704 = vunpack.c.h.b16 %v403
    %v705 = vunpack.c.l.b16 %v404
    %v706 = vunpack.c.h.b16 %v404
    %v707 = vunpack.c.l.b16 %v405
    %v708 = vunpack.c.h.b16 %v405
    %v709 = vunpack.c.l.b16 %v406
    %v710 = vunpack.c.h.b16 %v406
    %v711 = vunpack.c.l.b16 %v407
    %v712 = vunpack.c.h.b16 %v407
    %v713 = vunpack.c.l.b16 %v408
    %v714 = vunpack.c.h.b16 %v408
    %v715 = vunpack.c.l.b16 %v409
    %v716 = vunpack.c.h.b16 %v409
    %v717 = vunpack.c.l.b16 %v410
    %v718 = vunpack.c.h.b16 %v410
    %v719 = vunpack.c.l.b16 %v411
    %v720 = vunpack.c.h.b16 %v411
    %v721 = vunpack.c.l.b16 %v412
    %v722 = vunpack.c.h.b16 %v412
    %v723 = vunpack.c.l.b16 %v413
    %v724 = vunpack.c.h.b16 %v413
    %v725 = vunpack.c.l.b16 %v414
    %v726 = vunpack.c.h.b16 %v414
    %v727 = vunpack.c.l.b16 %v415
    %v728 = vunpack.c.h.b16 %v415
    %v729 = vunpack.c.l.b16 %v416
    %v730 = vunpack.c.h.b16 %v416
    %v731 = vunpack.c.l.b16 %v417
    %v732 = vunpack.c.h.b16 %v417
    %v733 = vunpack.c.l.b16 %v418
    %v734 = vunpack.c.h.b16 %v418
    %v735 = vunpack.c.l.b16 %v419
    %v736 = vunpack.c.h.b16 %v419
    %v737 = vunpack.c.l.b16 %v420
    %v738 = vunpack.c.h.b16 %v420
    %v739 = vunpack.c.l.b16 %v421
    %v740 = vunpack.c.h.b16 %v421
    %v741 = vunpack.c.l.b16 %v422
    %v742 = vunpack.c.h.b16 %v422
    %v743 = vunpack.c.l.b16 %v423
    %v744 = vunpack.c.h.b16 %v423
    %v745 = vunpack.c.l.b16 %v424
    %v746 = vunpack.c.h.b16 %v424
    %v747 = vunpack.c.l.b16 %v425
    %v748 = vunpack.c.h.b16 %v425
    %v749 = vunpack.c.l.b16 %v426
    %v750 = vunpack.c.h.b16 %v426
    %v751 = vunpack.c.l.b16 %v427
    %v752 = vunpack.c.h.b16 %v427
    %v753 = vunpack.c.l.b16 %v428
    %v754 = vunpack.c.h.b16 %v428
    %v755 = vunpack.c.l.b16 %v429
    %v756 = vunpack.c.h.b16 %v429
    %v757 = vunpack.c.l.b16 %v430
    %v758 = vunpack.c.h.b16 %v430
    %v759 = vunpack.c.l.b16 %v431
    %v760 = vunpack.c.h.b16 %v431
    %v761 = vunpack.c.l.b16 %v432
    %v762 = vunpack.c.h.b16 %v432
    %v763 = vunpack.c.l.b16 %v433
    %v764 = vunpack.c.h.b16 %v433
    %v765 = vunpack.c.l.b16 %v434
    %v766 = vunpack.c.h.b16 %v434
    %v767 = vunpack.c.l.b16 %v435
    %v768 = vunpack.c.h.b16 %v435
    %v769 = vunpack.c.l.b16 %v436
    %v770 = vunpack.c.h.b16 %v436
    %v771 = vunpack.c.l.b16 %v437
    %v772 = vunpack.c.h.b16 %v437
    %v773 = vunpack.c.l.b16 %v438
    %v774 = vunpack.c.h.b16 %v438
    %v775 = vunpack.c.l.b16 %v439
    %v776 = vunpack.c.h.b16 %v439
    %v777 = vunpack.c.l.b16 %v440
    %v778 = vunpack.c.h.b16 %v440
    %v779 = vunpack.c.l.b16 %v441
    %v780 = vunpack.c.h.b16 %v441
    %v781 = vunpack.c.l.b16 %v442
    %v782 = vunpack.c.h.b16 %v442
    %v783 = vunpack.c.l.b16 %v443
    %v784 = vunpack.c.h.b16 %v443
    %v785 = vunpack.c.l.b16 %v444
    %v786 = vunpack.c.h.b16 %v444
    %v787 = vunpack.c.l.b16 %v445
    %v788 = vunpack.c.h.b16 %v445
    %v789 = vunpack.c.l.b16 %v446
    %v790 = vunpack.c.h.b16 %v446
    %v791 = vunpack.c.l.b16 %v447
    %v792 = vunpack.c.h.b16 %v447
    %v793 = vunpack.c.l.b16 %v448
    %v794 = vunpack.c.h.b16 %v448
    %v795 = vunpack.c.l.b16 %v449
    %v796 = vunpack.c.h.b16 %v449
    %v797 = vunpack.c.l.b16 %v450
    %v798 = vunpack.c.h.b16 %v450
    %v799 = vunpack.c.l.b16 %v451
    %v800 = vunpack.c.h.b16 %v451
    %v801 = vunpack.c.l.b16 %v452
    %v802 = vunpack.c.h.b16 %v452
    %v803 = vunpack.c.l.b16 %v453
    %v804 = vunpack.c.h.b16 %v453
    %v805 = vunpack.c.l.b16 %v454
    %v806 = vunpack.c.h.b16 %v454
    %v807 = vunpack.c.l.b16 %v455
    %v808 = vunpack.c.h.b16 %v455
    %v809 = vunpack.c.l.b16 %v456
    %v810 = vunpack.c.h.b16 %v456
    %v811 = vunpack.c.l.b16 %v457
    %v812 = vunpack.c.h.b16 %v457
    %v813 = vunpack.c.l.b16 %v458
    %v814 = vunpack.c.h.b16 %v458
    %v815 = vunpack.c.l.b16 %v459
    %v816 = vunpack.c.h.b16 %v459
    %v817 = vunpack.c.l.b16 %v460
    %v818 = vunpack.c.h.b16 %v460
    %v819 = vunpack.c.l.b16 %v461
    %v820 = vunpack.c.h.b16 %v461
    %v821 = vunpack.c.l.b16 %v462
    %v822 = vunpack.c.h.b16 %v462
    %v823 = vunpack.c.l.b16 %v463
    %v824 = vunpack.c.h.b16 %v463
    %v825 = vunpack.c.l.b16 %v464
    %v826 = vunpack.c.h.b16 %v464
    %v827 = vunpack.c.l.b16 %v465
    %v828 = vunpack.c.h.b16 %v465
    %v829 = vunpack.c.l.b16 %v466
    %v830 = vunpack.c.h.b16 %v466
    %v831 = vunpack.c.l.b16 %v467
    %v832 = vunpack.c.h.b16 %v467
    %v833 = vunpack.c.l.b16 %v468
    %v834 = vunpack.c.h.b16 %v468
    %v835 = vunpack.c.l.b16 %v469
    %v836 = vunpack.c.h.b16 %v469
    %v837 = vunpack.c.l.b16 %v470
    %v838 = vunpack.c.h.b16 %v470
    %v839 = vunpack.c.l.b16 %v471
    %v840 = vunpack.c.h.b16 %v471
    %v841 = vunpack.c.l.b16 %v472
    %v842 = vunpack.c.h.b16 %v472
    %v843 = vunpack.c.l.b16 %v473
    %v844 = vunpack.c.h.b16 %v473
    %v845 = vunpack.c.l.b16 %v474
    %v846 = vunpack.c.h.b16 %v474
    %v847 = vunpack.c.l.b16 %v475
    %v848 = vunpack.c.h.b16 %v475
    %v849 = vunpack.c.l.b16 %v476
    %v850 = vunpack.c.h.b16 %v476
    %v851 = vunpack.c.l.b16 %v477
    %v852 = vunpack.c.h.b16 %v477
    %v853 = vunpack.c.l.b16 %v478
    %v854 = vunpack.c.h.b16 %v478
    %v855 = vunpack.c.l.b16 %v479
    %v856 = vunpack.c.h.b16 %v479
    %v857 = vunpack.c.l.b16 %v480
    %v858 = vunpack.c.h.b16 %v480
    %v859 = vunpack.c.l.b16 %v481
    %v860 = vunpack.c.h.b16 %v481
    %v861 = vunpack.c.l.b16 %v482
    %v862 = vunpack.c.h.b16 %v482
    %v863 = vunpack.c.l.b16 %v483
    %v864 = vunpack.c.h.b16 %v483
    %v865 = vunpack.c.l.b16 %v484
    %v866 = vunpack.c.h.b16 %v484
    %v867 = vunpack.c.l.b16 %v485
    %v868 = vunpack.c.h.b16 %v485
    %v869 = vunpack.c.l.b16 %v486
    %v870 = vunpack.c.h.b16 %v486
    %v871 = vpack.c.b16 %v619, %v615
    %v872 = vpack.c.b16 %v620, %v616
    %v873 = vpack.c.b16 %v621, %v617
    %v874 = vpack.c.b16 %v622, %v618
    %v875 = vpack.c.b16 %v627, %v623
    %v876 = vpack.c.b16 %v628, %v624
    %v877 = vpack.c.b16 %v629, %v625
    %v878 = vpack.c.b16 %v630, %v626
    %v879 = vpack.c.b16 %v635, %v631
    %v880 = vpack.c.b16 %v636, %v632
    %v881 = vpack.c.b16 %v637, %v633
    %v882 = vpack.c.b16 %v638, %v634
    %v883 = vpack.c.b16 %v643, %v639
    %v884 = vpack.c.b16 %v644, %v640
    %v885 = vpack.c.b16 %v645, %v641
    %v886 = vpack.c.b16 %v646, %v642
    %v887 = vpack.c.b16 %v651, %v647
    %v888 = vpack.c.b16 %v652, %v648
    %v889 = vpack.c.b16 %v653, %v649
    %v890 = vpack.c.b16 %v654, %v650
    %v891 = vpack.c.b16 %v659, %v655
    %v892 = vpack.c.b16 %v660, %v656
    %v893 = vpack.c.b16 %v661, %v657
    %v894 = vpack.c.b16 %v662, %v658
    %v895 = vpack.c.b16 %v667, %v663
    %v896 = vpack.c.b16 %v668, %v664
    %v897 = vpack.c.b16 %v669, %v665
    %v898 = vpack.c.b16 %v670, %v666
    %v899 = vpack.c.b16 %v675, %v671
    %v900 = vpack.c.b16 %v676, %v672
    %v901 = vpack.c.b16 %v677, %v673
    %v902 = vpack.c.b16 %v678, %v674
    %v903 = vpack.c.b16 %v683, %v679
    %v904 = vpack.c.b16 %v684, %v680
    %v905 = vpack.c.b16 %v685, %v681
    %v906 = vpack.c.b16 %v686, %v682
    %v907 = vpack.c.b16 %v691, %v687
    %v908 = vpack.c.b16 %v692, %v688
    %v909 = vpack.c.b16 %v693, %v689
    %v910 = vpack.c.b16 %v694, %v690
    %v911 = vpack.c.b16 %v699, %v695
    %v912 = vpack.c.b16 %v700, %v696
    %v913 = vpack.c.b16 %v701, %v697
    %v914 = vpack.c.b16 %v702, %v698
    %v915 = vpack.c.b16 %v707, %v703
    %v916 = vpack.c.b16 %v708, %v704
    %v917 = vpack.c.b16 %v709, %v705
    %v918 = vpack.c.b16 %v710, %v706
    %v919 = vpack.c.b16 %v715, %v711
    %v920 = vpack.c.b16 %v716, %v712
    %v921 = vpack.c.b16 %v717, %v713
    %v922 = vpack.c.b16 %v718, %v714
    %v923 = vpack.c.b16 %v723, %v719
    %v924 = vpack.c.b16 %v724, %v720
    %v925 = vpack.c.b16 %v725, %v721
    %v926 = vpack.c.b16 %v726, %v722
    %v927 = vpack.c.b16 %v731, %v727
    %v928 = vpack.c.b16 %v732, %v728
    %v929 = vpack.c.b16 %v733, %v729
    %v930 = vpack.c.b16 %v734, %v730
    %v931 = vpack.c.b16 %v739, %v735
    %v932 = vpack.c.b16 %v740, %v736
    %v933 = vpack.c.b16 %v741, %v737
    %v934 = vpack.c.b16 %v742, %v738
    %v935 = vpack.c.b16 %v747, %v743
    %v936 = vpack.c.b16 %v748, %v744
    %v937 = vpack.c.b16 %v749, %v745
    %v938 = vpack.c.b16 %v750, %v746
    %v939 = vpack.c.b16 %v755, %v751
    %v940 = vpack.c.b16 %v756, %v752
    %v941 = vpack.c.b16 %v757, %v753
    %v942 = vpack.c.b16 %v758, %v754
    %v943 = vpack.c.b16 %v763, %v759
    %v944 = vpack.c.b16 %v764, %v760
    %v945 = vpack.c.b16 %v765, %v761
    %v946 = vpack.c.b16 %v766, %v762
    %v947 = vpack.c.b16 %v771, %v767
    %v948 = vpack.c.b16 %v772, %v768
    %v949 = vpack.c.b16 %v773, %v769
    %v950 = vpack.c.b16 %v774, %v770
    %v951 = vpack.c.b16 %v779, %v775
    %v952 = vpack.c.b16 %v780, %v776
    %v953 = vpack.c.b16 %v781, %v777
    %v954 = vpack.c.b16 %v782, %v778
    %v955 = vpack.c.b16 %v787, %v783
    %v956 = vpack.c.b16 %v788, %v784
    %v957 = vpack.c.b16 %v789, %v785
    %v958 = vpack.c.b16 %v790, %v786
    %v959 = vpack.c.b16 %v795, %v791
    %v960 = vpack.c.b16 %v796, %v792
    %v961 = vpack.c.b16 %v797, %v793
    %v962 = vpack.c.b16 %v798, %v794
    %v963 = vpack.c.b16 %v803, %v799
    %v964 = vpack.c.b16 %v804, %v800
    %v965 = vpack.c.b16 %v805, %v801
    %v966 = vpack.c.b16 %v806, %v802
    %v967 = vpack.c.b16 %v811, %v807
    %v968 = vpack.c.b16 %v812, %v808
    %v969 = vpack.c.b16 %v813, %v809
    %v970 = vpack.c.b16 %v814, %v810
    %v971 = vpack.c.b16 %v819, %v815
    %v972 = vpack.c.b16 %v820, %v816
    %v973 = vpack.c.b16 %v821, %v817
    %v974 = vpack.c.b16 %v822, %v818
    %v975 = vpack.c.b16 %v827, %v823
    %v976 = vpack.c.b16 %v828, %v824
    %v977 = vpack.c.b16 %v829, %v825
    %v978 = vpack.c.b16 %v830, %v826
    %v979 = vpack.c.b16 %v835, %v831
    %v980 = vpack.c.b16 %v836, %v832
    %v981 = vpack.c.b16 %v837, %v833
    %v982 = vpack.c.b16 %v838, %v834
    %v983 = vpack.c.b16 %v843, %v839
    %v984 = vpack.c.b16 %v844, %v840
    %v985 = vpack.c.b16 %v845, %v841
    %v986 = vpack.c.b16 %v846, %v842
    %v987 = vpack.c.b16 %v851, %v847
    %v988 = vpack.c.b16 %v852, %v848
    %v989 = vpack.c.b16 %v853, %v849
    %v990 = vpack.c.b16 %v854, %v850
    %v991 = vpack.c.b16 %v859, %v855
    %v992 = vpack.c.b16 %v860, %v856
    %v993 = vpack.c.b16 %v861, %v857
    %v994 = vpack.c.b16 %v862, %v858
    %v995 = vpack.c.b16 %v867, %v863
    %v996 = vpack.c.b16 %v868, %v864
    %v997 = vpack.c.b16 %v869, %v865
    %v998 = vpack.c.b16 %v870, %v866
    %1127 = vmatpush.bf16.msra.mxu0 %v899
    %1128 = vmatpush.bf16.msra.mxu0 %v895
    %1129 = vmatpush.bf16.msra.mxu0 %v891
    %1130 = vmatpush.bf16.msra.mxu0 %v887
    %1131 = vmatpush.bf16.msra.mxu0 %v883
    %1132 = vmatpush.bf16.msra.mxu0 %v879
    %1133 = vmatpush.bf16.msra.mxu0 %v875
    %1134 = vmatpush.bf16.msra.mxu0 %v871
    %1135 = vmatmul.bf16.gmra.mxu0 %v355
    %v1136 = vpop.f32.mrf.mxu0
    %v1137 = vadd.f32 0.0, %v1136
    %v1138 = vpop.f32.mrf.mxu0
    %1139 = vdwg.mxu0
    %1140 = vmatpush.bf16.msra.mxu0 %v931
    %1141 = vmatpush.bf16.msra.mxu0 %v927
    %1142 = vmatpush.bf16.msra.mxu0 %v923
    %1143 = vmatpush.bf16.msra.mxu0 %v919
    %1144 = vmatpush.bf16.msra.mxu0 %v915
    %1145 = vmatpush.bf16.msra.mxu0 %v911
    %1146 = vmatpush.bf16.msra.mxu0 %v907
    %1147 = vmatpush.bf16.msra.mxu0 %v903
    %1148 = vmatmul.bf16.gmra.mxu0 %v356
    %v1149 = vpop.f32.mrf.mxu0
    %v1150 = vadd.f32 %v1137, %v1149
    %v1151 = vpop.f32.mrf.mxu0
    %1152 = vdwg.mxu0
    %1153 = vmatpush.bf16.msra.mxu0 %v963
    %1154 = vmatpush.bf16.msra.mxu0 %v959
    %1155 = vmatpush.bf16.msra.mxu0 %v955
    %1156 = vmatpush.bf16.msra.mxu0 %v951
    %1157 = vmatpush.bf16.msra.mxu0 %v947
    %1158 = vmatpush.bf16.msra.mxu0 %v943
    %1159 = vmatpush.bf16.msra.mxu0 %v939
    %1160 = vmatpush.bf16.msra.mxu0 %v935
    %1161 = vmatmul.bf16.gmra.mxu0 %v357
    %v1162 = vpop.f32.mrf.mxu0
    %v1163 = vadd.f32 %v1150, %v1162
    %v1164 = vpop.f32.mrf.mxu0
    %1165 = vdwg.mxu0
    %1166 = vmatpush.bf16.msra.mxu0 %v995
    %1167 = vmatpush.bf16.msra.mxu0 %v991
    %1168 = vmatpush.bf16.msra.mxu0 %v987
    %1169 = vmatpush.bf16.msra.mxu0 %v983
    %1170 = vmatpush.bf16.msra.mxu0 %v979
    %1171 = vmatpush.bf16.msra.mxu0 %v975
    %1172 = vmatpush.bf16.msra.mxu0 %v971
    %1173 = vmatpush.bf16.msra.mxu0 %v967
    %1174 = vmatmul.bf16.gmra.mxu0 %v358
    %v1175 = vpop.f32.mrf.mxu0
    %v1176 = vadd.f32 %v1163, %v1175
    %v1177 = vpop.f32.mrf.mxu0
    %1178 = vdwg.mxu0
    %1179 = vmatpush.bf16.msra.mxu0 %v900
    %1180 = vmatpush.bf16.msra.mxu0 %v896
    %1181 = vmatpush.bf16.msra.mxu0 %v892
    %1182 = vmatpush.bf16.msra.mxu0 %v888
    %1183 = vmatpush.bf16.msra.mxu0 %v884
    %1184 = vmatpush.bf16.msra.mxu0 %v880
    %1185 = vmatpush.bf16.msra.mxu0 %v876
    %1186 = vmatpush.bf16.msra.mxu0 %v872
    %1187 = vmatmul.bf16.gmra.mxu0 %v355
    %v1188 = vpop.f32.mrf.mxu0
    %v1189 = vadd.f32 0.0, %v1188
    %v1190 = vpop.f32.mrf.mxu0
    %1191 = vdwg.mxu0
    %1192 = vmatpush.bf16.msra.mxu0 %v932
    %1193 = vmatpush.bf16.msra.mxu0 %v928
    %1194 = vmatpush.bf16.msra.mxu0 %v924
    %1195 = vmatpush.bf16.msra.mxu0 %v920
    %1196 = vmatpush.bf16.msra.mxu0 %v916
    %1197 = vmatpush.bf16.msra.mxu0 %v912
    %1198 = vmatpush.bf16.msra.mxu0 %v908
    %1199 = vmatpush.bf16.msra.mxu0 %v904
    %1200 = vmatmul.bf16.gmra.mxu0 %v356
    %v1201 = vpop.f32.mrf.mxu0
    %v1202 = vadd.f32 %v1189, %v1201
    %v1203 = vpop.f32.mrf.mxu0
    %1204 = vdwg.mxu0
    %1205 = vmatpush.bf16.msra.mxu0 %v964
    %1206 = vmatpush.bf16.msra.mxu0 %v960
    %1207 = vmatpush.bf16.msra.mxu0 %v956
    %1208 = vmatpush.bf16.msra.mxu0 %v952
    %1209 = vmatpush.bf16.msra.mxu0 %v948
    %1210 = vmatpush.bf16.msra.mxu0 %v944
    %1211 = vmatpush.bf16.msra.mxu0 %v940
    %1212 = vmatpush.bf16.msra.mxu0 %v936
    %1213 = vmatmul.bf16.gmra.mxu0 %v357
    %v1214 = vpop.f32.mrf.mxu0
    %v1215 = vadd.f32 %v1202, %v1214
    %v1216 = vpop.f32.mrf.mxu0
    %1217 = vdwg.mxu0
    %1218 = vmatpush.bf16.msra.mxu0 %v996
    %1219 = vmatpush.bf16.msra.mxu0 %v992
    %1220 = vmatpush.bf16.msra.mxu0 %v988
    %1221 = vmatpush.bf16.msra.mxu0 %v984
    %1222 = vmatpush.bf16.msra.mxu0 %v980
    %1223 = vmatpush.bf16.msra.mxu0 %v976
    %1224 = vmatpush.bf16.msra.mxu0 %v972
    %1225 = vmatpush.bf16.msra.mxu0 %v968
    %1226 = vmatmul.bf16.gmra.mxu0 %v358
    %v1227 = vpop.f32.mrf.mxu0
    %v1228 = vadd.f32 %v1215, %v1227
    %v1229 = vpop.f32.mrf.mxu0
    %1230 = vdwg.mxu0
    %1231 = vmatpush.bf16.msra.mxu0 %v901
    %1232 = vmatpush.bf16.msra.mxu0 %v897
    %1233 = vmatpush.bf16.msra.mxu0 %v893
    %1234 = vmatpush.bf16.msra.mxu0 %v889
    %1235 = vmatpush.bf16.msra.mxu0 %v885
    %1236 = vmatpush.bf16.msra.mxu0 %v881
    %1237 = vmatpush.bf16.msra.mxu0 %v877
    %1238 = vmatpush.bf16.msra.mxu0 %v873
    %1239 = vmatmul.bf16.gmra.mxu0 %v355
    %v1240 = vpop.f32.mrf.mxu0
    %v1241 = vadd.f32 0.0, %v1240
    %v1242 = vpop.f32.mrf.mxu0
    %1243 = vdwg.mxu0
    %1244 = vmatpush.bf16.msra.mxu0 %v933
    %1245 = vmatpush.bf16.msra.mxu0 %v929
    %1246 = vmatpush.bf16.msra.mxu0 %v925
    %1247 = vmatpush.bf16.msra.mxu0 %v921
    %1248 = vmatpush.bf16.msra.mxu0 %v917
    %1249 = vmatpush.bf16.msra.mxu0 %v913
    %1250 = vmatpush.bf16.msra.mxu0 %v909
    %1251 = vmatpush.bf16.msra.mxu0 %v905
    %1252 = vmatmul.bf16.gmra.mxu0 %v356
    %v1253 = vpop.f32.mrf.mxu0
    %v1254 = vadd.f32 %v1241, %v1253
    %v1255 = vpop.f32.mrf.mxu0
    %1256 = vdwg.mxu0
    %1257 = vmatpush.bf16.msra.mxu0 %v965
    %1258 = vmatpush.bf16.msra.mxu0 %v961
    %1259 = vmatpush.bf16.msra.mxu0 %v957
    %1260 = vmatpush.bf16.msra.mxu0 %v953
    %1261 = vmatpush.bf16.msra.mxu0 %v949
    %1262 = vmatpush.bf16.msra.mxu0 %v945
    %1263 = vmatpush.bf16.msra.mxu0 %v941
    %1264 = vmatpush.bf16.msra.mxu0 %v937
    %1265 = vmatmul.bf16.gmra.mxu0 %v357
    %v1266 = vpop.f32.mrf.mxu0
    %v1267 = vadd.f32 %v1254, %v1266
    %v1268 = vpop.f32.mrf.mxu0
    %1269 = vdwg.mxu0
    %1270 = vmatpush.bf16.msra.mxu0 %v997
    %1271 = vmatpush.bf16.msra.mxu0 %v993
    %1272 = vmatpush.bf16.msra.mxu0 %v989
    %1273 = vmatpush.bf16.msra.mxu0 %v985
    %1274 = vmatpush.bf16.msra.mxu0 %v981
    %1275 = vmatpush.bf16.msra.mxu0 %v977
    %1276 = vmatpush.bf16.msra.mxu0 %v973
    %1277 = vmatpush.bf16.msra.mxu0 %v969
    %1278 = vmatmul.bf16.gmra.mxu0 %v358
    %v1279 = vpop.f32.mrf.mxu0
    %v1280 = vadd.f32 %v1267, %v1279
    %v1281 = vpop.f32.mrf.mxu0
    %1282 = vdwg.mxu0
    %1283 = vmatpush.bf16.msra.mxu0 %v902
    %1284 = vmatpush.bf16.msra.mxu0 %v898
    %1285 = vmatpush.bf16.msra.mxu0 %v894
    %1286 = vmatpush.bf16.msra.mxu0 %v890
    %1287 = vmatpush.bf16.msra.mxu0 %v886
    %1288 = vmatpush.bf16.msra.mxu0 %v882
    %1289 = vmatpush.bf16.msra.mxu0 %v878
    %1290 = vmatpush.bf16.msra.mxu0 %v874
    %1291 = vmatmul.bf16.gmra.mxu0 %v355
    %v1292 = vpop.f32.mrf.mxu0
    %v1293 = vadd.f32 0.0, %v1292
    %v1294 = vpop.f32.mrf.mxu0
    %1295 = vdwg.mxu0
    %1296 = vmatpush.bf16.msra.mxu0 %v934
    %1297 = vmatpush.bf16.msra.mxu0 %v930
    %1298 = vmatpush.bf16.msra.mxu0 %v926
    %1299 = vmatpush.bf16.msra.mxu0 %v922
    %1300 = vmatpush.bf16.msra.mxu0 %v918
    %1301 = vmatpush.bf16.msra.mxu0 %v914
    %1302 = vmatpush.bf16.msra.mxu0 %v910
    %1303 = vmatpush.bf16.msra.mxu0 %v906
    %1304 = vmatmul.bf16.gmra.mxu0 %v356
    %v1305 = vpop.f32.mrf.mxu0
    %v1306 = vadd.f32 %v1293, %v1305
    %v1307 = vpop.f32.mrf.mxu0
    %1308 = vdwg.mxu0
    %1309 = vmatpush.bf16.msra.mxu0 %v966
    %1310 = vmatpush.bf16.msra.mxu0 %v962
    %1311 = vmatpush.bf16.msra.mxu0 %v958
    %1312 = vmatpush.bf16.msra.mxu0 %v954
    %1313 = vmatpush.bf16.msra.mxu0 %v950
    %1314 = vmatpush.bf16.msra.mxu0 %v946
    %1315 = vmatpush.bf16.msra.mxu0 %v942
    %1316 = vmatpush.bf16.msra.mxu0 %v938
    %1317 = vmatmul.bf16.gmra.mxu0 %v357
    %v1318 = vpop.f32.mrf.mxu0
    %v1319 = vadd.f32 %v1306, %v1318
    %v1320 = vpop.f32.mrf.mxu0
    %1321 = vdwg.mxu0
    %1322 = vmatpush.bf16.msra.mxu0 %v998
    %1323 = vmatpush.bf16.msra.mxu0 %v994
    %1324 = vmatpush.bf16.msra.mxu0 %v990
    %1325 = vmatpush.bf16.msra.mxu0 %v986
    %1326 = vmatpush.bf16.msra.mxu0 %v982
    %1327 = vmatpush.bf16.msra.mxu0 %v978
    %1328 = vmatpush.bf16.msra.mxu0 %v974
    %1329 = vmatpush.bf16.msra.mxu0 %v970
    %1330 = vmatmul.bf16.gmra.mxu0 %v358
    %v1331 = vpop.f32.mrf.mxu0
    %v1332 = vadd.f32 %v1319, %v1331
    %v1333 = vpop.f32.mrf.mxu0
    %1334 = vdwg.mxu0
    %v1335 = vpack.c.bf16 %v1228, %v1176
    %v1336 = vpack.c.bf16 %v1332, %v1280
    %v1337 = vld [vmem:[%s8] sm:$0xf]
    %1339 = vst [vmem:[#allocation1] ss:$9 sm:$0xff] %v1337
    %v1340 = vld [vmem:[#allocation1] sm:$0xff]
    %v1341 = vld [vmem:[#allocation1 + $0x9] sm:$0xff]
    %v1342 = vld [vmem:[#allocation1 + $0x12] sm:$0xff]
    %v1343 = vld [vmem:[#allocation1 + $0x1b] sm:$0xff]
    %v1344 = vpack.i.b16 %v1340, %v1340
    %v1346 = vperm.slane %v1344, 0
    %v1347 = vpack.i.b16 %v1341, %v1341
    %v1349 = vperm.slane %v1347, 0
    %v1350 = vpack.i.b16 %v1342, %v1342
    %v1352 = vperm.slane %v1350, 0
    %v1353 = vpack.i.b16 %v1343, %v1343
    %v1355 = vperm.slane %v1353, 0
    %v1356 = vunpack.c.l.bf16 %v1335
    %v1357 = vunpack.c.h.bf16 %v1335
    %v1358 = vunpack.c.l.bf16 %v1336
    %v1359 = vunpack.c.h.bf16 %v1336
    %v1360 = vunpack.c.l.bf16 %v1346
    %v1361 = vunpack.c.l.bf16 %v1349
    %v1362 = vunpack.c.l.bf16 %v1352
    %v1363 = vunpack.c.l.bf16 %v1355
    %v1364 = vadd.f32 %v1356, %v1360
    %v1365 = vadd.f32 %v1357, %v1361
    %v1366 = vadd.f32 %v1358, %v1362
    %v1367 = vadd.f32 %v1359, %v1363
    %v1368 = vpack.c.bf16 %v1365, %v1364
    %v1369 = vpack.c.bf16 %v1367, %v1366
    %v1370 = vunpack.c.l.bf16 %v1368
    %v1371 = vunpack.c.h.bf16 %v1368
    %v1372 = vunpack.c.l.bf16 %v1369
    %v1373 = vunpack.c.h.bf16 %v1369
    %v1374 = vmax.f32 %v1370, 0.0
    %v1375 = vmax.f32 %v1371, 0.0
    %v1376 = vmax.f32 %v1372, 0.0
    %v1377 = vmax.f32 %v1373, 0.0
    %v1378 = vpack.c.bf16 %v1374, %v1374
    %v1379 = vpack.c.bf16 %v1375, %v1375
    %v1380 = vpack.c.bf16 %v1376, %v1376
    %v1381 = vpack.c.bf16 %v1377, %v1377
    %v1382 = vld [vmem:[%s9] sm:$0xf]
    %v1383 = vld [vmem:[%s9 + $0x4] sm:$0xf]
    %v1384 = vld [vmem:[%s9 + $0x8] sm:$0xf]
    %v1385 = vld [vmem:[%s9 + $0xc] sm:$0xf]
    %v1386 = vld [vmem:[%s9 + $0x10] sm:$0xf]
    %v1387 = vld [vmem:[%s9 + $0x14] sm:$0xf]
    %v1388 = vld [vmem:[%s9 + $0x18] sm:$0xf]
    %v1389 = vld [vmem:[%s9 + $0x1c] sm:$0xf]
    %v1390 = vld [vmem:[%s9 + $0x20] sm:$0xf]
    %v1391 = vld [vmem:[%s9 + $0x24] sm:$0xf]
    %v1392 = vld [vmem:[%s9 + $0x28] sm:$0xf]
    %v1393 = vld [vmem:[%s9 + $0x2c] sm:$0xf]
    %v1394 = vld [vmem:[%s9 + $0x30] sm:$0xf]
    %v1395 = vld [vmem:[%s9 + $0x34] sm:$0xf]
    %v1396 = vld [vmem:[%s9 + $0x38] sm:$0xf]
    %v1397 = vld [vmem:[%s9 + $0x3c] sm:$0xf]
    %v1398 = vld [vmem:[%s9 + $0x40] sm:$0xf]
    %v1399 = vld [vmem:[%s9 + $0x44] sm:$0xf]
    %v1400 = vld [vmem:[%s9 + $0x48] sm:$0xf]
    %v1401 = vld [vmem:[%s9 + $0x4c] sm:$0xf]
    %v1402 = vld [vmem:[%s9 + $0x50] sm:$0xf]
    %v1403 = vld [vmem:[%s9 + $0x54] sm:$0xf]
    %v1404 = vld [vmem:[%s9 + $0x58] sm:$0xf]
    %v1405 = vld [vmem:[%s9 + $0x5c] sm:$0xf]
    %v1406 = vld [vmem:[%s9 + $0x60] sm:$0xf]
    %v1407 = vld [vmem:[%s9 + $0x64] sm:$0xf]
    %v1408 = vld [vmem:[%s9 + $0x68] sm:$0xf]
    %v1409 = vld [vmem:[%s9 + $0x6c] sm:$0xf]
    %v1410 = vld [vmem:[%s9 + $0x70] sm:$0xf]
    %v1411 = vld [vmem:[%s9 + $0x74] sm:$0xf]
    %v1412 = vld [vmem:[%s9 + $0x78] sm:$0xf]
    %v1413 = vld [vmem:[%s9 + $0x7c] sm:$0xf]
    %v1414 = vld [vmem:[%s9 + $0x80] sm:$0xf]
    %v1415 = vld [vmem:[%s9 + $0x84] sm:$0xf]
    %v1416 = vld [vmem:[%s9 + $0x88] sm:$0xf]
    %v1417 = vld [vmem:[%s9 + $0x8c] sm:$0xf]
    %v1418 = vld [vmem:[%s9 + $0x90] sm:$0xf]
    %v1419 = vld [vmem:[%s9 + $0x94] sm:$0xf]
    %v1420 = vld [vmem:[%s9 + $0x98] sm:$0xf]
    %v1421 = vld [vmem:[%s9 + $0x9c] sm:$0xf]
    %v1422 = vld [vmem:[%s9 + $0xa0] sm:$0xf]
    %v1423 = vld [vmem:[%s9 + $0xa4] sm:$0xf]
    %v1424 = vld [vmem:[%s9 + $0xa8] sm:$0xf]
    %v1425 = vld [vmem:[%s9 + $0xac] sm:$0xf]
    %v1426 = vld [vmem:[%s9 + $0xb0] sm:$0xf]
    %v1427 = vld [vmem:[%s9 + $0xb4] sm:$0xf]
    %v1428 = vld [vmem:[%s9 + $0xb8] sm:$0xf]
    %v1429 = vld [vmem:[%s9 + $0xbc] sm:$0xf]
    %v1430 = vld [vmem:[%s9 + $0xc0] sm:$0xf]
    %v1431 = vld [vmem:[%s9 + $0xc4] sm:$0xf]
    %v1432 = vld [vmem:[%s9 + $0xc8] sm:$0xf]
    %v1433 = vld [vmem:[%s9 + $0xcc] sm:$0xf]
    %v1434 = vld [vmem:[%s9 + $0xd0] sm:$0xf]
    %v1435 = vld [vmem:[%s9 + $0xd4] sm:$0xf]
    %v1436 = vld [vmem:[%s9 + $0xd8] sm:$0xf]
    %v1437 = vld [vmem:[%s9 + $0xdc] sm:$0xf]
    %v1438 = vld [vmem:[%s9 + $0xe0] sm:$0xf]
    %v1439 = vld [vmem:[%s9 + $0xe4] sm:$0xf]
    %v1440 = vld [vmem:[%s9 + $0xe8] sm:$0xf]
    %v1441 = vld [vmem:[%s9 + $0xec] sm:$0xf]
    %v1442 = vld [vmem:[%s9 + $0xf0] sm:$0xf]
    %v1443 = vld [vmem:[%s9 + $0xf4] sm:$0xf]
    %v1444 = vld [vmem:[%s9 + $0xf8] sm:$0xf]
    %v1445 = vld [vmem:[%s9 + $0xfc] sm:$0xf]
    %v1510 = vunpack.c.l.b16 %v1382
    %v1511 = vunpack.c.l.b16 %v1383
    %v1512 = vunpack.c.l.b16 %v1384
    %v1513 = vunpack.c.l.b16 %v1385
    %v1514 = vunpack.c.l.b16 %v1386
    %v1515 = vunpack.c.l.b16 %v1387
    %v1516 = vunpack.c.l.b16 %v1388
    %v1517 = vunpack.c.l.b16 %v1389
    %v1518 = vunpack.c.l.b16 %v1390
    %v1519 = vunpack.c.l.b16 %v1391
    %v1520 = vunpack.c.l.b16 %v1392
    %v1521 = vunpack.c.l.b16 %v1393
    %v1522 = vunpack.c.l.b16 %v1394
    %v1523 = vunpack.c.l.b16 %v1395
    %v1524 = vunpack.c.l.b16 %v1396
    %v1525 = vunpack.c.l.b16 %v1397
    %v1526 = vunpack.c.l.b16 %v1398
    %v1527 = vunpack.c.l.b16 %v1399
    %v1528 = vunpack.c.l.b16 %v1400
    %v1529 = vunpack.c.l.b16 %v1401
    %v1530 = vunpack.c.l.b16 %v1402
    %v1531 = vunpack.c.l.b16 %v1403
    %v1532 = vunpack.c.l.b16 %v1404
    %v1533 = vunpack.c.l.b16 %v1405
    %v1534 = vunpack.c.l.b16 %v1406
    %v1535 = vunpack.c.l.b16 %v1407
    %v1536 = vunpack.c.l.b16 %v1408
    %v1537 = vunpack.c.l.b16 %v1409
    %v1538 = vunpack.c.l.b16 %v1410
    %v1539 = vunpack.c.l.b16 %v1411
    %v1540 = vunpack.c.l.b16 %v1412
    %v1541 = vunpack.c.l.b16 %v1413
    %v1542 = vunpack.c.l.b16 %v1414
    %v1543 = vunpack.c.l.b16 %v1415
    %v1544 = vunpack.c.l.b16 %v1416
    %v1545 = vunpack.c.l.b16 %v1417
    %v1546 = vunpack.c.l.b16 %v1418
    %v1547 = vunpack.c.l.b16 %v1419
    %v1548 = vunpack.c.l.b16 %v1420
    %v1549 = vunpack.c.l.b16 %v1421
    %v1550 = vunpack.c.l.b16 %v1422
    %v1551 = vunpack.c.l.b16 %v1423
    %v1552 = vunpack.c.l.b16 %v1424
    %v1553 = vunpack.c.l.b16 %v1425
    %v1554 = vunpack.c.l.b16 %v1426
    %v1555 = vunpack.c.l.b16 %v1427
    %v1556 = vunpack.c.l.b16 %v1428
    %v1557 = vunpack.c.l.b16 %v1429
    %v1558 = vunpack.c.l.b16 %v1430
    %v1559 = vunpack.c.l.b16 %v1431
    %v1560 = vunpack.c.l.b16 %v1432
    %v1561 = vunpack.c.l.b16 %v1433
    %v1562 = vunpack.c.l.b16 %v1434
    %v1563 = vunpack.c.l.b16 %v1435
    %v1564 = vunpack.c.l.b16 %v1436
    %v1565 = vunpack.c.l.b16 %v1437
    %v1566 = vunpack.c.l.b16 %v1438
    %v1567 = vunpack.c.l.b16 %v1439
    %v1568 = vunpack.c.l.b16 %v1440
    %v1569 = vunpack.c.l.b16 %v1441
    %v1570 = vunpack.c.l.b16 %v1442
    %v1571 = vunpack.c.l.b16 %v1443
    %v1572 = vunpack.c.l.b16 %v1444
    %v1573 = vunpack.c.l.b16 %v1445
    %v1574 = vpack.c.b16 %v1511, %v1510
    %v1575 = vpack.c.b16 %v1513, %v1512
    %v1576 = vpack.c.b16 %v1515, %v1514
    %v1577 = vpack.c.b16 %v1517, %v1516
    %v1578 = vpack.c.b16 %v1519, %v1518
    %v1579 = vpack.c.b16 %v1521, %v1520
    %v1580 = vpack.c.b16 %v1523, %v1522
    %v1581 = vpack.c.b16 %v1525, %v1524
    %v1582 = vpack.c.b16 %v1527, %v1526
    %v1583 = vpack.c.b16 %v1529, %v1528
    %v1584 = vpack.c.b16 %v1531, %v1530
    %v1585 = vpack.c.b16 %v1533, %v1532
    %v1586 = vpack.c.b16 %v1535, %v1534
    %v1587 = vpack.c.b16 %v1537, %v1536
    %v1588 = vpack.c.b16 %v1539, %v1538
    %v1589 = vpack.c.b16 %v1541, %v1540
    %v1590 = vpack.c.b16 %v1543, %v1542
    %v1591 = vpack.c.b16 %v1545, %v1544
    %v1592 = vpack.c.b16 %v1547, %v1546
    %v1593 = vpack.c.b16 %v1549, %v1548
    %v1594 = vpack.c.b16 %v1551, %v1550
    %v1595 = vpack.c.b16 %v1553, %v1552
    %v1596 = vpack.c.b16 %v1555, %v1554
    %v1597 = vpack.c.b16 %v1557, %v1556
    %v1598 = vpack.c.b16 %v1559, %v1558
    %v1599 = vpack.c.b16 %v1561, %v1560
    %v1600 = vpack.c.b16 %v1563, %v1562
    %v1601 = vpack.c.b16 %v1565, %v1564
    %v1602 = vpack.c.b16 %v1567, %v1566
    %v1603 = vpack.c.b16 %v1569, %v1568
    %v1604 = vpack.c.b16 %v1571, %v1570
    %v1605 = vpack.c.b16 %v1573, %v1572
    %1638 = vmatpush.bf16.msra.mxu0 %v1581
    %1639 = vmatpush.bf16.msra.mxu0 %v1580
    %1640 = vmatpush.bf16.msra.mxu0 %v1579
    %1641 = vmatpush.bf16.msra.mxu0 %v1578
    %1642 = vmatpush.bf16.msra.mxu0 %v1577
    %1643 = vmatpush.bf16.msra.mxu0 %v1576
    %1644 = vmatpush.bf16.msra.mxu0 %v1575
    %1645 = vmatpush.bf16.msra.mxu0 %v1574
    %1646 = vmatmul.bf16.gmra.mxu0 %v1378
    %v1647 = vpop.f32.mrf.mxu0
    %v1648 = vadd.f32 0.0, %v1647
    %v1649 = vpop.f32.mrf.mxu0
    %1650 = vdwg.mxu0
    %1651 = vmatpush.bf16.msra.mxu0 %v1589
    %1652 = vmatpush.bf16.msra.mxu0 %v1588
    %1653 = vmatpush.bf16.msra.mxu0 %v1587
    %1654 = vmatpush.bf16.msra.mxu0 %v1586
    %1655 = vmatpush.bf16.msra.mxu0 %v1585
    %1656 = vmatpush.bf16.msra.mxu0 %v1584
    %1657 = vmatpush.bf16.msra.mxu0 %v1583
    %1658 = vmatpush.bf16.msra.mxu0 %v1582
    %1659 = vmatmul.bf16.gmra.mxu0 %v1379
    %v1660 = vpop.f32.mrf.mxu0
    %v1661 = vadd.f32 %v1648, %v1660
    %v1662 = vpop.f32.mrf.mxu0
    %1663 = vdwg.mxu0
    %1664 = vmatpush.bf16.msra.mxu0 %v1597
    %1665 = vmatpush.bf16.msra.mxu0 %v1596
    %1666 = vmatpush.bf16.msra.mxu0 %v1595
    %1667 = vmatpush.bf16.msra.mxu0 %v1594
    %1668 = vmatpush.bf16.msra.mxu0 %v1593
    %1669 = vmatpush.bf16.msra.mxu0 %v1592
    %1670 = vmatpush.bf16.msra.mxu0 %v1591
    %1671 = vmatpush.bf16.msra.mxu0 %v1590
    %1672 = vmatmul.bf16.gmra.mxu0 %v1380
    %v1673 = vpop.f32.mrf.mxu0
    %v1674 = vadd.f32 %v1661, %v1673
    %v1675 = vpop.f32.mrf.mxu0
    %1676 = vdwg.mxu0
    %1677 = vmatpush.bf16.msra.mxu0 %v1605
    %1678 = vmatpush.bf16.msra.mxu0 %v1604
    %1679 = vmatpush.bf16.msra.mxu0 %v1603
    %1680 = vmatpush.bf16.msra.mxu0 %v1602
    %1681 = vmatpush.bf16.msra.mxu0 %v1601
    %1682 = vmatpush.bf16.msra.mxu0 %v1600
    %1683 = vmatpush.bf16.msra.mxu0 %v1599
    %1684 = vmatpush.bf16.msra.mxu0 %v1598
    %1685 = vmatmul.bf16.gmra.mxu0 %v1381
    %v1686 = vpop.f32.mrf.mxu0
    %v1687 = vadd.f32 %v1674, %v1686
    %v1688 = vpop.f32.mrf.mxu0
    %1689 = vdwg.mxu0
    %v1690 = vpack.c.bf16 %v1687, %v1687
    %v1691 = vld [vmem:[%s10] sm:$0x1]
    %v1693 = vpack.i.b16 %v1691, %v1691
    %v1695 = vperm.slane %v1693, 0
    %v1696 = vunpack.c.l.bf16 %v1690
    %v1697 = vunpack.c.l.bf16 %v1695
    %v1698 = vadd.f32 %v1696, %v1697
    %v1699 = vpack.c.bf16 %v1698, %v1698
    %v1700 = vunpack.c.l.bf16 %v1699
    %v1701 = vmax.f32 %v1700, 0.0
    %v1702 = vpack.c.bf16 %v1701, %v1701
    %v1703 = vld [vmem:[%s11] sm:$0xf]
    %v1704 = vld [vmem:[%s11 + $0x4] sm:$0xf]
    %v1705 = vld [vmem:[%s11 + $0x8] sm:$0xf]
    %v1706 = vld [vmem:[%s11 + $0xc] sm:$0xf]
    %v1707 = vld [vmem:[%s11 + $0x10] sm:$0xf]
    %v1708 = vld [vmem:[%s11 + $0x14] sm:$0xf]
    %v1709 = vld [vmem:[%s11 + $0x18] sm:$0xf]
    %v1710 = vld [vmem:[%s11 + $0x1c] sm:$0xf]
    %v1719 = vunpack.c.l.b16 %v1703
    %v1720 = vunpack.c.l.b16 %v1704
    %v1721 = vunpack.c.l.b16 %v1705
    %v1722 = vunpack.c.l.b16 %v1706
    %v1723 = vunpack.c.l.b16 %v1707
    %v1724 = vunpack.c.l.b16 %v1708
    %v1725 = vunpack.c.l.b16 %v1709
    %v1726 = vunpack.c.l.b16 %v1710
    %v1727 = vpack.c.b16 %v1720, %v1719
    %v1728 = vpack.c.b16 %v1722, %v1721
    %v1729 = vpack.c.b16 %v1724, %v1723
    %v1730 = vpack.c.b16 %v1726, %v1725
    %v1736 = vsel %vm131, %v1702, 0
    %1738 = vmatpush.bf16.msra.mxu0 0
    %1739 = vmatpush.bf16.msra.mxu0 0
    %1740 = vmatpush.bf16.msra.mxu0 0
    %1741 = vmatpush.bf16.msra.mxu0 0
    %1742 = vmatpush.bf16.msra.mxu0 %v1730
    %1743 = vmatpush.bf16.msra.mxu0 %v1729
    %1744 = vmatpush.bf16.msra.mxu0 %v1728
    %1745 = vmatpush.bf16.msra.mxu0 %v1727
    %1746 = vmatmul.bf16.gmra.mxu0 %v1736
    %v1747 = vpop.f32.mrf.mxu0
    %v1748 = vadd.f32 0.0, %v1747
    %v1749 = vpop.f32.mrf.mxu0
    %1750 = vdwg.mxu0
    %v1751 = vpack.c.bf16 %v1748, %v1748
    %v1752 = vld [vmem:[%s12] sm:$0x1]
    %v1754 = vpack.i.b16 %v1752, %v1752
    %v1756 = vperm.slane %v1754, 0
    %v1757 = vunpack.c.l.bf16 %v1751
    %v1758 = vunpack.c.l.bf16 %v1756
    %v1759 = vadd.f32 %v1757, %v1758
    %v1760 = vpack.c.bf16 %v1759, %v1759
    %1761 = vst [vmem:[#allocation5] sm:$0xf] %v1760
    // Predicated region
    $region58: #{tpu_custom_call.1} parent=1 // pred_check
      _
    $region59: #{tpu_custom_call.1} parent=1 // pred_check_branch
      %1763 = sbr.rel (0) target = $region61
    $region60: #{tpu_custom_call.1} parent=1 // pred_region
      %1765 = vsyncadd [#allocation4], 0
      %s1767 = sshll.u32 [#allocation5], 4
      %s1768 = int_to_ptr.vmem [resolvable:$true] %s1767
      %s1769 = sshll.u32 %s13, 4
      %s1770 = int_to_ptr.hbm [resolvable:$true] %s1769
      %1772 = dma.vmem_to_hbm [thread:$0]  %s1768, 64, %s1770, [#allocation4]
    $region61: #{tpu_custom_call.1} parent=1 // pred_fallthru
      _
    // Predicated region
    $region62: #{tpu_custom_call.1} parent=1 // pred_check
      _
    $region63: #{tpu_custom_call.1} parent=1 // pred_check_branch
      %1774 = sbr.rel (0) target = $region65
    $region64: #{tpu_custom_call.1} parent=1 // pred_region
      %1776 = dma.done [#allocation4], 64
    $region65: #{tpu_custom_call.1} parent=1 // pred_fallthru
      _
    %1777 = vsyncpa [#allocation3], 1
    %1778 = vsyncpa [#allocation4], 1

// kernel: tpu_custom_call.1
$region0: #{tpu_custom_call.1}
  #allocation0 [shape = 'u32[]', space=smem, size = 0x4, offset = 0x4, fixed_abs, tag = 'smem constant byte address 0x4 - core index']
  #allocation1 [shape = 'u32[72,128]{1,0:T(1,128)}', space=vmem, size = 0x9000, scoped, tag = 'internal scratch']
  %s0 = inlined_call_operand.vmem [shape: f32[8,8], index: 0, kind: input, shape index: {}]
  %s1 = inlined_call_operand.vmem [shape: bf16[8,64], index: 1, kind: input, shape index: {}]
  %s2 = inlined_call_operand.vmem [shape: bf16[1,64], index: 2, kind: input, shape index: {}]
  %s3 = inlined_call_operand.vmem [shape: bf16[64,64], index: 3, kind: input, shape index: {}]
  %s4 = inlined_call_operand.vmem [shape: bf16[1,64], index: 4, kind: input, shape index: {}]
  %s5 = inlined_call_operand.vmem [shape: bf16[64,512], index: 5, kind: input, shape index: {}]
  %s6 = inlined_call_operand.vmem [shape: bf16[1,512], index: 6, kind: input, shape index: {}]
  %s7 = inlined_call_operand.hbm [shape: bf16[512,512], index: 7, kind: input, shape index: {}]
  %s8 = inlined_call_operand.vmem [shape: bf16[1,512], index: 8, kind: input, shape index: {}]
  %s9 = inlined_call_operand.vmem [shape: bf16[512,64], index: 9, kind: input, shape index: {}]
  %s10 = inlined_call_operand.vmem [shape: bf16[1,64], index: 10, kind: input, shape index: {}]
  %s11 = inlined_call_operand.vmem [shape: bf16[64,128], index: 11, kind: input, shape index: {}]
  %s12 = inlined_call_operand.vmem [shape: bf16[1,128], index: 12, kind: input, shape index: {}]
  %s13 = inlined_call_operand.hbm [shape: bf16[8,128], index: 13, kind: output, shape index: {}]
  %s14 = sld [smem:[#allocation0]]
  $region66: #{tpu_custom_call.1} parent=0
    _
  %s16 = ssub.s32 1, %s14
  %s17 = scalar_select 0, %s16, %s14
  $region1: #{tpu_custom_call.1} parent=0
    #allocation2 [shape = 'u8[524288]{0}', space=vmem, size = 0x80000, scoped, tag = 'input window, operand 7, single buffered']
    #allocation3 [shape = 's32[1]{0}', space=sflag, size = 0x4, scoped, tag = 'scoped memory for tpu_custom_call.1']
    #allocation4 [shape = 's32[1]{0}', space=sflag, size = 0x4, scoped, tag = 'scoped memory for tpu_custom_call.1']
    #allocation5 [shape = 'u8[2048]{0}', space=vmem, size = 0x800, scoped, tag = 'output window, operand 0, single buffered']
    %18 = vsyncpa [#allocation3], 0
    %19 = vsyncpa [#allocation4], 0
    // Predicated region
    $region2: #{tpu_custom_call.1} parent=1 // pred_check
      _
    $region3: #{tpu_custom_call.1} parent=1 // pred_check_branch
      %21 = sbr.rel (0) target = $region5
    $region4: #{tpu_custom_call.1} parent=1 // pred_region
      _
    $region5: #{tpu_custom_call.1} parent=1 // pred_fallthru
      _
    // Predicated region
    $region6: #{tpu_custom_call.1} parent=1 // pred_check
      _
    $region7: #{tpu_custom_call.1} parent=1 // pred_check_branch
      %23 = sbr.rel (0) target = $region9
    $region8: #{tpu_custom_call.1} parent=1 // pred_region
      _
    $region9: #{tpu_custom_call.1} parent=1 // pred_fallthru
      _
    // Predicated region
    $region10: #{tpu_custom_call.1} parent=1 // pred_check
      _
    $region11: #{tpu_custom_call.1} parent=1 // pred_check_branch
      %25 = sbr.rel (0) target = $region13
    $region12: #{tpu_custom_call.1} parent=1 // pred_region
      _
    $region13: #{tpu_custom_call.1} parent=1 // pred_fallthru
      _
    // Predicated region
    $region14: #{tpu_custom_call.1} parent=1 // pred_check
      _
    $region15: #{tpu_custom_call.1} parent=1 // pred_check_branch
      %27 = sbr.rel (0) target = $region17
    $region16: #{tpu_custom_call.1} parent=1 // pred_region
      _
    $region17: #{tpu_custom_call.1} parent=1 // pred_fallthru
      _
    // Predicated region
    $region18: #{tpu_custom_call.1} parent=1 // pred_check
      _
    $region19: #{tpu_custom_call.1} parent=1 // pred_check_branch
      %29 = sbr.rel (0) target = $region21
    $region20: #{tpu_custom_call.1} parent=1 // pred_region
      _
    $region21: #{tpu_custom_call.1} parent=1 // pred_fallthru
      _
    // Predicated region
    $region22: #{tpu_custom_call.1} parent=1 // pred_check
      _
    $region23: #{tpu_custom_call.1} parent=1 // pred_check_branch
      %31 = sbr.rel (0) target = $region25
    $region24: #{tpu_custom_call.1} parent=1 // pred_region
      _
    $region25: #{tpu_custom_call.1} parent=1 // pred_fallthru
      _
    // Predicated region
    $region26: #{tpu_custom_call.1} parent=1 // pred_check
      _
    $region27: #{tpu_custom_call.1} parent=1 // pred_check_branch
      %33 = sbr.rel (0) target = $region29
    $region28: #{tpu_custom_call.1} parent=1 // pred_region
      _
    $region29: #{tpu_custom_call.1} parent=1 // pred_fallthru
      _
    // Predicated region
    $region30: #{tpu_custom_call.1} parent=1 // pred_check
      _
    $region31: #{tpu_custom_call.1} parent=1 // pred_check_branch
      %35 = sbr.rel (0) target = $region33
    $region32: #{tpu_custom_call.1} parent=1 // pred_region
      %37 = vsyncadd [#allocation3], 0
      %s38 = sshll.u32 %s7, 4
      %s39 = int_to_ptr.hbm [resolvable:$true] %s38
      %s40 = sshll.u32 [#allocation2], 4
      %s41 = int_to_ptr.vmem [resolvable:$true] %s40
      %46 = dma.hbm_to_vmem [thread:$0]  %s39, 16384, %s41, [#allocation3], 256, 256, 16
    $region33: #{tpu_custom_call.1} parent=1 // pred_fallthru
      _
    // Predicated region
    $region34: #{tpu_custom_call.1} parent=1 // pred_check
      _
    $region35: #{tpu_custom_call.1} parent=1 // pred_check_branch
      %48 = sbr.rel (0) target = $region37
    $region36: #{tpu_custom_call.1} parent=1 // pred_region
      _
    $region37: #{tpu_custom_call.1} parent=1 // pred_fallthru
      _
    // Predicated region
    $region38: #{tpu_custom_call.1} parent=1 // pred_check
      _
    $region39: #{tpu_custom_call.1} parent=1 // pred_check_branch
      %50 = sbr.rel (0) target = $region41
    $region40: #{tpu_custom_call.1} parent=1 // pred_region
      _
    $region41: #{tpu_custom_call.1} parent=1 // pred_fallthru
      _
    // Predicated region
    $region42: #{tpu_custom_call.1} parent=1 // pred_check
      _
    $region43: #{tpu_custom_call.1} parent=1 // pred_check_branch
      %52 = sbr.rel (0) target = $region45
    $region44: #{tpu_custom_call.1} parent=1 // pred_region
      _
    $region45: #{tpu_custom_call.1} parent=1 // pred_fallthru
      _
    // Predicated region
    $region46: #{tpu_custom_call.1} parent=1 // pred_check
      _
    $region47: #{tpu_custom_call.1} parent=1 // pred_check_branch
      %54 = sbr.rel (0) target = $region49
    $region48: #{tpu_custom_call.1} parent=1 // pred_region
      _
    $region49: #{tpu_custom_call.1} parent=1 // pred_fallthru
      _
    // Predicated region
    $region50: #{tpu_custom_call.1} parent=1 // pred_check
      _
    $region51: #{tpu_custom_call.1} parent=1 // pred_check_branch
      %56 = sbr.rel (0) target = $region53
    $region52: #{tpu_custom_call.1} parent=1 // pred_region
      _
    $region53: #{tpu_custom_call.1} parent=1 // pred_fallthru
      _
    // Predicated region
    $region54: #{tpu_custom_call.1} parent=1 // pred_check
      _
    $region55: #{tpu_custom_call.1} parent=1 // pred_check_branch
      %58 = sbr.rel (0) target = $region57
    $region56: #{tpu_custom_call.1} parent=1 // pred_region
      %60 = dma.done [#allocation3], 16384
    $region57: #{tpu_custom_call.1} parent=1 // pred_fallthru
      _
    %v62 = vld [vmem:[%s0] sm:$0xff]
    %v63 = vpack.c.bf16 %v62, %v62
    %v64 = vld [vmem:[%s1] sm:$0xf]
    %vm65 = vcmask 64512
    %v67 = vsel %vm65, %v63, 0
    %vm69 = vcmask 1043456
    %v71 = vsel %vm69, %v64, 0
    %73 = vmatpush.bf16.msra.mxu0 0
    %74 = vmatpush.bf16.msra.mxu0 0
    %75 = vmatpush.bf16.msra.mxu0 0
    %76 = vmatpush.bf16.msra.mxu0 0
    %77 = vmatpush.bf16.msra.mxu0 0
    %78 = vmatpush.bf16.msra.mxu0 0
    %79 = vmatpush.bf16.msra.mxu0 0
    %80 = vmatpush.bf16.msra.mxu0 %v71
    %81 = vmatmul.bf16.gmra.mxu0 %v67
    %v82 = vpop.f32.mrf.mxu0
    %v83 = vadd.f32 0.0, %v82
    %v84 = vpop.f32.mrf.mxu0
    %85 = vdwg.mxu0
    %v86 = vpack.c.bf16 %v83, %v83
    %v87 = vld [vmem:[%s2] sm:$0x1]
    %v89 = vpack.i.b16 %v87, %v87
    %v91 = vperm.slane %v89, 0
    %v92 = vunpack.c.l.bf16 %v86
    %v93 = vunpack.c.l.bf16 %v91
    %v94 = vadd.f32 %v92, %v93
    %v95 = vpack.c.bf16 %v94, %v94
    %v96 = vunpack.c.l.bf16 %v95
    %v97 = vmax.f32 %v96, 0.0
    %v98 = vpack.c.bf16 %v97, %v97
    %v99 = vld [vmem:[%s3] sm:$0xf]
    %v100 = vld [vmem:[%s3 + $0x4] sm:$0xf]
    %v101 = vld [vmem:[%s3 + $0x8] sm:$0xf]
    %v102 = vld [vmem:[%s3 + $0xc] sm:$0xf]
    %v103 = vld [vmem:[%s3 + $0x10] sm:$0xf]
    %v104 = vld [vmem:[%s3 + $0x14] sm:$0xf]
    %v105 = vld [vmem:[%s3 + $0x18] sm:$0xf]
    %v106 = vld [vmem:[%s3 + $0x1c] sm:$0xf]
    %v115 = vunpack.c.l.b16 %v99
    %v116 = vunpack.c.l.b16 %v100
    %v117 = vunpack.c.l.b16 %v101
    %v118 = vunpack.c.l.b16 %v102
    %v119 = vunpack.c.l.b16 %v103
    %v120 = vunpack.c.l.b16 %v104
    %v121 = vunpack.c.l.b16 %v105
    %v122 = vunpack.c.l.b16 %v106
    %v123 = vpack.c.b16 %v116, %v115
    %v124 = vpack.c.b16 %v118, %v117
    %v125 = vpack.c.b16 %v120, %v119
    %v126 = vpack.c.b16 %v122, %v121
    %vm131 = vcmask 523264
    %v133 = vsel %vm131, %v98, 0
    %135 = vmatpush.bf16.msra.mxu0 0
    %136 = vmatpush.bf16.msra.mxu0 0
    %137 = vmatpush.bf16.msra.mxu0 0
    %138 = vmatpush.bf16.msra.mxu0 0
    %139 = vmatpush.bf16.msra.mxu0 %v126
    %140 = vmatpush.bf16.msra.mxu0 %v125
    %141 = vmatpush.bf16.msra.mxu0 %v124
    %142 = vmatpush.bf16.msra.mxu0 %v123
    %143 = vmatmul.bf16.gmra.mxu0 %v133
    %v144 = vpop.f32.mrf.mxu0
    %v145 = vadd.f32 0.0, %v144
    %v146 = vpop.f32.mrf.mxu0
    %147 = vdwg.mxu0
    %v148 = vpack.c.bf16 %v145, %v145
    %v149 = vld [vmem:[%s4] sm:$0x1]
    %v151 = vpack.i.b16 %v149, %v149
    %v153 = vperm.slane %v151, 0
    %v154 = vunpack.c.l.bf16 %v148
    %v155 = vunpack.c.l.bf16 %v153
    %v156 = vadd.f32 %v154, %v155
    %v157 = vpack.c.bf16 %v156, %v156
    %v158 = vunpack.c.l.bf16 %v157
    %v159 = vmax.f32 %v158, 0.0
    %v160 = vpack.c.bf16 %v159, %v159
    %v161 = vld [vmem:[%s5] sm:$0xff]
    %v162 = vld [vmem:[%s5 + $0x8] sm:$0xff]
    %v163 = vld [vmem:[%s5 + $0x10] sm:$0xff]
    %v164 = vld [vmem:[%s5 + $0x18] sm:$0xff]
    %v165 = vld [vmem:[%s5 + $0x20] sm:$0xff]
    %v166 = vld [vmem:[%s5 + $0x28] sm:$0xff]
    %v167 = vld [vmem:[%s5 + $0x30] sm:$0xff]
    %v168 = vld [vmem:[%s5 + $0x38] sm:$0xff]
    %v169 = vld [vmem:[%s5 + $0x40] sm:$0xff]
    %v170 = vld [vmem:[%s5 + $0x48] sm:$0xff]
    %v171 = vld [vmem:[%s5 + $0x50] sm:$0xff]
    %v172 = vld [vmem:[%s5 + $0x58] sm:$0xff]
    %v173 = vld [vmem:[%s5 + $0x60] sm:$0xff]
    %v174 = vld [vmem:[%s5 + $0x68] sm:$0xff]
    %v175 = vld [vmem:[%s5 + $0x70] sm:$0xff]
    %v176 = vld [vmem:[%s5 + $0x78] sm:$0xff]
    %v193 = vunpack.c.l.b16 %v161
    %v194 = vunpack.c.h.b16 %v161
    %v195 = vunpack.c.l.b16 %v162
    %v196 = vunpack.c.h.b16 %v162
    %v197 = vunpack.c.l.b16 %v163
    %v198 = vunpack.c.h.b16 %v163
    %v199 = vunpack.c.l.b16 %v164
    %v200 = vunpack.c.h.b16 %v164
    %v201 = vunpack.c.l.b16 %v165
    %v202 = vunpack.c.h.b16 %v165
    %v203 = vunpack.c.l.b16 %v166
    %v204 = vunpack.c.h.b16 %v166
    %v205 = vunpack.c.l.b16 %v167
    %v206 = vunpack.c.h.b16 %v167
    %v207 = vunpack.c.l.b16 %v168
    %v208 = vunpack.c.h.b16 %v168
    %v209 = vunpack.c.l.b16 %v169
    %v210 = vunpack.c.h.b16 %v169
    %v211 = vunpack.c.l.b16 %v170
    %v212 = vunpack.c.h.b16 %v170
    %v213 = vunpack.c.l.b16 %v171
    %v214 = vunpack.c.h.b16 %v171
    %v215 = vunpack.c.l.b16 %v172
    %v216 = vunpack.c.h.b16 %v172
    %v217 = vunpack.c.l.b16 %v173
    %v218 = vunpack.c.h.b16 %v173
    %v219 = vunpack.c.l.b16 %v174
    %v220 = vunpack.c.h.b16 %v174
    %v221 = vunpack.c.l.b16 %v175
    %v222 = vunpack.c.h.b16 %v175
    %v223 = vunpack.c.l.b16 %v176
    %v224 = vunpack.c.h.b16 %v176
    %v225 = vpack.c.b16 %v197, %v193
    %v226 = vpack.c.b16 %v198, %v194
    %v227 = vpack.c.b16 %v199, %v195
    %v228 = vpack.c.b16 %v200, %v196
    %v229 = vpack.c.b16 %v205, %v201
    %v230 = vpack.c.b16 %v206, %v202
    %v231 = vpack.c.b16 %v207, %v203
    %v232 = vpack.c.b16 %v208, %v204
    %v233 = vpack.c.b16 %v213, %v209
    %v234 = vpack.c.b16 %v214, %v210
    %v235 = vpack.c.b16 %v215, %v211
    %v236 = vpack.c.b16 %v216, %v212
    %v237 = vpack.c.b16 %v221, %v217
    %v238 = vpack.c.b16 %v222, %v218
    %v239 = vpack.c.b16 %v223, %v219
    %v240 = vpack.c.b16 %v224, %v220
    %v258 = vsel %vm131, %v160, 0
    %260 = vmatpush.bf16.msra.mxu0 0
    %261 = vmatpush.bf16.msra.mxu0 0
    %262 = vmatpush.bf16.msra.mxu0 0
    %263 = vmatpush.bf16.msra.mxu0 0
    %264 = vmatpush.bf16.msra.mxu0 %v237
    %265 = vmatpush.bf16.msra.mxu0 %v233
    %266 = vmatpush.bf16.msra.mxu0 %v229
    %267 = vmatpush.bf16.msra.mxu0 %v225
    %268 = vmatmul.bf16.gmra.mxu0 %v258
    %v269 = vpop.f32.mrf.mxu0
    %v270 = vadd.f32 0.0, %v269
    %v271 = vpop.f32.mrf.mxu0
    %272 = vdwg.mxu0
    %273 = vmatpush.bf16.msra.mxu0 0
    %274 = vmatpush.bf16.msra.mxu0 0
    %275 = vmatpush.bf16.msra.mxu0 0
    %276 = vmatpush.bf16.msra.mxu0 0
    %277 = vmatpush.bf16.msra.mxu0 %v238
    %278 = vmatpush.bf16.msra.mxu0 %v234
    %279 = vmatpush.bf16.msra.mxu0 %v230
    %280 = vmatpush.bf16.msra.mxu0 %v226
    %281 = vmatmul.bf16.gmra.mxu0 %v258
    %v282 = vpop.f32.mrf.mxu0
    %v283 = vadd.f32 0.0, %v282
    %v284 = vpop.f32.mrf.mxu0
    %285 = vdwg.mxu0
    %286 = vmatpush.bf16.msra.mxu0 0
    %287 = vmatpush.bf16.msra.mxu0 0
    %288 = vmatpush.bf16.msra.mxu0 0
    %289 = vmatpush.bf16.msra.mxu0 0
    %290 = vmatpush.bf16.msra.mxu0 %v239
    %291 = vmatpush.bf16.msra.mxu0 %v235
    %292 = vmatpush.bf16.msra.mxu0 %v231
    %293 = vmatpush.bf16.msra.mxu0 %v227
    %294 = vmatmul.bf16.gmra.mxu0 %v258
    %v295 = vpop.f32.mrf.mxu0
    %v296 = vadd.f32 0.0, %v295
    %v297 = vpop.f32.mrf.mxu0
    %298 = vdwg.mxu0
    %299 = vmatpush.bf16.msra.mxu0 0
    %300 = vmatpush.bf16.msra.mxu0 0
    %301 = vmatpush.bf16.msra.mxu0 0
    %302 = vmatpush.bf16.msra.mxu0 0
    %303 = vmatpush.bf16.msra.mxu0 %v240
    %304 = vmatpush.bf16.msra.mxu0 %v236
    %305 = vmatpush.bf16.msra.mxu0 %v232
    %306 = vmatpush.bf16.msra.mxu0 %v228
    %307 = vmatmul.bf16.gmra.mxu0 %v258
    %v308 = vpop.f32.mrf.mxu0
    %v309 = vadd.f32 0.0, %v308
    %v310 = vpop.f32.mrf.mxu0
    %311 = vdwg.mxu0
    %v312 = vpack.c.bf16 %v283, %v270
    %v313 = vpack.c.bf16 %v309, %v296
    %v314 = vld [vmem:[%s6] sm:$0xf]
    %316 = vst [vmem:[#allocation1] ss:$9 sm:$0xff] %v314
    %v317 = vld [vmem:[#allocation1] sm:$0xff]
    %v318 = vld [vmem:[#allocation1 + $0x9] sm:$0xff]
    %v319 = vld [vmem:[#allocation1 + $0x12] sm:$0xff]
    %v320 = vld [vmem:[#allocation1 + $0x1b] sm:$0xff]
    %v321 = vpack.i.b16 %v317, %v317
    %v323 = vperm.slane %v321, 0
    %v324 = vpack.i.b16 %v318, %v318
    %v326 = vperm.slane %v324, 0
    %v327 = vpack.i.b16 %v319, %v319
    %v329 = vperm.slane %v327, 0
    %v330 = vpack.i.b16 %v320, %v320
    %v332 = vperm.slane %v330, 0
    %v333 = vunpack.c.l.bf16 %v312
    %v334 = vunpack.c.h.bf16 %v312
    %v335 = vunpack.c.l.bf16 %v313
    %v336 = vunpack.c.h.bf16 %v313
    %v337 = vunpack.c.l.bf16 %v323
    %v338 = vunpack.c.l.bf16 %v326
    %v339 = vunpack.c.l.bf16 %v329
    %v340 = vunpack.c.l.bf16 %v332
    %v341 = vadd.f32 %v333, %v337
    %v342 = vadd.f32 %v334, %v338
    %v343 = vadd.f32 %v335, %v339
    %v344 = vadd.f32 %v336, %v340
    %v345 = vpack.c.bf16 %v342, %v341
    %v346 = vpack.c.bf16 %v344, %v343
    %v347 = vunpack.c.l.bf16 %v345
    %v348 = vunpack.c.h.bf16 %v345
    %v349 = vunpack.c.l.bf16 %v346
    %v350 = vunpack.c.h.bf16 %v346
    %v351 = vmax.f32 %v347, 0.0
    %v352 = vmax.f32 %v348, 0.0
    %v353 = vmax.f32 %v349, 0.0
    %v354 = vmax.f32 %v350, 0.0
    %v355 = vpack.c.bf16 %v351, %v351
    %v356 = vpack.c.bf16 %v352, %v352
    %v357 = vpack.c.bf16 %v353, %v353
    %v358 = vpack.c.bf16 %v354, %v354
    %v359 = vld [vmem:[#allocation2] sm:$0xff]
    %v360 = vld [vmem:[#allocation2 + $0x8] sm:$0xff]
    %v361 = vld [vmem:[#allocation2 + $0x10] sm:$0xff]
    %v362 = vld [vmem:[#allocation2 + $0x18] sm:$0xff]
    %v363 = vld [vmem:[#allocation2 + $0x20] sm:$0xff]
    %v364 = vld [vmem:[#allocation2 + $0x28] sm:$0xff]
    %v365 = vld [vmem:[#allocation2 + $0x30] sm:$0xff]
    %v366 = vld [vmem:[#allocation2 + $0x38] sm:$0xff]
    %v367 = vld [vmem:[#allocation2 + $0x40] sm:$0xff]
    %v368 = vld [vmem:[#allocation2 + $0x48] sm:$0xff]
    %v369 = vld [vmem:[#allocation2 + $0x50] sm:$0xff]
    %v370 = vld [vmem:[#allocation2 + $0x58] sm:$0xff]
    %v371 = vld [vmem:[#allocation2 + $0x60] sm:$0xff]
    %v372 = vld [vmem:[#allocation2 + $0x68] sm:$0xff]
    %v373 = vld [vmem:[#allocation2 + $0x70] sm:$0xff]
    %v374 = vld [vmem:[#allocation2 + $0x78] sm:$0xff]
    %v375 = vld [vmem:[#allocation2 + $0x80] sm:$0xff]
    %v376 = vld [vmem:[#allocation2 + $0x88] sm:$0xff]
    %v377 = vld [vmem:[#allocation2 + $0x90] sm:$0xff]
    %v378 = vld [vmem:[#allocation2 + $0x98] sm:$0xff]
    %v379 = vld [vmem:[#allocation2 + $0xa0] sm:$0xff]
    %v380 = vld [vmem:[#allocation2 + $0xa8] sm:$0xff]
    %v381 = vld [vmem:[#allocation2 + $0xb0] sm:$0xff]
    %v382 = vld [vmem:[#allocation2 + $0xb8] sm:$0xff]
    %v383 = vld [vmem:[#allocation2 + $0xc0] sm:$0xff]
    %v384 = vld [vmem:[#allocation2 + $0xc8] sm:$0xff]
    %v385 = vld [vmem:[#allocation2 + $0xd0] sm:$0xff]
    %v386 = vld [vmem:[#allocation2 + $0xd8] sm:$0xff]
    %v387 = vld [vmem:[#allocation2 + $0xe0] sm:$0xff]
    %v388 = vld [vmem:[#allocation2 + $0xe8] sm:$0xff]
    %v389 = vld [vmem:[#allocation2 + $0xf0] sm:$0xff]
    %v390 = vld [vmem:[#allocation2 + $0xf8] sm:$0xff]
    %v391 = vld [vmem:[#allocation2 + $0x100] sm:$0xff]
    %v392 = vld [vmem:[#allocation2 + $0x108] sm:$0xff]
    %v393 = vld [vmem:[#allocation2 + $0x110] sm:$0xff]
    %v394 = vld [vmem:[#allocation2 + $0x118] sm:$0xff]
    %v395 = vld [vmem:[#allocation2 + $0x120] sm:$0xff]
    %v396 = vld [vmem:[#allocation2 + $0x128] sm:$0xff]
    %v397 = vld [vmem:[#allocation2 + $0x130] sm:$0xff]
    %v398 = vld [vmem:[#allocation2 + $0x138] sm:$0xff]
    %v399 = vld [vmem:[#allocation2 + $0x140] sm:$0xff]
    %v400 = vld [vmem:[#allocation2 + $0x148] sm:$0xff]
    %v401 = vld [vmem:[#allocation2 + $0x150] sm:$0xff]
    %v402 = vld [vmem:[#allocation2 + $0x158] sm:$0xff]
    %v403 = vld [vmem:[#allocation2 + $0x160] sm:$0xff]
    %v404 = vld [vmem:[#allocation2 + $0x168] sm:$0xff]
    %v405 = vld [vmem:[#allocation2 + $0x170] sm:$0xff]
    %v406 = vld [vmem:[#allocation2 + $0x178] sm:$0xff]
    %v407 = vld [vmem:[#allocation2 + $0x180] sm:$0xff]
    %v408 = vld [vmem:[#allocation2 + $0x188] sm:$0xff]
    %v409 = vld [vmem:[#allocation2 + $0x190] sm:$0xff]
    %v410 = vld [vmem:[#allocation2 + $0x198] sm:$0xff]
    %v411 = vld [vmem:[#allocation2 + $0x1a0] sm:$0xff]
    %v412 = vld [vmem:[#allocation2 + $0x1a8] sm:$0xff]
    %v413 = vld [vmem:[#allocation2 + $0x1b0] sm:$0xff]
    %v414 = vld [vmem:[#allocation2 + $0x1b8] sm:$0xff]
    %v415 = vld [vmem:[#allocation2 + $0x1c0] sm:$0xff]
    %v416 = vld [vmem:[#allocation2 + $0x1c8] sm:$0xff]
    %v417 = vld [vmem:[#allocation2 + $0x1d0] sm:$0xff]
    %v418 = vld [vmem:[#allocation2 + $0x1d8] sm:$0xff]
    %v419 = vld [vmem:[#allocation2 + $0x1e0] sm:$0xff]
    %v420 = vld [vmem:[#allocation2 + $0x1e8] sm:$0xff]
    %v421 = vld [vmem:[#allocation2 + $0x1f0] sm:$0xff]
    %v422 = vld [vmem:[#allocation2 + $0x1f8] sm:$0xff]
    %v423 = vld [vmem:[#allocation2 + $0x200] sm:$0xff]
    %v424 = vld [vmem:[#allocation2 + $0x208] sm:$0xff]
    %v425 = vld [vmem:[#allocation2 + $0x210] sm:$0xff]
    %v426 = vld [vmem:[#allocation2 + $0x218] sm:$0xff]
    %v427 = vld [vmem:[#allocation2 + $0x220] sm:$0xff]
    %v428 = vld [vmem:[#allocation2 + $0x228] sm:$0xff]
    %v429 = vld [vmem:[#allocation2 + $0x230] sm:$0xff]
    %v430 = vld [vmem:[#allocation2 + $0x238] sm:$0xff]
    %v431 = vld [vmem:[#allocation2 + $0x240] sm:$0xff]
    %v432 = vld [vmem:[#allocation2 + $0x248] sm:$0xff]
    %v433 = vld [vmem:[#allocation2 + $0x250] sm:$0xff]
    %v434 = vld [vmem:[#allocation2 + $0x258] sm:$0xff]
    %v435 = vld [vmem:[#allocation2 + $0x260] sm:$0xff]
    %v436 = vld [vmem:[#allocation2 + $0x268] sm:$0xff]
    %v437 = vld [vmem:[#allocation2 + $0x270] sm:$0xff]
    %v438 = vld [vmem:[#allocation2 + $0x278] sm:$0xff]
    %v439 = vld [vmem:[#allocation2 + $0x280] sm:$0xff]
    %v440 = vld [vmem:[#allocation2 + $0x288] sm:$0xff]
    %v441 = vld [vmem:[#allocation2 + $0x290] sm:$0xff]
    %v442 = vld [vmem:[#allocation2 + $0x298] sm:$0xff]
    %v443 = vld [vmem:[#allocation2 + $0x2a0] sm:$0xff]
    %v444 = vld [vmem:[#allocation2 + $0x2a8] sm:$0xff]
    %v445 = vld [vmem:[#allocation2 + $0x2b0] sm:$0xff]
    %v446 = vld [vmem:[#allocation2 + $0x2b8] sm:$0xff]
    %v447 = vld [vmem:[#allocation2 + $0x2c0] sm:$0xff]
    %v448 = vld [vmem:[#allocation2 + $0x2c8] sm:$0xff]
    %v449 = vld [vmem:[#allocation2 + $0x2d0] sm:$0xff]
    %v450 = vld [vmem:[#allocation2 + $0x2d8] sm:$0xff]
    %v451 = vld [vmem:[#allocation2 + $0x2e0] sm:$0xff]
    %v452 = vld [vmem:[#allocation2 + $0x2e8] sm:$0xff]
    %v453 = vld [vmem:[#allocation2 + $0x2f0] sm:$0xff]
    %v454 = vld [vmem:[#allocation2 + $0x2f8] sm:$0xff]
    %v455 = vld [vmem:[#allocation2 + $0x300] sm:$0xff]
    %v456 = vld [vmem:[#allocation2 + $0x308] sm:$0xff]
    %v457 = vld [vmem:[#allocation2 + $0x310] sm:$0xff]
    %v458 = vld [vmem:[#allocation2 + $0x318] sm:$0xff]
    %v459 = vld [vmem:[#allocation2 + $0x320] sm:$0xff]
    %v460 = vld [vmem:[#allocation2 + $0x328] sm:$0xff]
    %v461 = vld [vmem:[#allocation2 + $0x330] sm:$0xff]
    %v462 = vld [vmem:[#allocation2 + $0x338] sm:$0xff]
    %v463 = vld [vmem:[#allocation2 + $0x340] sm:$0xff]
    %v464 = vld [vmem:[#allocation2 + $0x348] sm:$0xff]
    %v465 = vld [vmem:[#allocation2 + $0x350] sm:$0xff]
    %v466 = vld [vmem:[#allocation2 + $0x358] sm:$0xff]
    %v467 = vld [vmem:[#allocation2 + $0x360] sm:$0xff]
    %v468 = vld [vmem:[#allocation2 + $0x368] sm:$0xff]
    %v469 = vld [vmem:[#allocation2 + $0x370] sm:$0xff]
    %v470 = vld [vmem:[#allocation2 + $0x378] sm:$0xff]
    %v471 = vld [vmem:[#allocation2 + $0x380] sm:$0xff]
    %v472 = vld [vmem:[#allocation2 + $0x388] sm:$0xff]
    %v473 = vld [vmem:[#allocation2 + $0x390] sm:$0xff]
    %v474 = vld [vmem:[#allocation2 + $0x398] sm:$0xff]
    %v475 = vld [vmem:[#allocation2 + $0x3a0] sm:$0xff]
    %v476 = vld [vmem:[#allocation2 + $0x3a8] sm:$0xff]
    %v477 = vld [vmem:[#allocation2 + $0x3b0] sm:$0xff]
    %v478 = vld [vmem:[#allocation2 + $0x3b8] sm:$0xff]
    %v479 = vld [vmem:[#allocation2 + $0x3c0] sm:$0xff]
    %v480 = vld [vmem:[#allocation2 + $0x3c8] sm:$0xff]
    %v481 = vld [vmem:[#allocation2 + $0x3d0] sm:$0xff]
    %v482 = vld [vmem:[#allocation2 + $0x3d8] sm:$0xff]
    %v483 = vld [vmem:[#allocation2 + $0x3e0] sm:$0xff]
    %v484 = vld [vmem:[#allocation2 + $0x3e8] sm:$0xff]
    %v485 = vld [vmem:[#allocation2 + $0x3f0] sm:$0xff]
    %v486 = vld [vmem:[#allocation2 + $0x3f8] sm:$0xff]
    %v615 = vunpack.c.l.b16 %v359
    %v616 = vunpack.c.h.b16 %v359
    %v617 = vunpack.c.l.b16 %v360
    %v618 = vunpack.c.h.b16 %v360
    %v619 = vunpack.c.l.b16 %v361
    %v620 = vunpack.c.h.b16 %v361
    %v621 = vunpack.c.l.b16 %v362
    %v622 = vunpack.c.h.b16 %v362
    %v623 = vunpack.c.l.b16 %v363
    %v624 = vunpack.c.h.b16 %v363
    %v625 = vunpack.c.l.b16 %v364
    %v626 = vunpack.c.h.b16 %v364
    %v627 = vunpack.c.l.b16 %v365
    %v628 = vunpack.c.h.b16 %v365
    %v629 = vunpack.c.l.b16 %v366
    %v630 = vunpack.c.h.b16 %v366
    %v631 = vunpack.c.l.b16 %v367
    %v632 = vunpack.c.h.b16 %v367
    %v633 = vunpack.c.l.b16 %v368
    %v634 = vunpack.c.h.b16 %v368
    %v635 = vunpack.c.l.b16 %v369
    %v636 = vunpack.c.h.b16 %v369
    %v637 = vunpack.c.l.b16 %v370
    %v638 = vunpack.c.h.b16 %v370
    %v639 = vunpack.c.l.b16 %v371
    %v640 = vunpack.c.h.b16 %v371
    %v641 = vunpack.c.l.b16 %v372
    %v642 = vunpack.c.h.b16 %v372
    %v643 = vunpack.c.l.b16 %v373
    %v644 = vunpack.c.h.b16 %v373
    %v645 = vunpack.c.l.b16 %v374
    %v646 = vunpack.c.h.b16 %v374
    %v647 = vunpack.c.l.b16 %v375
    %v648 = vunpack.c.h.b16 %v375
    %v649 = vunpack.c.l.b16 %v376
    %v650 = vunpack.c.h.b16 %v376
    %v651 = vunpack.c.l.b16 %v377
    %v652 = vunpack.c.h.b16 %v377
    %v653 = vunpack.c.l.b16 %v378
    %v654 = vunpack.c.h.b16 %v378
    %v655 = vunpack.c.l.b16 %v379
    %v656 = vunpack.c.h.b16 %v379
    %v657 = vunpack.c.l.b16 %v380
    %v658 = vunpack.c.h.b16 %v380
    %v659 = vunpack.c.l.b16 %v381
    %v660 = vunpack.c.h.b16 %v381
    %v661 = vunpack.c.l.b16 %v382
    %v662 = vunpack.c.h.b16 %v382
    %v663 = vunpack.c.l.b16 %v383
    %v664 = vunpack.c.h.b16 %v383
    %v665 = vunpack.c.l.b16 %v384
    %v666 = vunpack.c.h.b16 %v384
    %v667 = vunpack.c.l.b16 %v385
    %v668 = vunpack.c.h.b16 %v385
    %v669 = vunpack.c.l.b16 %v386
    %v670 = vunpack.c.h.b16 %v386
    %v671 = vunpack.c.l.b16 %v387
    %v672 = vunpack.c.h.b16 %v387
    %v673 = vunpack.c.l.b16 %v388
    %v674 = vunpack.c.h.b16 %v388
    %v675 = vunpack.c.l.b16 %v389
    %v676 = vunpack.c.h.b16 %v389
    %v677 = vunpack.c.l.b16 %v390
    %v678 = vunpack.c.h.b16 %v390
    %v679 = vunpack.c.l.b16 %v391
    %v680 = vunpack.c.h.b16 %v391
    %v681 = vunpack.c.l.b16 %v392
    %v682 = vunpack.c.h.b16 %v392
    %v683 = vunpack.c.l.b16 %v393
    %v684 = vunpack.c.h.b16 %v393
    %v685 = vunpack.c.l.b16 %v394
    %v686 = vunpack.c.h.b16 %v394
    %v687 = vunpack.c.l.b16 %v395
    %v688 = vunpack.c.h.b16 %v395
    %v689 = vunpack.c.l.b16 %v396
    %v690 = vunpack.c.h.b16 %v396
    %v691 = vunpack.c.l.b16 %v397
    %v692 = vunpack.c.h.b16 %v397
    %v693 = vunpack.c.l.b16 %v398
    %v694 = vunpack.c.h.b16 %v398
    %v695 = vunpack.c.l.b16 %v399
    %v696 = vunpack.c.h.b16 %v399
    %v697 = vunpack.c.l.b16 %v400
    %v698 = vunpack.c.h.b16 %v400
    %v699 = vunpack.c.l.b16 %v401
    %v700 = vunpack.c.h.b16 %v401
    %v701 = vunpack.c.l.b16 %v402
    %v702 = vunpack.c.h.b16 %v402
    %v703 = vunpack.c.l.b16 %v403
    %v704 = vunpack.c.h.b16 %v403
    %v705 = vunpack.c.l.b16 %v404
    %v706 = vunpack.c.h.b16 %v404
    %v707 = vunpack.c.l.b16 %v405
    %v708 = vunpack.c.h.b16 %v405
    %v709 = vunpack.c.l.b16 %v406
    %v710 = vunpack.c.h.b16 %v406
    %v711 = vunpack.c.l.b16 %v407
    %v712 = vunpack.c.h.b16 %v407
    %v713 = vunpack.c.l.b16 %v408
    %v714 = vunpack.c.h.b16 %v408
    %v715 = vunpack.c.l.b16 %v409
    %v716 = vunpack.c.h.b16 %v409
    %v717 = vunpack.c.l.b16 %v410
    %v718 = vunpack.c.h.b16 %v410
    %v719 = vunpack.c.l.b16 %v411
    %v720 = vunpack.c.h.b16 %v411
    %v721 = vunpack.c.l.b16 %v412
    %v722 = vunpack.c.h.b16 %v412
    %v723 = vunpack.c.l.b16 %v413
    %v724 = vunpack.c.h.b16 %v413
    %v725 = vunpack.c.l.b16 %v414
    %v726 = vunpack.c.h.b16 %v414
    %v727 = vunpack.c.l.b16 %v415
    %v728 = vunpack.c.h.b16 %v415
    %v729 = vunpack.c.l.b16 %v416
    %v730 = vunpack.c.h.b16 %v416
    %v731 = vunpack.c.l.b16 %v417
    %v732 = vunpack.c.h.b16 %v417
    %v733 = vunpack.c.l.b16 %v418
    %v734 = vunpack.c.h.b16 %v418
    %v735 = vunpack.c.l.b16 %v419
    %v736 = vunpack.c.h.b16 %v419
    %v737 = vunpack.c.l.b16 %v420
    %v738 = vunpack.c.h.b16 %v420
    %v739 = vunpack.c.l.b16 %v421
    %v740 = vunpack.c.h.b16 %v421
    %v741 = vunpack.c.l.b16 %v422
    %v742 = vunpack.c.h.b16 %v422
    %v743 = vunpack.c.l.b16 %v423
    %v744 = vunpack.c.h.b16 %v423
    %v745 = vunpack.c.l.b16 %v424
    %v746 = vunpack.c.h.b16 %v424
    %v747 = vunpack.c.l.b16 %v425
    %v748 = vunpack.c.h.b16 %v425
    %v749 = vunpack.c.l.b16 %v426
    %v750 = vunpack.c.h.b16 %v426
    %v751 = vunpack.c.l.b16 %v427
    %v752 = vunpack.c.h.b16 %v427
    %v753 = vunpack.c.l.b16 %v428
    %v754 = vunpack.c.h.b16 %v428
    %v755 = vunpack.c.l.b16 %v429
    %v756 = vunpack.c.h.b16 %v429
    %v757 = vunpack.c.l.b16 %v430
    %v758 = vunpack.c.h.b16 %v430
    %v759 = vunpack.c.l.b16 %v431
    %v760 = vunpack.c.h.b16 %v431
    %v761 = vunpack.c.l.b16 %v432
    %v762 = vunpack.c.h.b16 %v432
    %v763 = vunpack.c.l.b16 %v433
    %v764 = vunpack.c.h.b16 %v433
    %v765 = vunpack.c.l.b16 %v434
    %v766 = vunpack.c.h.b16 %v434
    %v767 = vunpack.c.l.b16 %v435
    %v768 = vunpack.c.h.b16 %v435
    %v769 = vunpack.c.l.b16 %v436
    %v770 = vunpack.c.h.b16 %v436
    %v771 = vunpack.c.l.b16 %v437
    %v772 = vunpack.c.h.b16 %v437
    %v773 = vunpack.c.l.b16 %v438
    %v774 = vunpack.c.h.b16 %v438
    %v775 = vunpack.c.l.b16 %v439
    %v776 = vunpack.c.h.b16 %v439
    %v777 = vunpack.c.l.b16 %v440
    %v778 = vunpack.c.h.b16 %v440
    %v779 = vunpack.c.l.b16 %v441
    %v780 = vunpack.c.h.b16 %v441
    %v781 = vunpack.c.l.b16 %v442
    %v782 = vunpack.c.h.b16 %v442
    %v783 = vunpack.c.l.b16 %v443
    %v784 = vunpack.c.h.b16 %v443
    %v785 = vunpack.c.l.b16 %v444
    %v786 = vunpack.c.h.b16 %v444
    %v787 = vunpack.c.l.b16 %v445
    %v788 = vunpack.c.h.b16 %v445
    %v789 = vunpack.c.l.b16 %v446
    %v790 = vunpack.c.h.b16 %v446
    %v791 = vunpack.c.l.b16 %v447
    %v792 = vunpack.c.h.b16 %v447
    %v793 = vunpack.c.l.b16 %v448
    %v794 = vunpack.c.h.b16 %v448
    %v795 = vunpack.c.l.b16 %v449
    %v796 = vunpack.c.h.b16 %v449
    %v797 = vunpack.c.l.b16 %v450
    %v798 = vunpack.c.h.b16 %v450
    %v799 = vunpack.c.l.b16 %v451
    %v800 = vunpack.c.h.b16 %v451
    %v801 = vunpack.c.l.b16 %v452
    %v802 = vunpack.c.h.b16 %v452
    %v803 = vunpack.c.l.b16 %v453
    %v804 = vunpack.c.h.b16 %v453
    %v805 = vunpack.c.l.b16 %v454
    %v806 = vunpack.c.h.b16 %v454
    %v807 = vunpack.c.l.b16 %v455
    %v808 = vunpack.c.h.b16 %v455
    %v809 = vunpack.c.l.b16 %v456
    %v810 = vunpack.c.h.b16 %v456
    %v811 = vunpack.c.l.b16 %v457
    %v812 = vunpack.c.h.b16 %v457
    %v813 = vunpack.c.l.b16 %v458
    %v814 = vunpack.c.h.b16 %v458
    %v815 = vunpack.c.l.b16 %v459
    %v816 = vunpack.c.h.b16 %v459
    %v817 = vunpack.c.l.b16 %v460
    %v818 = vunpack.c.h.b16 %v460
    %v819 = vunpack.c.l.b16 %v461
    %v820 = vunpack.c.h.b16 %v461
    %v821 = vunpack.c.l.b16 %v462
    %v822 = vunpack.c.h.b16 %v462
    %v823 = vunpack.c.l.b16 %v463
    %v824 = vunpack.c.h.b16 %v463
    %v825 = vunpack.c.l.b16 %v464
    %v826 = vunpack.c.h.b16 %v464
    %v827 = vunpack.c.l.b16 %v465
    %v828 = vunpack.c.h.b16 %v465
    %v829 = vunpack.c.l.b16 %v466
    %v830 = vunpack.c.h.b16 %v466
    %v831 = vunpack.c.l.b16 %v467
    %v832 = vunpack.c.h.b16 %v467
    %v833 = vunpack.c.l.b16 %v468
    %v834 = vunpack.c.h.b16 %v468
    %v835 = vunpack.c.l.b16 %v469
    %v836 = vunpack.c.h.b16 %v469
    %v837 = vunpack.c.l.b16 %v470
    %v838 = vunpack.c.h.b16 %v470
    %v839 = vunpack.c.l.b16 %v471
    %v840 = vunpack.c.h.b16 %v471
    %v841 = vunpack.c.l.b16 %v472
    %v842 = vunpack.c.h.b16 %v472
    %v843 = vunpack.c.l.b16 %v473
    %v844 = vunpack.c.h.b16 %v473
    %v845 = vunpack.c.l.b16 %v474
    %v846 = vunpack.c.h.b16 %v474
    %v847 = vunpack.c.l.b16 %v475
    %v848 = vunpack.c.h.b16 %v475
    %v849 = vunpack.c.l.b16 %v476
    %v850 = vunpack.c.h.b16 %v476
    %v851 = vunpack.c.l.b16 %v477
    %v852 = vunpack.c.h.b16 %v477
    %v853 = vunpack.c.l.b16 %v478
    %v854 = vunpack.c.h.b16 %v478
    %v855 = vunpack.c.l.b16 %v479
    %v856 = vunpack.c.h.b16 %v479
    %v857 = vunpack.c.l.b16 %v480
    %v858 = vunpack.c.h.b16 %v480
    %v859 = vunpack.c.l.b16 %v481
    %v860 = vunpack.c.h.b16 %v481
    %v861 = vunpack.c.l.b16 %v482
    %v862 = vunpack.c.h.b16 %v482
    %v863 = vunpack.c.l.b16 %v483
    %v864 = vunpack.c.h.b16 %v483
    %v865 = vunpack.c.l.b16 %v484
    %v866 = vunpack.c.h.b16 %v484
    %v867 = vunpack.c.l.b16 %v485
    %v868 = vunpack.c.h.b16 %v485
    %v869 = vunpack.c.l.b16 %v486
    %v870 = vunpack.c.h.b16 %v486
    %v871 = vpack.c.b16 %v619, %v615
    %v872 = vpack.c.b16 %v620, %v616
    %v873 = vpack.c.b16 %v621, %v617
    %v874 = vpack.c.b16 %v622, %v618
    %v875 = vpack.c.b16 %v627, %v623
    %v876 = vpack.c.b16 %v628, %v624
    %v877 = vpack.c.b16 %v629, %v625
    %v878 = vpack.c.b16 %v630, %v626
    %v879 = vpack.c.b16 %v635, %v631
    %v880 = vpack.c.b16 %v636, %v632
    %v881 = vpack.c.b16 %v637, %v633
    %v882 = vpack.c.b16 %v638, %v634
    %v883 = vpack.c.b16 %v643, %v639
    %v884 = vpack.c.b16 %v644, %v640
    %v885 = vpack.c.b16 %v645, %v641
    %v886 = vpack.c.b16 %v646, %v642
    %v887 = vpack.c.b16 %v651, %v647
    %v888 = vpack.c.b16 %v652, %v648
    %v889 = vpack.c.b16 %v653, %v649
    %v890 = vpack.c.b16 %v654, %v650
    %v891 = vpack.c.b16 %v659, %v655
    %v892 = vpack.c.b16 %v660, %v656
    %v893 = vpack.c.b16 %v661, %v657
    %v894 = vpack.c.b16 %v662, %v658
    %v895 = vpack.c.b16 %v667, %v663
    %v896 = vpack.c.b16 %v668, %v664
    %v897 = vpack.c.b16 %v669, %v665
    %v898 = vpack.c.b16 %v670, %v666
    %v899 = vpack.c.b16 %v675, %v671
    %v900 = vpack.c.b16 %v676, %v672
    %v901 = vpack.c.b16 %v677, %v673
    %v902 = vpack.c.b16 %v678, %v674
    %v903 = vpack.c.b16 %v683, %v679
    %v904 = vpack.c.b16 %v684, %v680
    %v905 = vpack.c.b16 %v685, %v681
    %v906 = vpack.c.b16 %v686, %v682
    %v907 = vpack.c.b16 %v691, %v687
    %v908 = vpack.c.b16 %v692, %v688
    %v909 = vpack.c.b16 %v693, %v689
    %v910 = vpack.c.b16 %v694, %v690
    %v911 = vpack.c.b16 %v699, %v695
    %v912 = vpack.c.b16 %v700, %v696
    %v913 = vpack.c.b16 %v701, %v697
    %v914 = vpack.c.b16 %v702, %v698
    %v915 = vpack.c.b16 %v707, %v703
    %v916 = vpack.c.b16 %v708, %v704
    %v917 = vpack.c.b16 %v709, %v705
    %v918 = vpack.c.b16 %v710, %v706
    %v919 = vpack.c.b16 %v715, %v711
    %v920 = vpack.c.b16 %v716, %v712
    %v921 = vpack.c.b16 %v717, %v713
    %v922 = vpack.c.b16 %v718, %v714
    %v923 = vpack.c.b16 %v723, %v719
    %v924 = vpack.c.b16 %v724, %v720
    %v925 = vpack.c.b16 %v725, %v721
    %v926 = vpack.c.b16 %v726, %v722
    %v927 = vpack.c.b16 %v731, %v727
    %v928 = vpack.c.b16 %v732, %v728
    %v929 = vpack.c.b16 %v733, %v729
    %v930 = vpack.c.b16 %v734, %v730
    %v931 = vpack.c.b16 %v739, %v735
    %v932 = vpack.c.b16 %v740, %v736
    %v933 = vpack.c.b16 %v741, %v737
    %v934 = vpack.c.b16 %v742, %v738
    %v935 = vpack.c.b16 %v747, %v743
    %v936 = vpack.c.b16 %v748, %v744
    %v937 = vpack.c.b16 %v749, %v745
    %v938 = vpack.c.b16 %v750, %v746
    %v939 = vpack.c.b16 %v755, %v751
    %v940 = vpack.c.b16 %v756, %v752
    %v941 = vpack.c.b16 %v757, %v753
    %v942 = vpack.c.b16 %v758, %v754
    %v943 = vpack.c.b16 %v763, %v759
    %v944 = vpack.c.b16 %v764, %v760
    %v945 = vpack.c.b16 %v765, %v761
    %v946 = vpack.c.b16 %v766, %v762
    %v947 = vpack.c.b16 %v771, %v767
    %v948 = vpack.c.b16 %v772, %v768
    %v949 = vpack.c.b16 %v773, %v769
    %v950 = vpack.c.b16 %v774, %v770
    %v951 = vpack.c.b16 %v779, %v775
    %v952 = vpack.c.b16 %v780, %v776
    %v953 = vpack.c.b16 %v781, %v777
    %v954 = vpack.c.b16 %v782, %v778
    %v955 = vpack.c.b16 %v787, %v783
    %v956 = vpack.c.b16 %v788, %v784
    %v957 = vpack.c.b16 %v789, %v785
    %v958 = vpack.c.b16 %v790, %v786
    %v959 = vpack.c.b16 %v795, %v791
    %v960 = vpack.c.b16 %v796, %v792
    %v961 = vpack.c.b16 %v797, %v793
    %v962 = vpack.c.b16 %v798, %v794
    %v963 = vpack.c.b16 %v803, %v799
    %v964 = vpack.c.b16 %v804, %v800
    %v965 = vpack.c.b16 %v805, %v801
    %v966 = vpack.c.b16 %v806, %v802
    %v967 = vpack.c.b16 %v811, %v807
    %v968 = vpack.c.b16 %v812, %v808
    %v969 = vpack.c.b16 %v813, %v809
    %v970 = vpack.c.b16 %v814, %v810
    %v971 = vpack.c.b16 %v819, %v815
    %v972 = vpack.c.b16 %v820, %v816
    %v973 = vpack.c.b16 %v821, %v817
    %v974 = vpack.c.b16 %v822, %v818
    %v975 = vpack.c.b16 %v827, %v823
    %v976 = vpack.c.b16 %v828, %v824
    %v977 = vpack.c.b16 %v829, %v825
    %v978 = vpack.c.b16 %v830, %v826
    %v979 = vpack.c.b16 %v835, %v831
    %v980 = vpack.c.b16 %v836, %v832
    %v981 = vpack.c.b16 %v837, %v833
    %v982 = vpack.c.b16 %v838, %v834
    %v983 = vpack.c.b16 %v843, %v839
    %v984 = vpack.c.b16 %v844, %v840
    %v985 = vpack.c.b16 %v845, %v841
    %v986 = vpack.c.b16 %v846, %v842
    %v987 = vpack.c.b16 %v851, %v847
    %v988 = vpack.c.b16 %v852, %v848
    %v989 = vpack.c.b16 %v853, %v849
    %v990 = vpack.c.b16 %v854, %v850
    %v991 = vpack.c.b16 %v859, %v855
    %v992 = vpack.c.b16 %v860, %v856
    %v993 = vpack.c.b16 %v861, %v857
    %v994 = vpack.c.b16 %v862, %v858
    %v995 = vpack.c.b16 %v867, %v863
    %v996 = vpack.c.b16 %v868, %v864
    %v997 = vpack.c.b16 %v869, %v865
    %v998 = vpack.c.b16 %v870, %v866
    %1127 = vmatpush.bf16.msra.mxu0 %v899
    %1128 = vmatpush.bf16.msra.mxu0 %v895
    %1129 = vmatpush.bf16.msra.mxu0 %v891
    %1130 = vmatpush.bf16.msra.mxu0 %v887
    %1131 = vmatpush.bf16.msra.mxu0 %v883
    %1132 = vmatpush.bf16.msra.mxu0 %v879
    %1133 = vmatpush.bf16.msra.mxu0 %v875
    %1134 = vmatpush.bf16.msra.mxu0 %v871
    %1135 = vmatmul.bf16.gmra.mxu0 %v355
    %v1136 = vpop.f32.mrf.mxu0
    %v1137 = vadd.f32 0.0, %v1136
    %v1138 = vpop.f32.mrf.mxu0
    %1139 = vdwg.mxu0
    %1140 = vmatpush.bf16.msra.mxu0 %v931
    %1141 = vmatpush.bf16.msra.mxu0 %v927
    %1142 = vmatpush.bf16.msra.mxu0 %v923
    %1143 = vmatpush.bf16.msra.mxu0 %v919
    %1144 = vmatpush.bf16.msra.mxu0 %v915
    %1145 = vmatpush.bf16.msra.mxu0 %v911
    %1146 = vmatpush.bf16.msra.mxu0 %v907
    %1147 = vmatpush.bf16.msra.mxu0 %v903
    %1148 = vmatmul.bf16.gmra.mxu0 %v356
    %v1149 = vpop.f32.mrf.mxu0
    %v1150 = vadd.f32 %v1137, %v1149
    %v1151 = vpop.f32.mrf.mxu0
    %1152 = vdwg.mxu0
    %1153 = vmatpush.bf16.msra.mxu0 %v963
    %1154 = vmatpush.bf16.msra.mxu0 %v959
    %1155 = vmatpush.bf16.msra.mxu0 %v955
    %1156 = vmatpush.bf16.msra.mxu0 %v951
    %1157 = vmatpush.bf16.msra.mxu0 %v947
    %1158 = vmatpush.bf16.msra.mxu0 %v943
    %1159 = vmatpush.bf16.msra.mxu0 %v939
    %1160 = vmatpush.bf16.msra.mxu0 %v935
    %1161 = vmatmul.bf16.gmra.mxu0 %v357
    %v1162 = vpop.f32.mrf.mxu0
    %v1163 = vadd.f32 %v1150, %v1162
    %v1164 = vpop.f32.mrf.mxu0
    %1165 = vdwg.mxu0
    %1166 = vmatpush.bf16.msra.mxu0 %v995
    %1167 = vmatpush.bf16.msra.mxu0 %v991
    %1168 = vmatpush.bf16.msra.mxu0 %v987
    %1169 = vmatpush.bf16.msra.mxu0 %v983
    %1170 = vmatpush.bf16.msra.mxu0 %v979
    %1171 = vmatpush.bf16.msra.mxu0 %v975
    %1172 = vmatpush.bf16.msra.mxu0 %v971
    %1173 = vmatpush.bf16.msra.mxu0 %v967
    %1174 = vmatmul.bf16.gmra.mxu0 %v358
    %v1175 = vpop.f32.mrf.mxu0
    %v1176 = vadd.f32 %v1163, %v1175
    %v1177 = vpop.f32.mrf.mxu0
    %1178 = vdwg.mxu0
    %1179 = vmatpush.bf16.msra.mxu0 %v900
    %1180 = vmatpush.bf16.msra.mxu0 %v896
    %1181 = vmatpush.bf16.msra.mxu0 %v892
    %1182 = vmatpush.bf16.msra.mxu0 %v888
    %1183 = vmatpush.bf16.msra.mxu0 %v884
    %1184 = vmatpush.bf16.msra.mxu0 %v880
    %1185 = vmatpush.bf16.msra.mxu0 %v876
    %1186 = vmatpush.bf16.msra.mxu0 %v872
    %1187 = vmatmul.bf16.gmra.mxu0 %v355
    %v1188 = vpop.f32.mrf.mxu0
    %v1189 = vadd.f32 0.0, %v1188
    %v1190 = vpop.f32.mrf.mxu0
    %1191 = vdwg.mxu0
    %1192 = vmatpush.bf16.msra.mxu0 %v932
    %1193 = vmatpush.bf16.msra.mxu0 %v928
    %1194 = vmatpush.bf16.msra.mxu0 %v924
    %1195 = vmatpush.bf16.msra.mxu0 %v920
    %1196 = vmatpush.bf16.msra.mxu0 %v916
    %1197 = vmatpush.bf16.msra.mxu0 %v912
    %1198 = vmatpush.bf16.msra.mxu0 %v908
    %1199 = vmatpush.bf16.msra.mxu0 %v904
    %1200 = vmatmul.bf16.gmra.mxu0 %v356
    %v1201 = vpop.f32.mrf.mxu0
    %v1202 = vadd.f32 %v1189, %v1201
    %v1203 = vpop.f32.mrf.mxu0
    %1204 = vdwg.mxu0
    %1205 = vmatpush.bf16.msra.mxu0 %v964
    %1206 = vmatpush.bf16.msra.mxu0 %v960
    %1207 = vmatpush.bf16.msra.mxu0 %v956
    %1208 = vmatpush.bf16.msra.mxu0 %v952
    %1209 = vmatpush.bf16.msra.mxu0 %v948
    %1210 = vmatpush.bf16.msra.mxu0 %v944
    %1211 = vmatpush.bf16.msra.mxu0 %v940
    %1212 = vmatpush.bf16.msra.mxu0 %v936
    %1213 = vmatmul.bf16.gmra.mxu0 %v357
    %v1214 = vpop.f32.mrf.mxu0
    %v1215 = vadd.f32 %v1202, %v1214
    %v1216 = vpop.f32.mrf.mxu0
    %1217 = vdwg.mxu0
    %1218 = vmatpush.bf16.msra.mxu0 %v996
    %1219 = vmatpush.bf16.msra.mxu0 %v992
    %1220 = vmatpush.bf16.msra.mxu0 %v988
    %1221 = vmatpush.bf16.msra.mxu0 %v984
    %1222 = vmatpush.bf16.msra.mxu0 %v980
    %1223 = vmatpush.bf16.msra.mxu0 %v976
    %1224 = vmatpush.bf16.msra.mxu0 %v972
    %1225 = vmatpush.bf16.msra.mxu0 %v968
    %1226 = vmatmul.bf16.gmra.mxu0 %v358
    %v1227 = vpop.f32.mrf.mxu0
    %v1228 = vadd.f32 %v1215, %v1227
    %v1229 = vpop.f32.mrf.mxu0
    %1230 = vdwg.mxu0
    %1231 = vmatpush.bf16.msra.mxu0 %v901
    %1232 = vmatpush.bf16.msra.mxu0 %v897
    %1233 = vmatpush.bf16.msra.mxu0 %v893
    %1234 = vmatpush.bf16.msra.mxu0 %v889
    %1235 = vmatpush.bf16.msra.mxu0 %v885
    %1236 = vmatpush.bf16.msra.mxu0 %v881
    %1237 = vmatpush.bf16.msra.mxu0 %v877
    %1238 = vmatpush.bf16.msra.mxu0 %v873
    %1239 = vmatmul.bf16.gmra.mxu0 %v355
    %v1240 = vpop.f32.mrf.mxu0
    %v1241 = vadd.f32 0.0, %v1240
    %v1242 = vpop.f32.mrf.mxu0
    %1243 = vdwg.mxu0
    %1244 = vmatpush.bf16.msra.mxu0 %v933
    %1245 = vmatpush.bf16.msra.mxu0 %v929
    %1246 = vmatpush.bf16.msra.mxu0 %v925
    %1247 = vmatpush.bf16.msra.mxu0 %v921
    %1248 = vmatpush.bf16.msra.mxu0 %v917
    %1249 = vmatpush.bf16.msra.mxu0 %v913
    %1250 = vmatpush.bf16.msra.mxu0 %v909
    %1251 = vmatpush.bf16.msra.mxu0 %v905
    %1252 = vmatmul.bf16.gmra.mxu0 %v356
    %v1253 = vpop.f32.mrf.mxu0
    %v1254 = vadd.f32 %v1241, %v1253
    %v1255 = vpop.f32.mrf.mxu0
    %1256 = vdwg.mxu0
    %1257 = vmatpush.bf16.msra.mxu0 %v965
    %1258 = vmatpush.bf16.msra.mxu0 %v961
    %1259 = vmatpush.bf16.msra.mxu0 %v957
    %1260 = vmatpush.bf16.msra.mxu0 %v953
    %1261 = vmatpush.bf16.msra.mxu0 %v949
    %1262 = vmatpush.bf16.msra.mxu0 %v945
    %1263 = vmatpush.bf16.msra.mxu0 %v941
    %1264 = vmatpush.bf16.msra.mxu0 %v937
    %1265 = vmatmul.bf16.gmra.mxu0 %v357
    %v1266 = vpop.f32.mrf.mxu0
    %v1267 = vadd.f32 %v1254, %v1266
    %v1268 = vpop.f32.mrf.mxu0
    %1269 = vdwg.mxu0
    %1270 = vmatpush.bf16.msra.mxu0 %v997
    %1271 = vmatpush.bf16.msra.mxu0 %v993
    %1272 = vmatpush.bf16.msra.mxu0 %v989
    %1273 = vmatpush.bf16.msra.mxu0 %v985
    %1274 = vmatpush.bf16.msra.mxu0 %v981
    %1275 = vmatpush.bf16.msra.mxu0 %v977
    %1276 = vmatpush.bf16.msra.mxu0 %v973
    %1277 = vmatpush.bf16.msra.mxu0 %v969
    %1278 = vmatmul.bf16.gmra.mxu0 %v358
    %v1279 = vpop.f32.mrf.mxu0
    %v1280 = vadd.f32 %v1267, %v1279
    %v1281 = vpop.f32.mrf.mxu0
    %1282 = vdwg.mxu0
    %1283 = vmatpush.bf16.msra.mxu0 %v902
    %1284 = vmatpush.bf16.msra.mxu0 %v898
    %1285 = vmatpush.bf16.msra.mxu0 %v894
    %1286 = vmatpush.bf16.msra.mxu0 %v890
    %1287 = vmatpush.bf16.msra.mxu0 %v886
    %1288 = vmatpush.bf16.msra.mxu0 %v882
    %1289 = vmatpush.bf16.msra.mxu0 %v878
    %1290 = vmatpush.bf16.msra.mxu0 %v874
    %1291 = vmatmul.bf16.gmra.mxu0 %v355
    %v1292 = vpop.f32.mrf.mxu0
    %v1293 = vadd.f32 0.0, %v1292
    %v1294 = vpop.f32.mrf.mxu0
    %1295 = vdwg.mxu0
    %1296 = vmatpush.bf16.msra.mxu0 %v934
    %1297 = vmatpush.bf16.msra.mxu0 %v930
    %1298 = vmatpush.bf16.msra.mxu0 %v926
    %1299 = vmatpush.bf16.msra.mxu0 %v922
    %1300 = vmatpush.bf16.msra.mxu0 %v918
    %1301 = vmatpush.bf16.msra.mxu0 %v914
    %1302 = vmatpush.bf16.msra.mxu0 %v910
    %1303 = vmatpush.bf16.msra.mxu0 %v906
    %1304 = vmatmul.bf16.gmra.mxu0 %v356
    %v1305 = vpop.f32.mrf.mxu0
    %v1306 = vadd.f32 %v1293, %v1305
    %v1307 = vpop.f32.mrf.mxu0
    %1308 = vdwg.mxu0
    %1309 = vmatpush.bf16.msra.mxu0 %v966
    %1310 = vmatpush.bf16.msra.mxu0 %v962
    %1311 = vmatpush.bf16.msra.mxu0 %v958
    %1312 = vmatpush.bf16.msra.mxu0 %v954
    %1313 = vmatpush.bf16.msra.mxu0 %v950
    %1314 = vmatpush.bf16.msra.mxu0 %v946
    %1315 = vmatpush.bf16.msra.mxu0 %v942
    %1316 = vmatpush.bf16.msra.mxu0 %v938
    %1317 = vmatmul.bf16.gmra.mxu0 %v357
    %v1318 = vpop.f32.mrf.mxu0
    %v1319 = vadd.f32 %v1306, %v1318
    %v1320 = vpop.f32.mrf.mxu0
    %1321 = vdwg.mxu0
    %1322 = vmatpush.bf16.msra.mxu0 %v998
    %1323 = vmatpush.bf16.msra.mxu0 %v994
    %1324 = vmatpush.bf16.msra.mxu0 %v990
    %1325 = vmatpush.bf16.msra.mxu0 %v986
    %1326 = vmatpush.bf16.msra.mxu0 %v982
    %1327 = vmatpush.bf16.msra.mxu0 %v978
    %1328 = vmatpush.bf16.msra.mxu0 %v974
    %1329 = vmatpush.bf16.msra.mxu0 %v970
    %1330 = vmatmul.bf16.gmra.mxu0 %v358
    %v1331 = vpop.f32.mrf.mxu0
    %v1332 = vadd.f32 %v1319, %v1331
    %v1333 = vpop.f32.mrf.mxu0
    %1334 = vdwg.mxu0
    %v1335 = vpack.c.bf16 %v1228, %v1176
    %v1336 = vpack.c.bf16 %v1332, %v1280
    %v1337 = vld [vmem:[%s8] sm:$0xf]
    %1339 = vst [vmem:[#allocation1] ss:$9 sm:$0xff] %v1337
    %v1340 = vld [vmem:[#allocation1] sm:$0xff]
    %v1341 = vld [vmem:[#allocation1 + $0x9] sm:$0xff]
    %v1342 = vld [vmem:[#allocation1 + $0x12] sm:$0xff]
    %v1343 = vld [vmem:[#allocation1 + $0x1b] sm:$0xff]
    %v1344 = vpack.i.b16 %v1340, %v1340
    %v1346 = vperm.slane %v1344, 0
    %v1347 = vpack.i.b16 %v1341, %v1341
    %v1349 = vperm.slane %v1347, 0
    %v1350 = vpack.i.b16 %v1342, %v1342
    %v1352 = vperm.slane %v1350, 0
    %v1353 = vpack.i.b16 %v1343, %v1343
    %v1355 = vperm.slane %v1353, 0
    %v1356 = vunpack.c.l.bf16 %v1335
    %v1357 = vunpack.c.h.bf16 %v1335
    %v1358 = vunpack.c.l.bf16 %v1336
    %v1359 = vunpack.c.h.bf16 %v1336
    %v1360 = vunpack.c.l.bf16 %v1346
    %v1361 = vunpack.c.l.bf16 %v1349
    %v1362 = vunpack.c.l.bf16 %v1352
    %v1363 = vunpack.c.l.bf16 %v1355
    %v1364 = vadd.f32 %v1356, %v1360
    %v1365 = vadd.f32 %v1357, %v1361
    %v1366 = vadd.f32 %v1358, %v1362
    %v1367 = vadd.f32 %v1359, %v1363
    %v1368 = vpack.c.bf16 %v1365, %v1364
    %v1369 = vpack.c.bf16 %v1367, %v1366
    %v1370 = vunpack.c.l.bf16 %v1368
    %v1371 = vunpack.c.h.bf16 %v1368
    %v1372 = vunpack.c.l.bf16 %v1369
    %v1373 = vunpack.c.h.bf16 %v1369
    %v1374 = vmax.f32 %v1370, 0.0
    %v1375 = vmax.f32 %v1371, 0.0
    %v1376 = vmax.f32 %v1372, 0.0
    %v1377 = vmax.f32 %v1373, 0.0
    %v1378 = vpack.c.bf16 %v1374, %v1374
    %v1379 = vpack.c.bf16 %v1375, %v1375
    %v1380 = vpack.c.bf16 %v1376, %v1376
    %v1381 = vpack.c.bf16 %v1377, %v1377
    %v1382 = vld [vmem:[%s9] sm:$0xf]
    %v1383 = vld [vmem:[%s9 + $0x4] sm:$0xf]
    %v1384 = vld [vmem:[%s9 + $0x8] sm:$0xf]
    %v1385 = vld [vmem:[%s9 + $0xc] sm:$0xf]
    %v1386 = vld [vmem:[%s9 + $0x10] sm:$0xf]
    %v1387 = vld [vmem:[%s9 + $0x14] sm:$0xf]
    %v1388 = vld [vmem:[%s9 + $0x18] sm:$0xf]
    %v1389 = vld [vmem:[%s9 + $0x1c] sm:$0xf]
    %v1390 = vld [vmem:[%s9 + $0x20] sm:$0xf]
    %v1391 = vld [vmem:[%s9 + $0x24] sm:$0xf]
    %v1392 = vld [vmem:[%s9 + $0x28] sm:$0xf]
    %v1393 = vld [vmem:[%s9 + $0x2c] sm:$0xf]
    %v1394 = vld [vmem:[%s9 + $0x30] sm:$0xf]
    %v1395 = vld [vmem:[%s9 + $0x34] sm:$0xf]
    %v1396 = vld [vmem:[%s9 + $0x38] sm:$0xf]
    %v1397 = vld [vmem:[%s9 + $0x3c] sm:$0xf]
    %v1398 = vld [vmem:[%s9 + $0x40] sm:$0xf]
    %v1399 = vld [vmem:[%s9 + $0x44] sm:$0xf]
    %v1400 = vld [vmem:[%s9 + $0x48] sm:$0xf]
    %v1401 = vld [vmem:[%s9 + $0x4c] sm:$0xf]
    %v1402 = vld [vmem:[%s9 + $0x50] sm:$0xf]
    %v1403 = vld [vmem:[%s9 + $0x54] sm:$0xf]
    %v1404 = vld [vmem:[%s9 + $0x58] sm:$0xf]
    %v1405 = vld [vmem:[%s9 + $0x5c] sm:$0xf]
    %v1406 = vld [vmem:[%s9 + $0x60] sm:$0xf]
    %v1407 = vld [vmem:[%s9 + $0x64] sm:$0xf]
    %v1408 = vld [vmem:[%s9 + $0x68] sm:$0xf]
    %v1409 = vld [vmem:[%s9 + $0x6c] sm:$0xf]
    %v1410 = vld [vmem:[%s9 + $0x70] sm:$0xf]
    %v1411 = vld [vmem:[%s9 + $0x74] sm:$0xf]
    %v1412 = vld [vmem:[%s9 + $0x78] sm:$0xf]
    %v1413 = vld [vmem:[%s9 + $0x7c] sm:$0xf]
    %v1414 = vld [vmem:[%s9 + $0x80] sm:$0xf]
    %v1415 = vld [vmem:[%s9 + $0x84] sm:$0xf]
    %v1416 = vld [vmem:[%s9 + $0x88] sm:$0xf]
    %v1417 = vld [vmem:[%s9 + $0x8c] sm:$0xf]
    %v1418 = vld [vmem:[%s9 + $0x90] sm:$0xf]
    %v1419 = vld [vmem:[%s9 + $0x94] sm:$0xf]
    %v1420 = vld [vmem:[%s9 + $0x98] sm:$0xf]
    %v1421 = vld [vmem:[%s9 + $0x9c] sm:$0xf]
    %v1422 = vld [vmem:[%s9 + $0xa0] sm:$0xf]
    %v1423 = vld [vmem:[%s9 + $0xa4] sm:$0xf]
    %v1424 = vld [vmem:[%s9 + $0xa8] sm:$0xf]
    %v1425 = vld [vmem:[%s9 + $0xac] sm:$0xf]
    %v1426 = vld [vmem:[%s9 + $0xb0] sm:$0xf]
    %v1427 = vld [vmem:[%s9 + $0xb4] sm:$0xf]
    %v1428 = vld [vmem:[%s9 + $0xb8] sm:$0xf]
    %v1429 = vld [vmem:[%s9 + $0xbc] sm:$0xf]
    %v1430 = vld [vmem:[%s9 + $0xc0] sm:$0xf]
    %v1431 = vld [vmem:[%s9 + $0xc4] sm:$0xf]
    %v1432 = vld [vmem:[%s9 + $0xc8] sm:$0xf]
    %v1433 = vld [vmem:[%s9 + $0xcc] sm:$0xf]
    %v1434 = vld [vmem:[%s9 + $0xd0] sm:$0xf]
    %v1435 = vld [vmem:[%s9 + $0xd4] sm:$0xf]
    %v1436 = vld [vmem:[%s9 + $0xd8] sm:$0xf]
    %v1437 = vld [vmem:[%s9 + $0xdc] sm:$0xf]
    %v1438 = vld [vmem:[%s9 + $0xe0] sm:$0xf]
    %v1439 = vld [vmem:[%s9 + $0xe4] sm:$0xf]
    %v1440 = vld [vmem:[%s9 + $0xe8] sm:$0xf]
    %v1441 = vld [vmem:[%s9 + $0xec] sm:$0xf]
    %v1442 = vld [vmem:[%s9 + $0xf0] sm:$0xf]
    %v1443 = vld [vmem:[%s9 + $0xf4] sm:$0xf]
    %v1444 = vld [vmem:[%s9 + $0xf8] sm:$0xf]
    %v1445 = vld [vmem:[%s9 + $0xfc] sm:$0xf]
    %v1510 = vunpack.c.l.b16 %v1382
    %v1511 = vunpack.c.l.b16 %v1383
    %v1512 = vunpack.c.l.b16 %v1384
    %v1513 = vunpack.c.l.b16 %v1385
    %v1514 = vunpack.c.l.b16 %v1386
    %v1515 = vunpack.c.l.b16 %v1387
    %v1516 = vunpack.c.l.b16 %v1388
    %v1517 = vunpack.c.l.b16 %v1389
    %v1518 = vunpack.c.l.b16 %v1390
    %v1519 = vunpack.c.l.b16 %v1391
    %v1520 = vunpack.c.l.b16 %v1392
    %v1521 = vunpack.c.l.b16 %v1393
    %v1522 = vunpack.c.l.b16 %v1394
    %v1523 = vunpack.c.l.b16 %v1395
    %v1524 = vunpack.c.l.b16 %v1396
    %v1525 = vunpack.c.l.b16 %v1397
    %v1526 = vunpack.c.l.b16 %v1398
    %v1527 = vunpack.c.l.b16 %v1399
    %v1528 = vunpack.c.l.b16 %v1400
    %v1529 = vunpack.c.l.b16 %v1401
    %v1530 = vunpack.c.l.b16 %v1402
    %v1531 = vunpack.c.l.b16 %v1403
    %v1532 = vunpack.c.l.b16 %v1404
    %v1533 = vunpack.c.l.b16 %v1405
    %v1534 = vunpack.c.l.b16 %v1406
    %v1535 = vunpack.c.l.b16 %v1407
    %v1536 = vunpack.c.l.b16 %v1408
    %v1537 = vunpack.c.l.b16 %v1409
    %v1538 = vunpack.c.l.b16 %v1410
    %v1539 = vunpack.c.l.b16 %v1411
    %v1540 = vunpack.c.l.b16 %v1412
    %v1541 = vunpack.c.l.b16 %v1413
    %v1542 = vunpack.c.l.b16 %v1414
    %v1543 = vunpack.c.l.b16 %v1415
    %v1544 = vunpack.c.l.b16 %v1416
    %v1545 = vunpack.c.l.b16 %v1417
    %v1546 = vunpack.c.l.b16 %v1418
    %v1547 = vunpack.c.l.b16 %v1419
    %v1548 = vunpack.c.l.b16 %v1420
    %v1549 = vunpack.c.l.b16 %v1421
    %v1550 = vunpack.c.l.b16 %v1422
    %v1551 = vunpack.c.l.b16 %v1423
    %v1552 = vunpack.c.l.b16 %v1424
    %v1553 = vunpack.c.l.b16 %v1425
    %v1554 = vunpack.c.l.b16 %v1426
    %v1555 = vunpack.c.l.b16 %v1427
    %v1556 = vunpack.c.l.b16 %v1428
    %v1557 = vunpack.c.l.b16 %v1429
    %v1558 = vunpack.c.l.b16 %v1430
    %v1559 = vunpack.c.l.b16 %v1431
    %v1560 = vunpack.c.l.b16 %v1432
    %v1561 = vunpack.c.l.b16 %v1433
    %v1562 = vunpack.c.l.b16 %v1434
    %v1563 = vunpack.c.l.b16 %v1435
    %v1564 = vunpack.c.l.b16 %v1436
    %v1565 = vunpack.c.l.b16 %v1437
    %v1566 = vunpack.c.l.b16 %v1438
    %v1567 = vunpack.c.l.b16 %v1439
    %v1568 = vunpack.c.l.b16 %v1440
    %v1569 = vunpack.c.l.b16 %v1441
    %v1570 = vunpack.c.l.b16 %v1442
    %v1571 = vunpack.c.l.b16 %v1443
    %v1572 = vunpack.c.l.b16 %v1444
    %v1573 = vunpack.c.l.b16 %v1445
    %v1574 = vpack.c.b16 %v1511, %v1510
    %v1575 = vpack.c.b16 %v1513, %v1512
    %v1576 = vpack.c.b16 %v1515, %v1514
    %v1577 = vpack.c.b16 %v1517, %v1516
    %v1578 = vpack.c.b16 %v1519, %v1518
    %v1579 = vpack.c.b16 %v1521, %v1520
    %v1580 = vpack.c.b16 %v1523, %v1522
    %v1581 = vpack.c.b16 %v1525, %v1524
    %v1582 = vpack.c.b16 %v1527, %v1526
    %v1583 = vpack.c.b16 %v1529, %v1528
    %v1584 = vpack.c.b16 %v1531, %v1530
    %v1585 = vpack.c.b16 %v1533, %v1532
    %v1586 = vpack.c.b16 %v1535, %v1534
    %v1587 = vpack.c.b16 %v1537, %v1536
    %v1588 = vpack.c.b16 %v1539, %v1538
    %v1589 = vpack.c.b16 %v1541, %v1540
    %v1590 = vpack.c.b16 %v1543, %v1542
    %v1591 = vpack.c.b16 %v1545, %v1544
    %v1592 = vpack.c.b16 %v1547, %v1546
    %v1593 = vpack.c.b16 %v1549, %v1548
    %v1594 = vpack.c.b16 %v1551, %v1550
    %v1595 = vpack.c.b16 %v1553, %v1552
    %v1596 = vpack.c.b16 %v1555, %v1554
    %v1597 = vpack.c.b16 %v1557, %v1556
    %v1598 = vpack.c.b16 %v1559, %v1558
    %v1599 = vpack.c.b16 %v1561, %v1560
    %v1600 = vpack.c.b16 %v1563, %v1562
    %v1601 = vpack.c.b16 %v1565, %v1564
    %v1602 = vpack.c.b16 %v1567, %v1566
    %v1603 = vpack.c.b16 %v1569, %v1568
    %v1604 = vpack.c.b16 %v1571, %v1570
    %v1605 = vpack.c.b16 %v1573, %v1572
    %1638 = vmatpush.bf16.msra.mxu0 %v1581
    %1639 = vmatpush.bf16.msra.mxu0 %v1580
    %1640 = vmatpush.bf16.msra.mxu0 %v1579
    %1641 = vmatpush.bf16.msra.mxu0 %v1578
    %1642 = vmatpush.bf16.msra.mxu0 %v1577
    %1643 = vmatpush.bf16.msra.mxu0 %v1576
    %1644 = vmatpush.bf16.msra.mxu0 %v1575
    %1645 = vmatpush.bf16.msra.mxu0 %v1574
    %1646 = vmatmul.bf16.gmra.mxu0 %v1378
    %v1647 = vpop.f32.mrf.mxu0
    %v1648 = vadd.f32 0.0, %v1647
    %v1649 = vpop.f32.mrf.mxu0
    %1650 = vdwg.mxu0
    %1651 = vmatpush.bf16.msra.mxu0 %v1589
    %1652 = vmatpush.bf16.msra.mxu0 %v1588
    %1653 = vmatpush.bf16.msra.mxu0 %v1587
    %1654 = vmatpush.bf16.msra.mxu0 %v1586
    %1655 = vmatpush.bf16.msra.mxu0 %v1585
    %1656 = vmatpush.bf16.msra.mxu0 %v1584
    %1657 = vmatpush.bf16.msra.mxu0 %v1583
    %1658 = vmatpush.bf16.msra.mxu0 %v1582
    %1659 = vmatmul.bf16.gmra.mxu0 %v1379
    %v1660 = vpop.f32.mrf.mxu0
    %v1661 = vadd.f32 %v1648, %v1660
    %v1662 = vpop.f32.mrf.mxu0
    %1663 = vdwg.mxu0
    %1664 = vmatpush.bf16.msra.mxu0 %v1597
    %1665 = vmatpush.bf16.msra.mxu0 %v1596
    %1666 = vmatpush.bf16.msra.mxu0 %v1595
    %1667 = vmatpush.bf16.msra.mxu0 %v1594
    %1668 = vmatpush.bf16.msra.mxu0 %v1593
    %1669 = vmatpush.bf16.msra.mxu0 %v1592
    %1670 = vmatpush.bf16.msra.mxu0 %v1591
    %1671 = vmatpush.bf16.msra.mxu0 %v1590
    %1672 = vmatmul.bf16.gmra.mxu0 %v1380
    %v1673 = vpop.f32.mrf.mxu0
    %v1674 = vadd.f32 %v1661, %v1673
    %v1675 = vpop.f32.mrf.mxu0
    %1676 = vdwg.mxu0
    %1677 = vmatpush.bf16.msra.mxu0 %v1605
    %1678 = vmatpush.bf16.msra.mxu0 %v1604
    %1679 = vmatpush.bf16.msra.mxu0 %v1603
    %1680 = vmatpush.bf16.msra.mxu0 %v1602
    %1681 = vmatpush.bf16.msra.mxu0 %v1601
    %1682 = vmatpush.bf16.msra.mxu0 %v1600
    %1683 = vmatpush.bf16.msra.mxu0 %v1599
    %1684 = vmatpush.bf16.msra.mxu0 %v1598
    %1685 = vmatmul.bf16.gmra.mxu0 %v1381
    %v1686 = vpop.f32.mrf.mxu0
    %v1687 = vadd.f32 %v1674, %v1686
    %v1688 = vpop.f32.mrf.mxu0
    %1689 = vdwg.mxu0
    %v1690 = vpack.c.bf16 %v1687, %v1687
    %v1691 = vld [vmem:[%s10] sm:$0x1]
    %v1693 = vpack.i.b16 %v1691, %v1691
    %v1695 = vperm.slane %v1693, 0
    %v1696 = vunpack.c.l.bf16 %v1690
    %v1697 = vunpack.c.l.bf16 %v1695
    %v1698 = vadd.f32 %v1696, %v1697
    %v1699 = vpack.c.bf16 %v1698, %v1698
    %v1700 = vunpack.c.l.bf16 %v1699
    %v1701 = vmax.f32 %v1700, 0.0
    %v1702 = vpack.c.bf16 %v1701, %v1701
    %v1703 = vld [vmem:[%s11] sm:$0xf]
    %v1704 = vld [vmem:[%s11 + $0x4] sm:$0xf]
    %v1705 = vld [vmem:[%s11 + $0x8] sm:$0xf]
    %v1706 = vld [vmem:[%s11 + $0xc] sm:$0xf]
    %v1707 = vld [vmem:[%s11 + $0x10] sm:$0xf]
    %v1708 = vld [vmem:[%s11 + $0x14] sm:$0xf]
    %v1709 = vld [vmem:[%s11 + $0x18] sm:$0xf]
    %v1710 = vld [vmem:[%s11 + $0x1c] sm:$0xf]
    %v1719 = vunpack.c.l.b16 %v1703
    %v1720 = vunpack.c.l.b16 %v1704
    %v1721 = vunpack.c.l.b16 %v1705
    %v1722 = vunpack.c.l.b16 %v1706
    %v1723 = vunpack.c.l.b16 %v1707
    %v1724 = vunpack.c.l.b16 %v1708
    %v1725 = vunpack.c.l.b16 %v1709
    %v1726 = vunpack.c.l.b16 %v1710
    %v1727 = vpack.c.b16 %v1720, %v1719
    %v1728 = vpack.c.b16 %v1722, %v1721
    %v1729 = vpack.c.b16 %v1724, %v1723
    %v1730 = vpack.c.b16 %v1726, %v1725
    %v1736 = vsel %vm131, %v1702, 0
    %1738 = vmatpush.bf16.msra.mxu0 0
    %1739 = vmatpush.bf16.msra.mxu0 0
    %1740 = vmatpush.bf16.msra.mxu0 0
    %1741 = vmatpush.bf16.msra.mxu0 0
    %1742 = vmatpush.bf16.msra.mxu0 %v1730
    %1743 = vmatpush.bf16.msra.mxu0 %v1729
    %1744 = vmatpush.bf16.msra.mxu0 %v1728
    %1745 = vmatpush.bf16.msra.mxu0 %v1727
    %1746 = vmatmul.bf16.gmra.mxu0 %v1736
    %v1747 = vpop.f32.mrf.mxu0
    %v1748 = vadd.f32 0.0, %v1747
    %v1749 = vpop.f32.mrf.mxu0
    %1750 = vdwg.mxu0
    %v1751 = vpack.c.bf16 %v1748, %v1748
    %v1752 = vld [vmem:[%s12] sm:$0x1]
    %v1754 = vpack.i.b16 %v1752, %v1752
    %v1756 = vperm.slane %v1754, 0
    %v1757 = vunpack.c.l.bf16 %v1751
    %v1758 = vunpack.c.l.bf16 %v1756
    %v1759 = vadd.f32 %v1757, %v1758
    %v1760 = vpack.c.bf16 %v1759, %v1759
    %1761 = vst [vmem:[#allocation5] sm:$0xf] %v1760
    // Predicated region
    $region58: #{tpu_custom_call.1} parent=1 // pred_check
      _
    $region59: #{tpu_custom_call.1} parent=1 // pred_check_branch
      %1763 = sbr.rel (0) target = $region61
    $region60: #{tpu_custom_call.1} parent=1 // pred_region
      %1765 = vsyncadd [#allocation4], 0
      %s1767 = sshll.u32 [#allocation5], 4
      %s1768 = int_to_ptr.vmem [resolvable:$true] %s1767
      %s1769 = sshll.u32 %s13, 4
      %s1770 = int_to_ptr.hbm [resolvable:$true] %s1769
      %1772 = dma.vmem_to_hbm [thread:$0]  %s1768, 64, %s1770, [#allocation4]
    $region61: #{tpu_custom_call.1} parent=1 // pred_fallthru
      _
    // Predicated region
    $region62: #{tpu_custom_call.1} parent=1 // pred_check
      _
    $region63: #{tpu_custom_call.1} parent=1 // pred_check_branch
      %1774 = sbr.rel (0) target = $region65
    $region64: #{tpu_custom_call.1} parent=1 // pred_region
      %1776 = dma.done [#allocation4], 64
    $region65: #{tpu_custom_call.1} parent=1 // pred_fallthru
      _
    %1777 = vsyncpa [#allocation3], 1
    %1778 = vsyncpa [#allocation4], 1

</llo_original>
